<compile_context>
chip_gen: v7x
topology: tpu7x:2x2x1
jax: 0.10.0
libtpu: 0.0.40
codegen_flags: <defaults>
</compile_context>

<pallas_src>
import functools

import jax
import jax.numpy as jnp
from jax import lax
from jax.experimental import pallas as pl
from jax.experimental.pallas import tpu as pltpu

HEADS = 4
ATT_W = 128          # attention-coefficient matmul outputs padded to a lane tile
NEG_INF = -1e30
SET2SET_STEPS = 3


# ----------------------------------------------------------------------------
# Fused forward kernel — grid axis = GAT layer, everything VMEM-resident
# ----------------------------------------------------------------------------
def _gnn_kernel(num_layers, N, E, hidden,
                # per-layer inputs (blocked along the grid axis, double-buffered)
                wsrc_ref, asrc_ref, adst_ref, aedge_ref, bias_ref, gamma_ref, beta_ref,
                # layer-invariant inputs (constant index map -> fetched once)
                x_ref, ea_ref, src_col_ref, dst_row_ref, dst_col_ref,
                wn_ref, bn_ref, we_ref, be_ref,
                wih_ref, whh_ref, blstm_ref, w1_ref, b1_ref, w2_ref, b2_ref,
                # output
                o_ref,
                # scratch (persists across grid steps)
                h_s, efull_s, dstoh_s, srcoh_s, dstoht_s, mask_s):
    f32 = jnp.float32
    bf16 = jnp.bfloat16
    C = hidden
    M = E + N
    layer = pl.program_id(0)

    ones_row_n = jnp.ones((1, N), f32)
    inv_n = f32(1.0 / N)
    inv_heads = f32(1.0 / HEADS)

    # ------------------------- prologue (layer 0 only) ----------------------
    @pl.when(layer == 0)
    def _prologue():
        # node / edge embeddings
        h0 = jnp.dot(x_ref[...], wn_ref[...], preferred_element_type=f32) + bn_ref[...]
        e = jnp.dot(ea_ref[...], we_ref[...], preferred_element_type=f32) + be_ref[...]
        # F.normalize(p=2, dim=1)
        e = e * lax.rsqrt(jnp.maximum(jnp.sum(e * e, axis=-1, keepdims=True), 1e-24))

        # one-hot adjacency machinery (replaces XLA scatters)
        ii = lax.broadcasted_iota(jnp.int32, (N, M), 0)
        dst_oh = (ii == dst_row_ref[...]).astype(f32)            # [N, M]
        jj = lax.broadcasted_iota(jnp.int32, (M, N), 1)
        src_oh = (jj == src_col_ref[...]).astype(f32)            # [M, N]
        dst_oh_t = (jj == dst_col_ref[...]).astype(f32)          # [M, N]
        mask = jnp.dot(dst_oh, src_oh, preferred_element_type=f32)   # [N, N] adjacency

        # self-loop edge_attr fill (PyG add_self_loops fill_value='mean')
        dst_oh_e = dst_oh[:, 0:E]                                 # [N, E]
        deg = jnp.sum(dst_oh_e, axis=-1, keepdims=True)
        e_loop = (jnp.dot(dst_oh_e, e, preferred_element_type=f32)
                  / jnp.maximum(deg, 1.0))                        # [N, C]

        h_s[...] = h0
        efull_s[...] = jnp.concatenate([e, e_loop], axis=0).astype(bf16)   # [M, C]
        dstoh_s[...] = dst_oh
        srcoh_s[...] = src_oh
        dstoht_s[...] = dst_oh_t
        mask_s[...] = mask

    # ---------------- GAT layer + BatchNorm + ReLU + residual ----------------
    h_f = h_s[...]                      # [N, C] f32
    h_b = h_f.astype(bf16)
    src_oh = srcoh_s[...]
    dst_oh = dstoh_s[...]
    edge_mask = mask_s[...] > 0.5

    xw = jnp.dot(h_b, wsrc_ref[0], preferred_element_type=f32)            # [N, H*C]
    a_src = jnp.dot(h_b, asrc_ref[0], preferred_element_type=f32)         # [N, ATT_W]
    a_dst = jnp.dot(h_b, adst_ref[0], preferred_element_type=f32)         # [N, ATT_W]
    a_e = jnp.dot(efull_s[...], aedge_ref[0], preferred_element_type=f32)  # [M, ATT_W]

    # gather node coefficients to the edge domain with one-hot matmuls
    z = (jnp.dot(dstoht_s[...], a_dst, preferred_element_type=f32)
         + jnp.dot(src_oh, a_src, preferred_element_type=f32)
         + a_e)                                                            # [M, ATT_W]
    z = jnp.where(z >= 0.0, z, 0.2 * z)                                    # LeakyReLU(0.2)
    # TODO(synk): attention dropout p=0.1 is identity (eval-mode).

    # single batched densification for all heads: [N, M] @ [M, H*N]
    zs = jnp.concatenate([z[:, hh:hh + 1] * src_oh for hh in range(HEADS)], axis=1)
    dense_all = jnp.dot(dst_oh, zs, preferred_element_type=f32)            # [N, H*N]

    alphas = []
    for hh in range(HEADS):
        logits = jnp.where(edge_mask, dense_all[:, hh * N:(hh + 1) * N], NEG_INF)
        mx = jnp.max(logits, axis=-1, keepdims=True)
        p = jnp.exp(logits - mx)            # masked entries underflow to exactly 0
        denom = jnp.sum(p, axis=-1, keepdims=True)
        alphas.append(p * pl.reciprocal(denom, approx=True))               # softmax
    alpha_all = jnp.concatenate(alphas, axis=1)                            # [N, H*N]
    xw_stack = jnp.concatenate(
        [xw[:, hh * C:(hh + 1) * C] for hh in range(HEADS)], axis=0)       # [H*N, C]
    acc = jnp.dot(alpha_all, xw_stack, preferred_element_type=f32)         # sum over heads

    out = acc * inv_heads + bias_ref[0]                                    # head mean + bias

    # BatchNorm1d with batch statistics (biased var, eps=1e-5), sums on MXU
    mu = jnp.dot(ones_row_n, out, preferred_element_type=f32) * inv_n
    ctr = out - mu
    var = jnp.dot(ones_row_n, ctr * ctr, preferred_element_type=f32) * inv_n
    out = ctr * lax.rsqrt(var + 1e-5) * gamma_ref[0] + beta_ref[0]
    out = jnp.maximum(out, 0.0)                                            # ReLU
    h_new = out + h_f                                                      # residual
    h_s[...] = h_new

    # ------------------------- epilogue (last layer only) -------------------
    @pl.when(layer == num_layers - 1)
    def _epilogue():
        # Set2Set pooling (single graph)
        q_star = jnp.zeros((1, 2 * C), f32)
        hl = jnp.zeros((1, C), f32)
        cl = jnp.zeros((1, C), f32)
        for _ in range(SET2SET_STEPS):
            gates = (jnp.dot(q_star, wih_ref[...], preferred_element_type=f32)
                     + jnp.dot(hl, whh_ref[...], preferred_element_type=f32)
                     + blstm_ref[...])                                     # [1, 4C]
            i_g = jax.nn.sigmoid(gates[:, 0 * C:1 * C])
            f_g = jax.nn.sigmoid(gates[:, 1 * C:2 * C])
            g_g = jnp.tanh(gates[:, 2 * C:3 * C])
            o_g = jax.nn.sigmoid(gates[:, 3 * C:4 * C])
            cl = f_g * cl + i_g * g_g
            hl = o_g * jnp.tanh(cl)
            q = hl                                                         # [1, C]
            ener = jnp.sum(h_new * q, axis=-1, keepdims=True)              # [N, 1]
            mx = jnp.max(ener, axis=0, keepdims=True)
            ee = jnp.exp(ener - mx)
            s = jnp.dot(ones_row_n, ee, preferred_element_type=f32)        # [1, 1]
            a = ee / s                                                     # exact softmax
            r = jnp.dot(ones_row_n, a * h_new, preferred_element_type=f32)  # [1, C]
            q_star = jnp.concatenate([q, r], axis=-1)                      # [1, 2C]

        # output MLP head + L2 normalize
        # TODO(synk): Dropout(0.2) between the two linears is identity (eval-mode).
        h1 = jnp.maximum(
            jnp.dot(q_star, w1_ref[...], preferred_element_type=f32) + b1_ref[...], 0.0)
        y = jnp.maximum(
            jnp.dot(h1, w2_ref[...], preferred_element_type=f32) + b2_ref[...], 0.0)
        y = y * lax.rsqrt(jnp.maximum(jnp.sum(y * y, axis=-1, keepdims=True), 1e-24))
        o_ref[...] = y


# ----------------------------------------------------------------------------
# Parameter init (deterministic, synthetic)
# ----------------------------------------------------------------------------
def init_params(key, node_dim=8, edge_dim=4, hidden=128, out_dim=256, num_layers=3):
    keys = iter(jax.random.split(key, 128))

    def u(shape, fan_in):
        s = 1.0 / jnp.sqrt(jnp.float32(fan_in))
        return jax.random.uniform(next(keys), shape, jnp.float32, -1.0, 1.0) * s

    params = {
        "W_node": u((node_dim, hidden), node_dim),
        "b_node": u((1, hidden), node_dim),
        "W_edge": u((edge_dim, hidden), edge_dim),
        "b_edge": u((1, hidden), edge_dim),
        "layers": [],
        # Set2Set LSTM(2*hidden -> hidden)
        "W_ih": u((2 * hidden, 4 * hidden), 2 * hidden),
        "W_hh": u((hidden, 4 * hidden), hidden),
        "b_lstm": u((1, 4 * hidden), hidden),
        # output head
        "W1": u((2 * hidden, hidden), 2 * hidden),
        "b1": u((1, hidden), 2 * hidden),
        "W2": u((hidden, out_dim), hidden),
        "b2": u((1, out_dim), hidden),
    }
    for _ in range(num_layers):
        params["layers"].append({
            "W_src": u((hidden, HEADS * hidden), hidden),     # lin_src == lin_dst (no bias)
            "W_edge": u((hidden, HEADS * hidden), hidden),    # lin_edge (no bias)
            "att_src": u((HEADS, hidden), hidden),
            "att_dst": u((HEADS, hidden), hidden),
            "att_edge": u((HEADS, hidden), hidden),
            "bias": jnp.zeros((1, hidden), jnp.float32),
            "gamma": jnp.ones((1, hidden), jnp.float32),      # BatchNorm weight
            "beta": jnp.zeros((1, hidden), jnp.float32),      # BatchNorm bias
        })
    return params


# ----------------------------------------------------------------------------
# Forward pass: one fused pallas_call with a per-layer grid axis
# ----------------------------------------------------------------------------
@jax.jit
def gnn_encoder_forward(params, x, edge_index, edge_attr):
    N = x.shape[0]
    E = edge_index.shape[1]
    C = params["W_node"].shape[1]
    out_dim = params["W2"].shape[1]
    num_layers = len(params["layers"])
    M = E + N
    assert N % 8 == 0 and E % 8 == 0, "dense formulation requires N, E multiples of 8"

    # edge index (src j -> dst i) plus self loops, as small int32 VMEM vectors
    src = edge_index[0].astype(jnp.int32)
    dst = edge_index[1].astype(jnp.int32)
    loop = jnp.arange(N, dtype=jnp.int32)
    src_col = jnp.concatenate([src, loop]).reshape(M, 1)
    dst_full = jnp.concatenate([dst, loop])
    dst_row = dst_full.reshape(1, M)
    dst_col = dst_full.reshape(M, 1)

    # Fold per-head attention vectors into the weights:
    #   (h @ W_src) @ bd(att) == h @ (W_src @ bd(att))   -> [C, ATT_W] matrices
    eye_h = jnp.eye(HEADS, dtype=jnp.float32)

    def bd(att):  # [H, C] -> [H*C, ATT_W] block-diagonal, zero-padded to a lane tile
        b = (att[:, :, None] * eye_h[:, None, :]).reshape(HEADS * C, HEADS)
        return jnp.pad(b, ((0, 0), (0, ATT_W - HEADS)))

    layers = params["layers"]
    bf16 = jnp.bfloat16
    wsrc = jnp.stack([lp["W_src"] for lp in layers]).astype(bf16)                       # [L,C,H*C]
    asrc = jnp.stack([lp["W_src"] @ bd(lp["att_src"]) for lp in layers]).astype(bf16)   # [L,C,128]
    adst = jnp.stack([lp["W_src"] @ bd(lp["att_dst"]) for lp in layers]).astype(bf16)
    aedge = jnp.stack([lp["W_edge"] @ bd(lp["att_edge"]) for lp in layers]).astype(bf16)
    bias = jnp.stack([lp["bias"] for lp in layers])
    gamma = jnp.stack([lp["gamma"] for lp in layers])
    beta = jnp.stack([lp["beta"] for lp in layers])

    per_layer = (wsrc, asrc, adst, aedge, bias, gamma, beta)
    invariant = (x, edge_attr, src_col, dst_row, dst_col,
                 params["W_node"], params["b_node"], params["W_edge"], params["b_edge"],
                 params["W_ih"], params["W_hh"], params["b_lstm"],
                 params["W1"], params["b1"], params["W2"], params["b2"])
    operands = per_layer + invariant

    def layer_spec(arr):
        return pl.BlockSpec((1,) + arr.shape[1:], lambda l: (l, 0, 0))

    def const_map(ndim):
        def imap(l):
            return (0,) * ndim
        return imap

    def full_spec(arr):
        return pl.BlockSpec(arr.shape, const_map(arr.ndim))

    in_specs = [layer_spec(a) for a in per_layer] + [full_spec(a) for a in invariant]

    # advisory cost estimate (lets XLA overlap wrapper-side folding with the call)
    macs_layer = (N * C * HEADS * C + 2 * N * C * ATT_W + M * C * ATT_W
                  + 2 * M * N * ATT_W + N * M * HEADS * N + N * HEADS * N * C + 2 * N * C)
    macs = (num_layers * macs_layer
            + N * x.shape[1] * C + E * edge_attr.shape[1] * C + N * M * N + N * E * C
            + SET2SET_STEPS * (2 * C * 4 * C + C * 4 * C + 2 * N * C)
            + 2 * C * C + C * out_dim)
    transcend = (num_layers * HEADS * N * N
                 + SET2SET_STEPS * (N + 6 * C) + 4 * N * C + out_dim)
    bytes_acc = sum(int(a.size) * a.dtype.itemsize for a in operands) + out_dim * 4
    cost = pl.CostEstimate(flops=2 * macs, transcendentals=transcend,
                           bytes_accessed=bytes_acc)

    kernel = functools.partial(_gnn_kernel, num_layers, N, E, C)

    return pl.pallas_call(
        kernel,
        out_shape=jax.ShapeDtypeStruct((1, out_dim), jnp.float32),
        grid_spec=pltpu.PrefetchScalarGridSpec(
            num_scalar_prefetch=0,
            grid=(num_layers,),
            in_specs=in_specs,
            out_specs=pl.BlockSpec((1, out_dim), lambda l: (0, 0)),
            scratch_shapes=[
                pltpu.VMEM((N, C), jnp.float32),       # h (node features, persists)
                pltpu.VMEM((M, C), jnp.bfloat16),      # e_full (edges + self loops)
                pltpu.VMEM((N, M), jnp.float32),       # dst one-hot
                pltpu.VMEM((M, N), jnp.float32),       # src one-hot
                pltpu.VMEM((M, N), jnp.float32),       # dst one-hot (edge-major)
                pltpu.VMEM((N, N), jnp.float32),       # adjacency mask
            ]),
        compiler_params=pltpu.CompilerParams(
            dimension_semantics=("arbitrary",),
            vmem_limit_bytes=32 * 1024 * 1024),
        cost_estimate=cost,
    )(*operands)


# ----------------------------------------------------------------------------
if __name__ == "__main__":
    key = jax.random.PRNGKey(0)
    k_param, k_x, k_e = jax.random.split(key, 3)

    N = 16
    NODE_DIM, EDGE_DIM, HIDDEN, OUT_DIM = 8, 4, 128, 256

    # Directed edges: ring plus skip connections (no duplicates, no self loops)
    i = jnp.arange(N, dtype=jnp.int32)
    src = jnp.concatenate([i, i])
    dst = jnp.concatenate([(i + 1) % N, (i + 2) % N])
    edge_index = jnp.stack([src, dst], axis=0)                         # [2, 32]
    E = edge_index.shape[1]

    x = jax.random.uniform(k_x, (N, NODE_DIM), jnp.float32)            # node features
    edge_attr = jax.random.uniform(k_e, (E, EDGE_DIM), jnp.float32)    # edge features

    params = init_params(k_param, NODE_DIM, EDGE_DIM, HIDDEN, OUT_DIM, num_layers=3)

    out = gnn_encoder_forward(params, x, edge_index, edge_attr)
    out = jax.block_until_ready(out)

    assert out.shape == (1, OUT_DIM), out.shape
    assert bool(jnp.all(jnp.isfinite(out)))
    nrm = float(jnp.sum(out * out))
    assert abs(nrm - 1.0) < 1e-3 or nrm == 0.0

    print("KERNEL_OK")
</pallas_src>

<mosaic_0001>
module attributes {stable_mosaic.version = 11 : i64} {
  func.func @_gnn_kernel(%arg0: i32, %arg1: memref<1x128x512xbf16, #tpu.memory_space<vmem>>, %arg2: memref<1x128x128xbf16, #tpu.memory_space<vmem>>, %arg3: memref<1x128x128xbf16, #tpu.memory_space<vmem>>, %arg4: memref<1x128x128xbf16, #tpu.memory_space<vmem>>, %arg5: memref<1x1x128xf32, #tpu.memory_space<vmem>>, %arg6: memref<1x1x128xf32, #tpu.memory_space<vmem>>, %arg7: memref<1x1x128xf32, #tpu.memory_space<vmem>>, %arg8: memref<16x8xf32, #tpu.memory_space<vmem>>, %arg9: memref<32x4xf32, #tpu.memory_space<vmem>>, %arg10: memref<48x1xi32, #tpu.memory_space<vmem>>, %arg11: memref<1x48xi32, #tpu.memory_space<vmem>>, %arg12: memref<48x1xi32, #tpu.memory_space<vmem>>, %arg13: memref<8x128xf32, #tpu.memory_space<vmem>>, %arg14: memref<1x128xf32, #tpu.memory_space<vmem>>, %arg15: memref<4x128xf32, #tpu.memory_space<vmem>>, %arg16: memref<1x128xf32, #tpu.memory_space<vmem>>, %arg17: memref<256x512xf32, #tpu.memory_space<vmem>>, %arg18: memref<128x512xf32, #tpu.memory_space<vmem>>, %arg19: memref<1x512xf32, #tpu.memory_space<vmem>>, %arg20: memref<256x128xf32, #tpu.memory_space<vmem>>, %arg21: memref<1x128xf32, #tpu.memory_space<vmem>>, %arg22: memref<128x256xf32, #tpu.memory_space<vmem>>, %arg23: memref<1x256xf32, #tpu.memory_space<vmem>>, %arg24: memref<1x256xf32, #tpu.memory_space<vmem>>, %arg25: memref<16x128xf32, #tpu.memory_space<vmem>>, %arg26: memref<48x128xbf16, #tpu.memory_space<vmem>>, %arg27: memref<16x48xf32, #tpu.memory_space<vmem>>, %arg28: memref<48x16xf32, #tpu.memory_space<vmem>>, %arg29: memref<48x16xf32, #tpu.memory_space<vmem>>, %arg30: memref<16x16xf32, #tpu.memory_space<vmem>>) attributes {dimension_semantics = [#tpu.dimension_semantics<arbitrary>], iteration_bounds = array<i64: 3>, scalar_prefetch = 0 : i64, scratch_operands = 6 : i64, tpu.core_type = #tpu.core_type<tc>, window_params = [{transform_indices = @transform_0, window_bounds = array<i64: 1, 128, 512>}, {transform_indices = @transform_1, window_bounds = array<i64: 1, 128, 128>}, {transform_indices = @transform_2, window_bounds = array<i64: 1, 128, 128>}, {transform_indices = @transform_3, window_bounds = array<i64: 1, 128, 128>}, {transform_indices = @transform_4, window_bounds = array<i64: 1, 1, 128>}, {transform_indices = @transform_5, window_bounds = array<i64: 1, 1, 128>}, {transform_indices = @transform_6, window_bounds = array<i64: 1, 1, 128>}, {pipeline_mode = #tpu.pipeline_mode<synchronous>, transform_indices = @transform_7, window_bounds = array<i64: 16, 8>}, {pipeline_mode = #tpu.pipeline_mode<synchronous>, transform_indices = @transform_8, window_bounds = array<i64: 32, 4>}, {pipeline_mode = #tpu.pipeline_mode<synchronous>, transform_indices = @transform_9, window_bounds = array<i64: 48, 1>}, {pipeline_mode = #tpu.pipeline_mode<synchronous>, transform_indices = @transform_10, window_bounds = array<i64: 1, 48>}, {pipeline_mode = #tpu.pipeline_mode<synchronous>, transform_indices = @transform_11, window_bounds = array<i64: 48, 1>}, {pipeline_mode = #tpu.pipeline_mode<synchronous>, transform_indices = @transform_12, window_bounds = array<i64: 8, 128>}, {pipeline_mode = #tpu.pipeline_mode<synchronous>, transform_indices = @transform_13, window_bounds = array<i64: 1, 128>}, {pipeline_mode = #tpu.pipeline_mode<synchronous>, transform_indices = @transform_14, window_bounds = array<i64: 4, 128>}, {pipeline_mode = #tpu.pipeline_mode<synchronous>, transform_indices = @transform_15, window_bounds = array<i64: 1, 128>}, {pipeline_mode = #tpu.pipeline_mode<synchronous>, transform_indices = @transform_16, window_bounds = array<i64: 256, 512>}, {pipeline_mode = #tpu.pipeline_mode<synchronous>, transform_indices = @transform_17, window_bounds = array<i64: 128, 512>}, {pipeline_mode = #tpu.pipeline_mode<synchronous>, transform_indices = @transform_18, window_bounds = array<i64: 1, 512>}, {pipeline_mode = #tpu.pipeline_mode<synchronous>, transform_indices = @transform_19, window_bounds = array<i64: 256, 128>}, {pipeline_mode = #tpu.pipeline_mode<synchronous>, transform_indices = @transform_20, window_bounds = array<i64: 1, 128>}, {pipeline_mode = #tpu.pipeline_mode<synchronous>, transform_indices = @transform_21, window_bounds = array<i64: 128, 256>}, {pipeline_mode = #tpu.pipeline_mode<synchronous>, transform_indices = @transform_22, window_bounds = array<i64: 1, 256>}, {pipeline_mode = #tpu.pipeline_mode<synchronous>, transform_indices = @transform_23, window_bounds = array<i64: 1, 256>}]} {
    %cst = arith.constant 1.000000e+00 : f32
    %0 = vector.broadcast %cst : f32 to vector<1x16xf32>
    %c0_i32 = arith.constant 0 : i32
    %1 = arith.cmpi eq, %arg0, %c0_i32 : i32
    %2 = arith.extui %1 : i1 to i32
    %c0_i32_0 = arith.constant 0 : i32
    %3 = arith.cmpi ne, %2, %c0_i32_0 : i32
    scf.if %3 {
      %c0_66 = arith.constant 0 : index
      %c0_67 = arith.constant 0 : index
      %142 = vector.load %arg8[%c0_66, %c0_67] : memref<16x8xf32, #tpu.memory_space<vmem>>, vector<16x8xf32>
      %c0_68 = arith.constant 0 : index
      %c0_69 = arith.constant 0 : index
      %143 = vector.load %arg13[%c0_68, %c0_69] : memref<8x128xf32, #tpu.memory_space<vmem>>, vector<8x128xf32>
      %cst_70 = arith.constant dense<0.000000e+00> : vector<16x128xf32>
      %144 = tpu.matmul %142, %143, %cst_70 {dimension_numbers = #tpu.dot_dimension_numbers<[1], [0], [0], [1], [0, 0, 1, 1], [], []>} : vector<16x8xf32>, vector<8x128xf32>, vector<16x128xf32> -> vector<16x128xf32>
      %c0_71 = arith.constant 0 : index
      %c0_72 = arith.constant 0 : index
      %145 = vector.load %arg14[%c0_71, %c0_72] : memref<1x128xf32, #tpu.memory_space<vmem>>, vector<1x128xf32>
      %146 = vector.broadcast %145 : vector<1x128xf32> to vector<16x128xf32>
      %147 = arith.addf %144, %146 : vector<16x128xf32>
      %c0_73 = arith.constant 0 : index
      %c0_74 = arith.constant 0 : index
      %148 = vector.load %arg9[%c0_73, %c0_74] : memref<32x4xf32, #tpu.memory_space<vmem>>, vector<32x4xf32>
      %c0_75 = arith.constant 0 : index
      %c0_76 = arith.constant 0 : index
      %149 = vector.load %arg15[%c0_75, %c0_76] : memref<4x128xf32, #tpu.memory_space<vmem>>, vector<4x128xf32>
      %cst_77 = arith.constant dense<0.000000e+00> : vector<32x128xf32>
      %150 = tpu.matmul %148, %149, %cst_77 {dimension_numbers = #tpu.dot_dimension_numbers<[1], [0], [0], [1], [0, 0, 1, 1], [], []>} : vector<32x4xf32>, vector<4x128xf32>, vector<32x128xf32> -> vector<32x128xf32>
      %c0_78 = arith.constant 0 : index
      %c0_79 = arith.constant 0 : index
      %151 = vector.load %arg16[%c0_78, %c0_79] : memref<1x128xf32, #tpu.memory_space<vmem>>, vector<1x128xf32>
      %152 = vector.broadcast %151 : vector<1x128xf32> to vector<32x128xf32>
      %153 = arith.addf %150, %152 : vector<32x128xf32>
      %154 = arith.mulf %153, %153 : vector<32x128xf32>
      %cst_80 = arith.constant dense<0.000000e+00> : vector<32xf32>
      %155 = vector.multi_reduction <add>, %154, %cst_80 [1] : vector<32x128xf32> to vector<32xf32>
      %156 = vector.shape_cast %155 : vector<32xf32> to vector<32x1xf32>
      %cst_81 = arith.constant 1.000000e-24 : f32
      %157 = vector.broadcast %cst_81 : f32 to vector<32x1xf32>
      %158 = arith.maximumf %156, %157 : vector<32x1xf32>
      %159 = math.rsqrt %158 : vector<32x1xf32>
      %160 = vector.broadcast %159 : vector<32x1xf32> to vector<32x128xf32>
      %161 = arith.mulf %153, %160 : vector<32x128xf32>
      %162 = tpu.iota {dimensions = array<i32: 0>} : vector<16x48xi32>
      %c0_82 = arith.constant 0 : index
      %c0_83 = arith.constant 0 : index
      %163 = vector.load %arg11[%c0_82, %c0_83] : memref<1x48xi32, #tpu.memory_space<vmem>>, vector<1x48xi32>
      %164 = vector.broadcast %163 : vector<1x48xi32> to vector<16x48xi32>
      %165 = arith.cmpi eq, %162, %164 : vector<16x48xi32>
      %166 = arith.extui %165 : vector<16x48xi1> to vector<16x48xi32>
      %167 = arith.sitofp %166 : vector<16x48xi32> to vector<16x48xf32>
      %168 = tpu.iota {dimensions = array<i32: 1>} : vector<48x16xi32>
      %c0_84 = arith.constant 0 : index
      %c0_85 = arith.constant 0 : index
      %169 = vector.load %arg10[%c0_84, %c0_85] : memref<48x1xi32, #tpu.memory_space<vmem>>, vector<48x1xi32>
      %170 = vector.broadcast %169 : vector<48x1xi32> to vector<48x16xi32>
      %171 = arith.cmpi eq, %168, %170 : vector<48x16xi32>
      %172 = arith.extui %171 : vector<48x16xi1> to vector<48x16xi32>
      %173 = arith.sitofp %172 : vector<48x16xi32> to vector<48x16xf32>
      %c0_86 = arith.constant 0 : index
      %c0_87 = arith.constant 0 : index
      %174 = vector.load %arg12[%c0_86, %c0_87] : memref<48x1xi32, #tpu.memory_space<vmem>>, vector<48x1xi32>
      %175 = vector.broadcast %174 : vector<48x1xi32> to vector<48x16xi32>
      %176 = arith.cmpi eq, %168, %175 : vector<48x16xi32>
      %177 = arith.extui %176 : vector<48x16xi1> to vector<48x16xi32>
      %178 = arith.sitofp %177 : vector<48x16xi32> to vector<48x16xf32>
      %cst_88 = arith.constant dense<0.000000e+00> : vector<16x16xf32>
      %179 = tpu.matmul %167, %173, %cst_88 {dimension_numbers = #tpu.dot_dimension_numbers<[1], [0], [0], [1], [0, 0, 1, 1], [], []>} : vector<16x48xf32>, vector<48x16xf32>, vector<16x16xf32> -> vector<16x16xf32>
      %180 = vector.extract_strided_slice %167 {offsets = [0, 0], sizes = [16, 32], strides = [1, 1]} : vector<16x48xf32> to vector<16x32xf32>
      %cst_89 = arith.constant dense<0.000000e+00> : vector<16xf32>
      %181 = vector.multi_reduction <add>, %180, %cst_89 [1] : vector<16x32xf32> to vector<16xf32>
      %182 = vector.shape_cast %181 : vector<16xf32> to vector<16x1xf32>
      %cst_90 = arith.constant dense<0.000000e+00> : vector<16x128xf32>
      %183 = tpu.matmul %180, %161, %cst_90 {dimension_numbers = #tpu.dot_dimension_numbers<[1], [0], [0], [1], [0, 0, 1, 1], [], []>} : vector<16x32xf32>, vector<32x128xf32>, vector<16x128xf32> -> vector<16x128xf32>
      %cst_91 = arith.constant 1.000000e+00 : f32
      %184 = vector.broadcast %cst_91 : f32 to vector<16x1xf32>
      %185 = arith.maximumf %182, %184 : vector<16x1xf32>
      %186 = vector.broadcast %185 : vector<16x1xf32> to vector<16x128xf32>
      %187 = arith.divf %183, %186 : vector<16x128xf32>
      %c0_92 = arith.constant 0 : index
      %c0_93 = arith.constant 0 : index
      %188 = vector.load %arg25[%c0_92, %c0_93] : memref<16x128xf32, #tpu.memory_space<vmem>>, vector<16x128xf32>
      tpu.vector_store %arg25[%c0_92, %c0_93], %147 {strides = array<i32>} : memref<16x128xf32, #tpu.memory_space<vmem>>, vector<16x128xf32>,
      %189 = tpu.concatenate %161, %187 in 0 : vector<32x128xf32>, vector<16x128xf32> -> vector<48x128xf32>
      %190 = arith.truncf %189 : vector<48x128xf32> to vector<48x128xbf16>
      %c0_94 = arith.constant 0 : index
      %c0_95 = arith.constant 0 : index
      %191 = vector.load %arg26[%c0_94, %c0_95] : memref<48x128xbf16, #tpu.memory_space<vmem>>, vector<48x128xbf16>
      tpu.vector_store %arg26[%c0_94, %c0_95], %190 {strides = array<i32>} : memref<48x128xbf16, #tpu.memory_space<vmem>>, vector<48x128xbf16>,
      %c0_96 = arith.constant 0 : index
      %c0_97 = arith.constant 0 : index
      %192 = vector.load %arg27[%c0_96, %c0_97] : memref<16x48xf32, #tpu.memory_space<vmem>>, vector<16x48xf32>
      tpu.vector_store %arg27[%c0_96, %c0_97], %167 {strides = array<i32>} : memref<16x48xf32, #tpu.memory_space<vmem>>, vector<16x48xf32>,
      %c0_98 = arith.constant 0 : index
      %c0_99 = arith.constant 0 : index
      %193 = vector.load %arg28[%c0_98, %c0_99] : memref<48x16xf32, #tpu.memory_space<vmem>>, vector<48x16xf32>
      tpu.vector_store %arg28[%c0_98, %c0_99], %173 {strides = array<i32>} : memref<48x16xf32, #tpu.memory_space<vmem>>, vector<48x16xf32>,
      %c0_100 = arith.constant 0 : index
      %c0_101 = arith.constant 0 : index
      %194 = vector.load %arg29[%c0_100, %c0_101] : memref<48x16xf32, #tpu.memory_space<vmem>>, vector<48x16xf32>
      tpu.vector_store %arg29[%c0_100, %c0_101], %178 {strides = array<i32>} : memref<48x16xf32, #tpu.memory_space<vmem>>, vector<48x16xf32>,
      %c0_102 = arith.constant 0 : index
      %c0_103 = arith.constant 0 : index
      %195 = vector.load %arg30[%c0_102, %c0_103] : memref<16x16xf32, #tpu.memory_space<vmem>>, vector<16x16xf32>
      tpu.vector_store %arg30[%c0_102, %c0_103], %179 {strides = array<i32>} : memref<16x16xf32, #tpu.memory_space<vmem>>, vector<16x16xf32>,
    } else {
    }
    %c0 = arith.constant 0 : index
    %c0_1 = arith.constant 0 : index
    %4 = vector.load %arg25[%c0, %c0_1] : memref<16x128xf32, #tpu.memory_space<vmem>>, vector<16x128xf32>
    %5 = arith.truncf %4 : vector<16x128xf32> to vector<16x128xbf16>
    %c0_2 = arith.constant 0 : index
    %c0_3 = arith.constant 0 : index
    %6 = vector.load %arg28[%c0_2, %c0_3] : memref<48x16xf32, #tpu.memory_space<vmem>>, vector<48x16xf32>
    %c0_4 = arith.constant 0 : index
    %c0_5 = arith.constant 0 : index
    %7 = vector.load %arg27[%c0_4, %c0_5] : memref<16x48xf32, #tpu.memory_space<vmem>>, vector<16x48xf32>
    %c0_6 = arith.constant 0 : index
    %c0_7 = arith.constant 0 : index
    %8 = vector.load %arg30[%c0_6, %c0_7] : memref<16x16xf32, #tpu.memory_space<vmem>>, vector<16x16xf32>
    %cst_8 = arith.constant 5.000000e-01 : f32
    %9 = vector.broadcast %cst_8 : f32 to vector<16x16xf32>
    %10 = arith.cmpf ogt, %8, %9 : vector<16x16xf32>
    %c0_9 = arith.constant 0 : index
    %c0_10 = arith.constant 0 : index
    %c0_11 = arith.constant 0 : index
    %11 = vector.load %arg1[%c0_9, %c0_10, %c0_11] : memref<1x128x512xbf16, #tpu.memory_space<vmem>>, vector<1x128x512xbf16>
    %12 = vector.shape_cast %11 : vector<1x128x512xbf16> to vector<128x512xbf16>
    %cst_12 = arith.constant dense<0.000000e+00> : vector<16x512xf32>
    %13 = tpu.matmul %5, %12, %cst_12 {dimension_numbers = #tpu.dot_dimension_numbers<[1], [0], [0], [1], [0, 0, 1, 1], [], []>} : vector<16x128xbf16>, vector<128x512xbf16>, vector<16x512xf32> -> vector<16x512xf32>
    %c0_13 = arith.constant 0 : index
    %c0_14 = arith.constant 0 : index
    %c0_15 = arith.constant 0 : index
    %14 = vector.load %arg2[%c0_13, %c0_14, %c0_15] : memref<1x128x128xbf16, #tpu.memory_space<vmem>>, vector<1x128x128xbf16>
    %15 = vector.shape_cast %14 : vector<1x128x128xbf16> to vector<128x128xbf16>
    %cst_16 = arith.constant dense<0.000000e+00> : vector<16x128xf32>
    %16 = tpu.matmul %5, %15, %cst_16 {dimension_numbers = #tpu.dot_dimension_numbers<[1], [0], [0], [1], [0, 0, 1, 1], [], []>} : vector<16x128xbf16>, vector<128x128xbf16>, vector<16x128xf32> -> vector<16x128xf32>
    %c0_17 = arith.constant 0 : index
    %c0_18 = arith.constant 0 : index
    %c0_19 = arith.constant 0 : index
    %17 = vector.load %arg3[%c0_17, %c0_18, %c0_19] : memref<1x128x128xbf16, #tpu.memory_space<vmem>>, vector<1x128x128xbf16>
    %18 = vector.shape_cast %17 : vector<1x128x128xbf16> to vector<128x128xbf16>
    %cst_20 = arith.constant dense<0.000000e+00> : vector<16x128xf32>
    %19 = tpu.matmul %5, %18, %cst_20 {dimension_numbers = #tpu.dot_dimension_numbers<[1], [0], [0], [1], [0, 0, 1, 1], [], []>} : vector<16x128xbf16>, vector<128x128xbf16>, vector<16x128xf32> -> vector<16x128xf32>
    %c0_21 = arith.constant 0 : index
    %c0_22 = arith.constant 0 : index
    %20 = vector.load %arg26[%c0_21, %c0_22] : memref<48x128xbf16, #tpu.memory_space<vmem>>, vector<48x128xbf16>
    %c0_23 = arith.constant 0 : index
    %c0_24 = arith.constant 0 : index
    %c0_25 = arith.constant 0 : index
    %21 = vector.load %arg4[%c0_23, %c0_24, %c0_25] : memref<1x128x128xbf16, #tpu.memory_space<vmem>>, vector<1x128x128xbf16>
    %22 = vector.shape_cast %21 : vector<1x128x128xbf16> to vector<128x128xbf16>
    %cst_26 = arith.constant dense<0.000000e+00> : vector<48x128xf32>
    %23 = tpu.matmul %20, %22, %cst_26 {dimension_numbers = #tpu.dot_dimension_numbers<[1], [0], [0], [1], [0, 0, 1, 1], [], []>} : vector<48x128xbf16>, vector<128x128xbf16>, vector<48x128xf32> -> vector<48x128xf32>
    %c0_27 = arith.constant 0 : index
    %c0_28 = arith.constant 0 : index
    %24 = vector.load %arg29[%c0_27, %c0_28] : memref<48x16xf32, #tpu.memory_space<vmem>>, vector<48x16xf32>
    %cst_29 = arith.constant dense<0.000000e+00> : vector<48x128xf32>
    %25 = tpu.matmul %24, %19, %cst_29 {dimension_numbers = #tpu.dot_dimension_numbers<[1], [0], [0], [1], [0, 0, 1, 1], [], []>} : vector<48x16xf32>, vector<16x128xf32>, vector<48x128xf32> -> vector<48x128xf32>
    %cst_30 = arith.constant dense<0.000000e+00> : vector<48x128xf32>
    %26 = tpu.matmul %6, %16, %cst_30 {dimension_numbers = #tpu.dot_dimension_numbers<[1], [0], [0], [1], [0, 0, 1, 1], [], []>} : vector<48x16xf32>, vector<16x128xf32>, vector<48x128xf32> -> vector<48x128xf32>
    %27 = arith.addf %25, %26 : vector<48x128xf32>
    %28 = arith.addf %27, %23 : vector<48x128xf32>
    %cst_31 = arith.constant 0.000000e+00 : f32
    %29 = vector.broadcast %cst_31 : f32 to vector<48x128xf32>
    %30 = arith.cmpf oge, %28, %29 : vector<48x128xf32>
    %cst_32 = arith.constant 2.000000e-01 : f32
    %31 = vector.broadcast %cst_32 : f32 to vector<48x128xf32>
    %32 = arith.mulf %31, %28 : vector<48x128xf32>
    %33 = arith.select %30, %28, %32 : vector<48x128xi1>, vector<48x128xf32>
    %34 = vector.extract_strided_slice %33 {offsets = [0, 0], sizes = [48, 1], strides = [1, 1]} : vector<48x128xf32> to vector<48x1xf32>
    %35 = vector.broadcast %34 : vector<48x1xf32> to vector<48x16xf32>
    %36 = arith.mulf %35, %6 : vector<48x16xf32>
    %37 = vector.extract_strided_slice %33 {offsets = [0, 1], sizes = [48, 1], strides = [1, 1]} : vector<48x128xf32> to vector<48x1xf32>
    %38 = vector.broadcast %37 : vector<48x1xf32> to vector<48x16xf32>
    %39 = arith.mulf %38, %6 : vector<48x16xf32>
    %40 = vector.extract_strided_slice %33 {offsets = [0, 2], sizes = [48, 1], strides = [1, 1]} : vector<48x128xf32> to vector<48x1xf32>
    %41 = vector.broadcast %40 : vector<48x1xf32> to vector<48x16xf32>
    %42 = arith.mulf %41, %6 : vector<48x16xf32>
    %43 = vector.extract_strided_slice %33 {offsets = [0, 3], sizes = [48, 1], strides = [1, 1]} : vector<48x128xf32> to vector<48x1xf32>
    %44 = vector.broadcast %43 : vector<48x1xf32> to vector<48x16xf32>
    %45 = arith.mulf %44, %6 : vector<48x16xf32>
    %46 = tpu.concatenate %36, %39, %42, %45 in 1 : vector<48x16xf32>, vector<48x16xf32>, vector<48x16xf32>, vector<48x16xf32> -> vector<48x64xf32>
    %cst_33 = arith.constant dense<0.000000e+00> : vector<16x64xf32>
    %47 = tpu.matmul %7, %46, %cst_33 {dimension_numbers = #tpu.dot_dimension_numbers<[1], [0], [0], [1], [0, 0, 1, 1], [], []>} : vector<16x48xf32>, vector<48x64xf32>, vector<16x64xf32> -> vector<16x64xf32>
    %48 = vector.extract_strided_slice %47 {offsets = [0, 0], sizes = [16, 16], strides = [1, 1]} : vector<16x64xf32> to vector<16x16xf32>
    %cst_34 = arith.constant -1.000000e+30 : f32
    %49 = vector.broadcast %cst_34 : f32 to vector<16x16xf32>
    %50 = arith.select %10, %48, %49 : vector<16x16xi1>, vector<16x16xf32>
    %cst_35 = arith.constant dense<0xFF800000> : vector<16xf32>
    %51 = vector.multi_reduction <maximumf>, %50, %cst_35 [1] : vector<16x16xf32> to vector<16xf32>
    %52 = vector.shape_cast %51 : vector<16xf32> to vector<16x1xf32>
    %53 = vector.broadcast %52 : vector<16x1xf32> to vector<16x16xf32>
    %54 = arith.subf %50, %53 : vector<16x16xf32>
    %55 = math.exp %54 : vector<16x16xf32>
    %cst_36 = arith.constant dense<0.000000e+00> : vector<16xf32>
    %56 = vector.multi_reduction <add>, %55, %cst_36 [1] : vector<16x16xf32> to vector<16xf32>
    %57 = vector.shape_cast %56 : vector<16xf32> to vector<16x1xf32>
    %58 = tpu.reciprocal %57 {approx = true} : vector<16x1xf32> -> vector<16x1xf32>
    %59 = vector.broadcast %58 : vector<16x1xf32> to vector<16x16xf32>
    %60 = arith.mulf %55, %59 : vector<16x16xf32>
    %61 = vector.extract_strided_slice %47 {offsets = [0, 16], sizes = [16, 16], strides = [1, 1]} : vector<16x64xf32> to vector<16x16xf32>
    %cst_37 = arith.constant -1.000000e+30 : f32
    %62 = vector.broadcast %cst_37 : f32 to vector<16x16xf32>
    %63 = arith.select %10, %61, %62 : vector<16x16xi1>, vector<16x16xf32>
    %cst_38 = arith.constant dense<0xFF800000> : vector<16xf32>
    %64 = vector.multi_reduction <maximumf>, %63, %cst_38 [1] : vector<16x16xf32> to vector<16xf32>
    %65 = vector.shape_cast %64 : vector<16xf32> to vector<16x1xf32>
    %66 = vector.broadcast %65 : vector<16x1xf32> to vector<16x16xf32>
    %67 = arith.subf %63, %66 : vector<16x16xf32>
    %68 = math.exp %67 : vector<16x16xf32>
    %cst_39 = arith.constant dense<0.000000e+00> : vector<16xf32>
    %69 = vector.multi_reduction <add>, %68, %cst_39 [1] : vector<16x16xf32> to vector<16xf32>
    %70 = vector.shape_cast %69 : vector<16xf32> to vector<16x1xf32>
    %71 = tpu.reciprocal %70 {approx = true} : vector<16x1xf32> -> vector<16x1xf32>
    %72 = vector.broadcast %71 : vector<16x1xf32> to vector<16x16xf32>
    %73 = arith.mulf %68, %72 : vector<16x16xf32>
    %74 = vector.extract_strided_slice %47 {offsets = [0, 32], sizes = [16, 16], strides = [1, 1]} : vector<16x64xf32> to vector<16x16xf32>
    %cst_40 = arith.constant -1.000000e+30 : f32
    %75 = vector.broadcast %cst_40 : f32 to vector<16x16xf32>
    %76 = arith.select %10, %74, %75 : vector<16x16xi1>, vector<16x16xf32>
    %cst_41 = arith.constant dense<0xFF800000> : vector<16xf32>
    %77 = vector.multi_reduction <maximumf>, %76, %cst_41 [1] : vector<16x16xf32> to vector<16xf32>
    %78 = vector.shape_cast %77 : vector<16xf32> to vector<16x1xf32>
    %79 = vector.broadcast %78 : vector<16x1xf32> to vector<16x16xf32>
    %80 = arith.subf %76, %79 : vector<16x16xf32>
    %81 = math.exp %80 : vector<16x16xf32>
    %cst_42 = arith.constant dense<0.000000e+00> : vector<16xf32>
    %82 = vector.multi_reduction <add>, %81, %cst_42 [1] : vector<16x16xf32> to vector<16xf32>
    %83 = vector.shape_cast %82 : vector<16xf32> to vector<16x1xf32>
    %84 = tpu.reciprocal %83 {approx = true} : vector<16x1xf32> -> vector<16x1xf32>
    %85 = vector.broadcast %84 : vector<16x1xf32> to vector<16x16xf32>
    %86 = arith.mulf %81, %85 : vector<16x16xf32>
    %87 = vector.extract_strided_slice %47 {offsets = [0, 48], sizes = [16, 16], strides = [1, 1]} : vector<16x64xf32> to vector<16x16xf32>
    %cst_43 = arith.constant -1.000000e+30 : f32
    %88 = vector.broadcast %cst_43 : f32 to vector<16x16xf32>
    %89 = arith.select %10, %87, %88 : vector<16x16xi1>, vector<16x16xf32>
    %cst_44 = arith.constant dense<0xFF800000> : vector<16xf32>
    %90 = vector.multi_reduction <maximumf>, %89, %cst_44 [1] : vector<16x16xf32> to vector<16xf32>
    %91 = vector.shape_cast %90 : vector<16xf32> to vector<16x1xf32>
    %92 = vector.broadcast %91 : vector<16x1xf32> to vector<16x16xf32>
    %93 = arith.subf %89, %92 : vector<16x16xf32>
    %94 = math.exp %93 : vector<16x16xf32>
    %cst_45 = arith.constant dense<0.000000e+00> : vector<16xf32>
    %95 = vector.multi_reduction <add>, %94, %cst_45 [1] : vector<16x16xf32> to vector<16xf32>
    %96 = vector.shape_cast %95 : vector<16xf32> to vector<16x1xf32>
    %97 = tpu.reciprocal %96 {approx = true} : vector<16x1xf32> -> vector<16x1xf32>
    %98 = vector.broadcast %97 : vector<16x1xf32> to vector<16x16xf32>
    %99 = arith.mulf %94, %98 : vector<16x16xf32>
    %100 = tpu.concatenate %60, %73, %86, %99 in 1 : vector<16x16xf32>, vector<16x16xf32>, vector<16x16xf32>, vector<16x16xf32> -> vector<16x64xf32>
    %101 = vector.extract_strided_slice %13 {offsets = [0, 0], sizes = [16, 128], strides = [1, 1]} : vector<16x512xf32> to vector<16x128xf32>
    %102 = vector.extract_strided_slice %13 {offsets = [0, 128], sizes = [16, 128], strides = [1, 1]} : vector<16x512xf32> to vector<16x128xf32>
    %103 = vector.extract_strided_slice %13 {offsets = [0, 256], sizes = [16, 128], strides = [1, 1]} : vector<16x512xf32> to vector<16x128xf32>
    %104 = vector.extract_strided_slice %13 {offsets = [0, 384], sizes = [16, 128], strides = [1, 1]} : vector<16x512xf32> to vector<16x128xf32>
    %105 = tpu.concatenate %101, %102, %103, %104 in 0 : vector<16x128xf32>, vector<16x128xf32>, vector<16x128xf32>, vector<16x128xf32> -> vector<64x128xf32>
    %cst_46 = arith.constant dense<0.000000e+00> : vector<16x128xf32>
    %106 = tpu.matmul %100, %105, %cst_46 {dimension_numbers = #tpu.dot_dimension_numbers<[1], [0], [0], [1], [0, 0, 1, 1], [], []>} : vector<16x64xf32>, vector<64x128xf32>, vector<16x128xf32> -> vector<16x128xf32>
    %cst_47 = arith.constant 2.500000e-01 : f32
    %107 = vector.broadcast %cst_47 : f32 to vector<16x128xf32>
    %108 = arith.mulf %106, %107 : vector<16x128xf32>
    %c0_48 = arith.constant 0 : index
    %c0_49 = arith.constant 0 : index
    %c0_50 = arith.constant 0 : index
    %109 = vector.load %arg5[%c0_48, %c0_49, %c0_50] : memref<1x1x128xf32, #tpu.memory_space<vmem>>, vector<1x1x128xf32>
    %110 = vector.shape_cast %109 : vector<1x1x128xf32> to vector<1x128xf32>
    %111 = vector.broadcast %110 : vector<1x128xf32> to vector<16x128xf32>
    %112 = arith.addf %108, %111 : vector<16x128xf32>
    %cst_51 = arith.constant dense<0.000000e+00> : vector<1x128xf32>
    %113 = tpu.matmul %0, %112, %cst_51 {dimension_numbers = #tpu.dot_dimension_numbers<[1], [0], [0], [1], [0, 0, 1, 1], [], []>} : vector<1x16xf32>, vector<16x128xf32>, vector<1x128xf32> -> vector<1x128xf32>
    %cst_52 = arith.constant 6.250000e-02 : f32
    %114 = vector.broadcast %cst_52 : f32 to vector<1x128xf32>
    %115 = arith.mulf %113, %114 : vector<1x128xf32>
    %116 = vector.broadcast %115 : vector<1x128xf32> to vector<16x128xf32>
    %117 = arith.subf %112, %116 : vector<16x128xf32>
    %118 = arith.mulf %117, %117 : vector<16x128xf32>
    %cst_53 = arith.constant dense<0.000000e+00> : vector<1x128xf32>
    %119 = tpu.matmul %0, %118, %cst_53 {dimension_numbers = #tpu.dot_dimension_numbers<[1], [0], [0], [1], [0, 0, 1, 1], [], []>} : vector<1x16xf32>, vector<16x128xf32>, vector<1x128xf32> -> vector<1x128xf32>
    %cst_54 = arith.constant 6.250000e-02 : f32
    %120 = vector.broadcast %cst_54 : f32 to vector<1x128xf32>
    %121 = arith.mulf %119, %120 : vector<1x128xf32>
    %cst_55 = arith.constant 9.99999974E-6 : f32
    %122 = vector.broadcast %cst_55 : f32 to vector<1x128xf32>
    %123 = arith.addf %121, %122 : vector<1x128xf32>
    %124 = math.rsqrt %123 : vector<1x128xf32>
    %125 = vector.broadcast %124 : vector<1x128xf32> to vector<16x128xf32>
    %126 = arith.mulf %117, %125 : vector<16x128xf32>
    %c0_56 = arith.constant 0 : index
    %c0_57 = arith.constant 0 : index
    %c0_58 = arith.constant 0 : index
    %127 = vector.load %arg6[%c0_56, %c0_57, %c0_58] : memref<1x1x128xf32, #tpu.memory_space<vmem>>, vector<1x1x128xf32>
    %128 = vector.shape_cast %127 : vector<1x1x128xf32> to vector<1x128xf32>
    %129 = vector.broadcast %128 : vector<1x128xf32> to vector<16x128xf32>
    %130 = arith.mulf %126, %129 : vector<16x128xf32>
    %c0_59 = arith.constant 0 : index
    %c0_60 = arith.constant 0 : index
    %c0_61 = arith.constant 0 : index
    %131 = vector.load %arg7[%c0_59, %c0_60, %c0_61] : memref<1x1x128xf32, #tpu.memory_space<vmem>>, vector<1x1x128xf32>
    %132 = vector.shape_cast %131 : vector<1x1x128xf32> to vector<1x128xf32>
    %133 = vector.broadcast %132 : vector<1x128xf32> to vector<16x128xf32>
    %134 = arith.addf %130, %133 : vector<16x128xf32>
    %cst_62 = arith.constant 0.000000e+00 : f32
    %135 = vector.broadcast %cst_62 : f32 to vector<16x128xf32>
    %136 = arith.maximumf %134, %135 : vector<16x128xf32>
    %137 = arith.addf %136, %4 : vector<16x128xf32>
    %c0_63 = arith.constant 0 : index
    %c0_64 = arith.constant 0 : index
    %138 = vector.load %arg25[%c0_63, %c0_64] : memref<16x128xf32, #tpu.memory_space<vmem>>, vector<16x128xf32>
    tpu.vector_store %arg25[%c0_63, %c0_64], %137 {strides = array<i32>} : memref<16x128xf32, #tpu.memory_space<vmem>>, vector<16x128xf32>,
    %c2_i32 = arith.constant 2 : i32
    %139 = arith.cmpi eq, %arg0, %c2_i32 : i32
    %140 = arith.extui %139 : i1 to i32
    %c0_i32_65 = arith.constant 0 : i32
    %141 = arith.cmpi ne, %140, %c0_i32_65 : i32
    scf.if %141 {
      %cst_66 = arith.constant 0.000000e+00 : f32
      %142 = vector.broadcast %cst_66 : f32 to vector<1x256xf32>
      %cst_67 = arith.constant 0.000000e+00 : f32
      %143 = vector.broadcast %cst_67 : f32 to vector<1x128xf32>
      %cst_68 = arith.constant 0.000000e+00 : f32
      %144 = vector.broadcast %cst_68 : f32 to vector<1x128xf32>
      %c0_69 = arith.constant 0 : index
      %c0_70 = arith.constant 0 : index
      %145 = vector.load %arg17[%c0_69, %c0_70] : memref<256x512xf32, #tpu.memory_space<vmem>>, vector<256x512xf32>
      %cst_71 = arith.constant dense<0.000000e+00> : vector<1x512xf32>
      %146 = tpu.matmul %142, %145, %cst_71 {dimension_numbers = #tpu.dot_dimension_numbers<[1], [0], [0], [1], [0, 0, 1, 1], [], []>} : vector<1x256xf32>, vector<256x512xf32>, vector<1x512xf32> -> vector<1x512xf32>
      %c0_72 = arith.constant 0 : index
      %c0_73 = arith.constant 0 : index
      %147 = vector.load %arg18[%c0_72, %c0_73] : memref<128x512xf32, #tpu.memory_space<vmem>>, vector<128x512xf32>
      %cst_74 = arith.constant dense<0.000000e+00> : vector<1x512xf32>
      %148 = tpu.matmul %143, %147, %cst_74 {dimension_numbers = #tpu.dot_dimension_numbers<[1], [0], [0], [1], [0, 0, 1, 1], [], []>} : vector<1x128xf32>, vector<128x512xf32>, vector<1x512xf32> -> vector<1x512xf32>
      %149 = arith.addf %146, %148 : vector<1x512xf32>
      %c0_75 = arith.constant 0 : index
      %c0_76 = arith.constant 0 : index
      %150 = vector.load %arg19[%c0_75, %c0_76] : memref<1x512xf32, #tpu.memory_space<vmem>>, vector<1x512xf32>
      %151 = arith.addf %149, %150 : vector<1x512xf32>
      %152 = vector.extract_strided_slice %151 {offsets = [0, 0], sizes = [1, 128], strides = [1, 1]} : vector<1x512xf32> to vector<1x128xf32>
      %153 = arith.negf %152 : vector<1x128xf32>
      %154 = math.exp %153 : vector<1x128xf32>
      %cst_77 = arith.constant 1.000000e+00 : f32
      %155 = vector.broadcast %cst_77 : f32 to vector<1x128xf32>
      %156 = arith.addf %155, %154 : vector<1x128xf32>
      %157 = arith.divf %155, %156 : vector<1x128xf32>
      %158 = vector.extract_strided_slice %151 {offsets = [0, 128], sizes = [1, 128], strides = [1, 1]} : vector<1x512xf32> to vector<1x128xf32>
      %159 = arith.negf %158 : vector<1x128xf32>
      %160 = math.exp %159 : vector<1x128xf32>
      %cst_78 = arith.constant 1.000000e+00 : f32
      %161 = vector.broadcast %cst_78 : f32 to vector<1x128xf32>
      %162 = arith.addf %161, %160 : vector<1x128xf32>
      %163 = arith.divf %161, %162 : vector<1x128xf32>
      %164 = vector.extract_strided_slice %151 {offsets = [0, 256], sizes = [1, 128], strides = [1, 1]} : vector<1x512xf32> to vector<1x128xf32>
      %165 = math.tanh %164 : vector<1x128xf32>
      %166 = vector.extract_strided_slice %151 {offsets = [0, 384], sizes = [1, 128], strides = [1, 1]} : vector<1x512xf32> to vector<1x128xf32>
      %167 = arith.negf %166 : vector<1x128xf32>
      %168 = math.exp %167 : vector<1x128xf32>
      %cst_79 = arith.constant 1.000000e+00 : f32
      %169 = vector.broadcast %cst_79 : f32 to vector<1x128xf32>
      %170 = arith.addf %169, %168 : vector<1x128xf32>
      %171 = arith.divf %169, %170 : vector<1x128xf32>
      %172 = arith.mulf %163, %144 : vector<1x128xf32>
      %173 = arith.mulf %157, %165 : vector<1x128xf32>
      %174 = arith.addf %172, %173 : vector<1x128xf32>
      %175 = math.tanh %174 : vector<1x128xf32>
      %176 = arith.mulf %171, %175 : vector<1x128xf32>
      %177 = vector.broadcast %176 : vector<1x128xf32> to vector<16x128xf32>
      %178 = arith.mulf %137, %177 : vector<16x128xf32>
      %cst_80 = arith.constant dense<0.000000e+00> : vector<16xf32>
      %179 = vector.multi_reduction <add>, %178, %cst_80 [1] : vector<16x128xf32> to vector<16xf32>
      %180 = vector.shape_cast %179 : vector<16xf32> to vector<16x1xf32>
      %cst_81 = arith.constant dense<0xFF800000> : vector<1xf32>
      %181 = vector.multi_reduction <maximumf>, %180, %cst_81 [0] : vector<16x1xf32> to vector<1xf32>
      %182 = vector.shape_cast %181 : vector<1xf32> to vector<1x1xf32>
      %183 = vector.broadcast %182 : vector<1x1xf32> to vector<16x1xf32>
      %184 = arith.subf %180, %183 : vector<16x1xf32>
      %185 = math.exp %184 : vector<16x1xf32>
      %cst_82 = arith.constant dense<0.000000e+00> : vector<1x1xf32>
      %186 = tpu.matmul %0, %185, %cst_82 {dimension_numbers = #tpu.dot_dimension_numbers<[1], [0], [0], [1], [0, 0, 1, 1], [], []>} : vector<1x16xf32>, vector<16x1xf32>, vector<1x1xf32> -> vector<1x1xf32>
      %187 = vector.broadcast %186 : vector<1x1xf32> to vector<16x1xf32>
      %188 = arith.divf %185, %187 : vector<16x1xf32>
      %189 = vector.broadcast %188 : vector<16x1xf32> to vector<16x128xf32>
      %190 = arith.mulf %189, %137 : vector<16x128xf32>
      %cst_83 = arith.constant dense<0.000000e+00> : vector<1x128xf32>
      %191 = tpu.matmul %0, %190, %cst_83 {dimension_numbers = #tpu.dot_dimension_numbers<[1], [0], [0], [1], [0, 0, 1, 1], [], []>} : vector<1x16xf32>, vector<16x128xf32>, vector<1x128xf32> -> vector<1x128xf32>
      %192 = tpu.concatenate %176, %191 in 1 : vector<1x128xf32>, vector<1x128xf32> -> vector<1x256xf32>
      %c0_84 = arith.constant 0 : index
      %c0_85 = arith.constant 0 : index
      %193 = vector.load %arg17[%c0_84, %c0_85] : memref<256x512xf32, #tpu.memory_space<vmem>>, vector<256x512xf32>
      %cst_86 = arith.constant dense<0.000000e+00> : vector<1x512xf32>
      %194 = tpu.matmul %192, %193, %cst_86 {dimension_numbers = #tpu.dot_dimension_numbers<[1], [0], [0], [1], [0, 0, 1, 1], [], []>} : vector<1x256xf32>, vector<256x512xf32>, vector<1x512xf32> -> vector<1x512xf32>
      %c0_87 = arith.constant 0 : index
      %c0_88 = arith.constant 0 : index
      %195 = vector.load %arg18[%c0_87, %c0_88] : memref<128x512xf32, #tpu.memory_space<vmem>>, vector<128x512xf32>
      %cst_89 = arith.constant dense<0.000000e+00> : vector<1x512xf32>
      %196 = tpu.matmul %176, %195, %cst_89 {dimension_numbers = #tpu.dot_dimension_numbers<[1], [0], [0], [1], [0, 0, 1, 1], [], []>} : vector<1x128xf32>, vector<128x512xf32>, vector<1x512xf32> -> vector<1x512xf32>
      %197 = arith.addf %194, %196 : vector<1x512xf32>
      %c0_90 = arith.constant 0 : index
      %c0_91 = arith.constant 0 : index
      %198 = vector.load %arg19[%c0_90, %c0_91] : memref<1x512xf32, #tpu.memory_space<vmem>>, vector<1x512xf32>
      %199 = arith.addf %197, %198 : vector<1x512xf32>
      %200 = vector.extract_strided_slice %199 {offsets = [0, 0], sizes = [1, 128], strides = [1, 1]} : vector<1x512xf32> to vector<1x128xf32>
      %201 = arith.negf %200 : vector<1x128xf32>
      %202 = math.exp %201 : vector<1x128xf32>
      %cst_92 = arith.constant 1.000000e+00 : f32
      %203 = vector.broadcast %cst_92 : f32 to vector<1x128xf32>
      %204 = arith.addf %203, %202 : vector<1x128xf32>
      %205 = arith.divf %203, %204 : vector<1x128xf32>
      %206 = vector.extract_strided_slice %199 {offsets = [0, 128], sizes = [1, 128], strides = [1, 1]} : vector<1x512xf32> to vector<1x128xf32>
      %207 = arith.negf %206 : vector<1x128xf32>
      %208 = math.exp %207 : vector<1x128xf32>
      %cst_93 = arith.constant 1.000000e+00 : f32
      %209 = vector.broadcast %cst_93 : f32 to vector<1x128xf32>
      %210 = arith.addf %209, %208 : vector<1x128xf32>
      %211 = arith.divf %209, %210 : vector<1x128xf32>
      %212 = vector.extract_strided_slice %199 {offsets = [0, 256], sizes = [1, 128], strides = [1, 1]} : vector<1x512xf32> to vector<1x128xf32>
      %213 = math.tanh %212 : vector<1x128xf32>
      %214 = vector.extract_strided_slice %199 {offsets = [0, 384], sizes = [1, 128], strides = [1, 1]} : vector<1x512xf32> to vector<1x128xf32>
      %215 = arith.negf %214 : vector<1x128xf32>
      %216 = math.exp %215 : vector<1x128xf32>
      %cst_94 = arith.constant 1.000000e+00 : f32
      %217 = vector.broadcast %cst_94 : f32 to vector<1x128xf32>
      %218 = arith.addf %217, %216 : vector<1x128xf32>
      %219 = arith.divf %217, %218 : vector<1x128xf32>
      %220 = arith.mulf %211, %174 : vector<1x128xf32>
      %221 = arith.mulf %205, %213 : vector<1x128xf32>
      %222 = arith.addf %220, %221 : vector<1x128xf32>
      %223 = math.tanh %222 : vector<1x128xf32>
      %224 = arith.mulf %219, %223 : vector<1x128xf32>
      %225 = vector.broadcast %224 : vector<1x128xf32> to vector<16x128xf32>
      %226 = arith.mulf %137, %225 : vector<16x128xf32>
      %cst_95 = arith.constant dense<0.000000e+00> : vector<16xf32>
      %227 = vector.multi_reduction <add>, %226, %cst_95 [1] : vector<16x128xf32> to vector<16xf32>
      %228 = vector.shape_cast %227 : vector<16xf32> to vector<16x1xf32>
      %cst_96 = arith.constant dense<0xFF800000> : vector<1xf32>
      %229 = vector.multi_reduction <maximumf>, %228, %cst_96 [0] : vector<16x1xf32> to vector<1xf32>
      %230 = vector.shape_cast %229 : vector<1xf32> to vector<1x1xf32>
      %231 = vector.broadcast %230 : vector<1x1xf32> to vector<16x1xf32>
      %232 = arith.subf %228, %231 : vector<16x1xf32>
      %233 = math.exp %232 : vector<16x1xf32>
      %cst_97 = arith.constant dense<0.000000e+00> : vector<1x1xf32>
      %234 = tpu.matmul %0, %233, %cst_97 {dimension_numbers = #tpu.dot_dimension_numbers<[1], [0], [0], [1], [0, 0, 1, 1], [], []>} : vector<1x16xf32>, vector<16x1xf32>, vector<1x1xf32> -> vector<1x1xf32>
      %235 = vector.broadcast %234 : vector<1x1xf32> to vector<16x1xf32>
      %236 = arith.divf %233, %235 : vector<16x1xf32>
      %237 = vector.broadcast %236 : vector<16x1xf32> to vector<16x128xf32>
      %238 = arith.mulf %237, %137 : vector<16x128xf32>
      %cst_98 = arith.constant dense<0.000000e+00> : vector<1x128xf32>
      %239 = tpu.matmul %0, %238, %cst_98 {dimension_numbers = #tpu.dot_dimension_numbers<[1], [0], [0], [1], [0, 0, 1, 1], [], []>} : vector<1x16xf32>, vector<16x128xf32>, vector<1x128xf32> -> vector<1x128xf32>
      %240 = tpu.concatenate %224, %239 in 1 : vector<1x128xf32>, vector<1x128xf32> -> vector<1x256xf32>
      %c0_99 = arith.constant 0 : index
      %c0_100 = arith.constant 0 : index
      %241 = vector.load %arg17[%c0_99, %c0_100] : memref<256x512xf32, #tpu.memory_space<vmem>>, vector<256x512xf32>
      %cst_101 = arith.constant dense<0.000000e+00> : vector<1x512xf32>
      %242 = tpu.matmul %240, %241, %cst_101 {dimension_numbers = #tpu.dot_dimension_numbers<[1], [0], [0], [1], [0, 0, 1, 1], [], []>} : vector<1x256xf32>, vector<256x512xf32>, vector<1x512xf32> -> vector<1x512xf32>
      %c0_102 = arith.constant 0 : index
      %c0_103 = arith.constant 0 : index
      %243 = vector.load %arg18[%c0_102, %c0_103] : memref<128x512xf32, #tpu.memory_space<vmem>>, vector<128x512xf32>
      %cst_104 = arith.constant dense<0.000000e+00> : vector<1x512xf32>
      %244 = tpu.matmul %224, %243, %cst_104 {dimension_numbers = #tpu.dot_dimension_numbers<[1], [0], [0], [1], [0, 0, 1, 1], [], []>} : vector<1x128xf32>, vector<128x512xf32>, vector<1x512xf32> -> vector<1x512xf32>
      %245 = arith.addf %242, %244 : vector<1x512xf32>
      %c0_105 = arith.constant 0 : index
      %c0_106 = arith.constant 0 : index
      %246 = vector.load %arg19[%c0_105, %c0_106] : memref<1x512xf32, #tpu.memory_space<vmem>>, vector<1x512xf32>
      %247 = arith.addf %245, %246 : vector<1x512xf32>
      %248 = vector.extract_strided_slice %247 {offsets = [0, 0], sizes = [1, 128], strides = [1, 1]} : vector<1x512xf32> to vector<1x128xf32>
      %249 = arith.negf %248 : vector<1x128xf32>
      %250 = math.exp %249 : vector<1x128xf32>
      %cst_107 = arith.constant 1.000000e+00 : f32
      %251 = vector.broadcast %cst_107 : f32 to vector<1x128xf32>
      %252 = arith.addf %251, %250 : vector<1x128xf32>
      %253 = arith.divf %251, %252 : vector<1x128xf32>
      %254 = vector.extract_strided_slice %247 {offsets = [0, 128], sizes = [1, 128], strides = [1, 1]} : vector<1x512xf32> to vector<1x128xf32>
      %255 = arith.negf %254 : vector<1x128xf32>
      %256 = math.exp %255 : vector<1x128xf32>
      %cst_108 = arith.constant 1.000000e+00 : f32
      %257 = vector.broadcast %cst_108 : f32 to vector<1x128xf32>
      %258 = arith.addf %257, %256 : vector<1x128xf32>
      %259 = arith.divf %257, %258 : vector<1x128xf32>
      %260 = vector.extract_strided_slice %247 {offsets = [0, 256], sizes = [1, 128], strides = [1, 1]} : vector<1x512xf32> to vector<1x128xf32>
      %261 = math.tanh %260 : vector<1x128xf32>
      %262 = vector.extract_strided_slice %247 {offsets = [0, 384], sizes = [1, 128], strides = [1, 1]} : vector<1x512xf32> to vector<1x128xf32>
      %263 = arith.negf %262 : vector<1x128xf32>
      %264 = math.exp %263 : vector<1x128xf32>
      %cst_109 = arith.constant 1.000000e+00 : f32
      %265 = vector.broadcast %cst_109 : f32 to vector<1x128xf32>
      %266 = arith.addf %265, %264 : vector<1x128xf32>
      %267 = arith.divf %265, %266 : vector<1x128xf32>
      %268 = arith.mulf %259, %222 : vector<1x128xf32>
      %269 = arith.mulf %253, %261 : vector<1x128xf32>
      %270 = arith.addf %268, %269 : vector<1x128xf32>
      %271 = math.tanh %270 : vector<1x128xf32>
      %272 = arith.mulf %267, %271 : vector<1x128xf32>
      %273 = vector.broadcast %272 : vector<1x128xf32> to vector<16x128xf32>
      %274 = arith.mulf %137, %273 : vector<16x128xf32>
      %cst_110 = arith.constant dense<0.000000e+00> : vector<16xf32>
      %275 = vector.multi_reduction <add>, %274, %cst_110 [1] : vector<16x128xf32> to vector<16xf32>
      %276 = vector.shape_cast %275 : vector<16xf32> to vector<16x1xf32>
      %cst_111 = arith.constant dense<0xFF800000> : vector<1xf32>
      %277 = vector.multi_reduction <maximumf>, %276, %cst_111 [0] : vector<16x1xf32> to vector<1xf32>
      %278 = vector.shape_cast %277 : vector<1xf32> to vector<1x1xf32>
      %279 = vector.broadcast %278 : vector<1x1xf32> to vector<16x1xf32>
      %280 = arith.subf %276, %279 : vector<16x1xf32>
      %281 = math.exp %280 : vector<16x1xf32>
      %cst_112 = arith.constant dense<0.000000e+00> : vector<1x1xf32>
      %282 = tpu.matmul %0, %281, %cst_112 {dimension_numbers = #tpu.dot_dimension_numbers<[1], [0], [0], [1], [0, 0, 1, 1], [], []>} : vector<1x16xf32>, vector<16x1xf32>, vector<1x1xf32> -> vector<1x1xf32>
      %283 = vector.broadcast %282 : vector<1x1xf32> to vector<16x1xf32>
      %284 = arith.divf %281, %283 : vector<16x1xf32>
      %285 = vector.broadcast %284 : vector<16x1xf32> to vector<16x128xf32>
      %286 = arith.mulf %285, %137 : vector<16x128xf32>
      %cst_113 = arith.constant dense<0.000000e+00> : vector<1x128xf32>
      %287 = tpu.matmul %0, %286, %cst_113 {dimension_numbers = #tpu.dot_dimension_numbers<[1], [0], [0], [1], [0, 0, 1, 1], [], []>} : vector<1x16xf32>, vector<16x128xf32>, vector<1x128xf32> -> vector<1x128xf32>
      %288 = tpu.concatenate %272, %287 in 1 : vector<1x128xf32>, vector<1x128xf32> -> vector<1x256xf32>
      %c0_114 = arith.constant 0 : index
      %c0_115 = arith.constant 0 : index
      %289 = vector.load %arg20[%c0_114, %c0_115] : memref<256x128xf32, #tpu.memory_space<vmem>>, vector<256x128xf32>
      %cst_116 = arith.constant dense<0.000000e+00> : vector<1x128xf32>
      %290 = tpu.matmul %288, %289, %cst_116 {dimension_numbers = #tpu.dot_dimension_numbers<[1], [0], [0], [1], [0, 0, 1, 1], [], []>} : vector<1x256xf32>, vector<256x128xf32>, vector<1x128xf32> -> vector<1x128xf32>
      %c0_117 = arith.constant 0 : index
      %c0_118 = arith.constant 0 : index
      %291 = vector.load %arg21[%c0_117, %c0_118] : memref<1x128xf32, #tpu.memory_space<vmem>>, vector<1x128xf32>
      %292 = arith.addf %290, %291 : vector<1x128xf32>
      %cst_119 = arith.constant 0.000000e+00 : f32
      %293 = vector.broadcast %cst_119 : f32 to vector<1x128xf32>
      %294 = arith.maximumf %292, %293 : vector<1x128xf32>
      %c0_120 = arith.constant 0 : index
      %c0_121 = arith.constant 0 : index
      %295 = vector.load %arg22[%c0_120, %c0_121] : memref<128x256xf32, #tpu.memory_space<vmem>>, vector<128x256xf32>
      %cst_122 = arith.constant dense<0.000000e+00> : vector<1x256xf32>
      %296 = tpu.matmul %294, %295, %cst_122 {dimension_numbers = #tpu.dot_dimension_numbers<[1], [0], [0], [1], [0, 0, 1, 1], [], []>} : vector<1x128xf32>, vector<128x256xf32>, vector<1x256xf32> -> vector<1x256xf32>
      %c0_123 = arith.constant 0 : index
      %c0_124 = arith.constant 0 : index
      %297 = vector.load %arg23[%c0_123, %c0_124] : memref<1x256xf32, #tpu.memory_space<vmem>>, vector<1x256xf32>
      %298 = arith.addf %296, %297 : vector<1x256xf32>
      %cst_125 = arith.constant 0.000000e+00 : f32
      %299 = vector.broadcast %cst_125 : f32 to vector<1x256xf32>
      %300 = arith.maximumf %298, %299 : vector<1x256xf32>
      %301 = arith.mulf %300, %300 : vector<1x256xf32>
      %cst_126 = arith.constant dense<0.000000e+00> : vector<1xf32>
      %302 = vector.multi_reduction <add>, %301, %cst_126 [1] : vector<1x256xf32> to vector<1xf32>
      %303 = vector.shape_cast %302 : vector<1xf32> to vector<1x1xf32>
      %cst_127 = arith.constant 1.000000e-24 : f32
      %304 = vector.broadcast %cst_127 : f32 to vector<1x1xf32>
      %305 = arith.maximumf %303, %304 : vector<1x1xf32>
      %306 = math.rsqrt %305 : vector<1x1xf32>
      %307 = vector.broadcast %306 : vector<1x1xf32> to vector<1x256xf32>
      %308 = arith.mulf %300, %307 : vector<1x256xf32>
      %c0_128 = arith.constant 0 : index
      %c0_129 = arith.constant 0 : index
      %309 = vector.load %arg24[%c0_128, %c0_129] : memref<1x256xf32, #tpu.memory_space<vmem>>, vector<1x256xf32>
      tpu.vector_store %arg24[%c0_128, %c0_129], %308 {strides = array<i32>} : memref<1x256xf32, #tpu.memory_space<vmem>>, vector<1x256xf32>,
    } else {
    }
    return
  }
  func.func @transform_0(%arg0: i32) -> (i32, i32, i32) {
    %c0_i32 = arith.constant 0 : i32
    %c0_i32_0 = arith.constant 0 : i32
    %c0_i32_1 = arith.constant 0 : i32
    return %arg0, %c0_i32, %c0_i32_0 : i32, i32, i32
  }
  func.func @transform_1(%arg0: i32) -> (i32, i32, i32) {
    %c0_i32 = arith.constant 0 : i32
    %c0_i32_0 = arith.constant 0 : i32
    %c0_i32_1 = arith.constant 0 : i32
    return %arg0, %c0_i32, %c0_i32_0 : i32, i32, i32
  }
  func.func @transform_2(%arg0: i32) -> (i32, i32, i32) {
    %c0_i32 = arith.constant 0 : i32
    %c0_i32_0 = arith.constant 0 : i32
    %c0_i32_1 = arith.constant 0 : i32
    return %arg0, %c0_i32, %c0_i32_0 : i32, i32, i32
  }
  func.func @transform_3(%arg0: i32) -> (i32, i32, i32) {
    %c0_i32 = arith.constant 0 : i32
    %c0_i32_0 = arith.constant 0 : i32
    %c0_i32_1 = arith.constant 0 : i32
    return %arg0, %c0_i32, %c0_i32_0 : i32, i32, i32
  }
  func.func @transform_4(%arg0: i32) -> (i32, i32, i32) {
    %c0_i32 = arith.constant 0 : i32
    %c0_i32_0 = arith.constant 0 : i32
    %c0_i32_1 = arith.constant 0 : i32
    return %arg0, %c0_i32, %c0_i32_0 : i32, i32, i32
  }
  func.func @transform_5(%arg0: i32) -> (i32, i32, i32) {
    %c0_i32 = arith.constant 0 : i32
    %c0_i32_0 = arith.constant 0 : i32
    %c0_i32_1 = arith.constant 0 : i32
    return %arg0, %c0_i32, %c0_i32_0 : i32, i32, i32
  }
  func.func @transform_6(%arg0: i32) -> (i32, i32, i32) {
    %c0_i32 = arith.constant 0 : i32
    %c0_i32_0 = arith.constant 0 : i32
    %c0_i32_1 = arith.constant 0 : i32
    return %arg0, %c0_i32, %c0_i32_0 : i32, i32, i32
  }
  func.func @transform_7(%arg0: i32) -> (i32, i32) {
    %c0_i32 = arith.constant 0 : i32
    %c0_i32_0 = arith.constant 0 : i32
    %c0_i32_1 = arith.constant 0 : i32
    return %c0_i32, %c0_i32_0 : i32, i32
  }
  func.func @transform_8(%arg0: i32) -> (i32, i32) {
    %c0_i32 = arith.constant 0 : i32
    %c0_i32_0 = arith.constant 0 : i32
    %c0_i32_1 = arith.constant 0 : i32
    return %c0_i32, %c0_i32_0 : i32, i32
  }
  func.func @transform_9(%arg0: i32) -> (i32, i32) {
    %c0_i32 = arith.constant 0 : i32
    %c0_i32_0 = arith.constant 0 : i32
    %c0_i32_1 = arith.constant 0 : i32
    return %c0_i32, %c0_i32_0 : i32, i32
  }
  func.func @transform_10(%arg0: i32) -> (i32, i32) {
    %c0_i32 = arith.constant 0 : i32
    %c0_i32_0 = arith.constant 0 : i32
    %c0_i32_1 = arith.constant 0 : i32
    return %c0_i32, %c0_i32_0 : i32, i32
  }
  func.func @transform_11(%arg0: i32) -> (i32, i32) {
    %c0_i32 = arith.constant 0 : i32
    %c0_i32_0 = arith.constant 0 : i32
    %c0_i32_1 = arith.constant 0 : i32
    return %c0_i32, %c0_i32_0 : i32, i32
  }
  func.func @transform_12(%arg0: i32) -> (i32, i32) {
    %c0_i32 = arith.constant 0 : i32
    %c0_i32_0 = arith.constant 0 : i32
    %c0_i32_1 = arith.constant 0 : i32
    return %c0_i32, %c0_i32_0 : i32, i32
  }
  func.func @transform_13(%arg0: i32) -> (i32, i32) {
    %c0_i32 = arith.constant 0 : i32
    %c0_i32_0 = arith.constant 0 : i32
    %c0_i32_1 = arith.constant 0 : i32
    return %c0_i32, %c0_i32_0 : i32, i32
  }
  func.func @transform_14(%arg0: i32) -> (i32, i32) {
    %c0_i32 = arith.constant 0 : i32
    %c0_i32_0 = arith.constant 0 : i32
    %c0_i32_1 = arith.constant 0 : i32
    return %c0_i32, %c0_i32_0 : i32, i32
  }
  func.func @transform_15(%arg0: i32) -> (i32, i32) {
    %c0_i32 = arith.constant 0 : i32
    %c0_i32_0 = arith.constant 0 : i32
    %c0_i32_1 = arith.constant 0 : i32
    return %c0_i32, %c0_i32_0 : i32, i32
  }
  func.func @transform_16(%arg0: i32) -> (i32, i32) {
    %c0_i32 = arith.constant 0 : i32
    %c0_i32_0 = arith.constant 0 : i32
    %c0_i32_1 = arith.constant 0 : i32
    return %c0_i32, %c0_i32_0 : i32, i32
  }
  func.func @transform_17(%arg0: i32) -> (i32, i32) {
    %c0_i32 = arith.constant 0 : i32
    %c0_i32_0 = arith.constant 0 : i32
    %c0_i32_1 = arith.constant 0 : i32
    return %c0_i32, %c0_i32_0 : i32, i32
  }
  func.func @transform_18(%arg0: i32) -> (i32, i32) {
    %c0_i32 = arith.constant 0 : i32
    %c0_i32_0 = arith.constant 0 : i32
    %c0_i32_1 = arith.constant 0 : i32
    return %c0_i32, %c0_i32_0 : i32, i32
  }
  func.func @transform_19(%arg0: i32) -> (i32, i32) {
    %c0_i32 = arith.constant 0 : i32
    %c0_i32_0 = arith.constant 0 : i32
    %c0_i32_1 = arith.constant 0 : i32
    return %c0_i32, %c0_i32_0 : i32, i32
  }
  func.func @transform_20(%arg0: i32) -> (i32, i32) {
    %c0_i32 = arith.constant 0 : i32
    %c0_i32_0 = arith.constant 0 : i32
    %c0_i32_1 = arith.constant 0 : i32
    return %c0_i32, %c0_i32_0 : i32, i32
  }
  func.func @transform_21(%arg0: i32) -> (i32, i32) {
    %c0_i32 = arith.constant 0 : i32
    %c0_i32_0 = arith.constant 0 : i32
    %c0_i32_1 = arith.constant 0 : i32
    return %c0_i32, %c0_i32_0 : i32, i32
  }
  func.func @transform_22(%arg0: i32) -> (i32, i32) {
    %c0_i32 = arith.constant 0 : i32
    %c0_i32_0 = arith.constant 0 : i32
    %c0_i32_1 = arith.constant 0 : i32
    return %c0_i32, %c0_i32_0 : i32, i32
  }
  func.func @transform_23(%arg0: i32) -> (i32, i32) {
    %c0_i32 = arith.constant 0 : i32
    %c0_i32_0 = arith.constant 0 : i32
    %c0_i32_1 = arith.constant 0 : i32
    return %c0_i32, %c0_i32_0 : i32, i32
  }
}

</mosaic_0001>

<llo_original>
// kernel: gnn_encoder_forward.1
$region0: #{gnn_encoder_forward.1}
  #allocation0 [shape = 'u32[]', space=smem, size = 0x4, offset = 0x4, fixed_abs, tag = 'smem constant byte address 0x4 - core index']
  #allocation1 [shape = 'u32[144,128]{1,0:T(1,128)}', space=vmem, size = 0x12000, scoped, tag = 'internal scratch']
  #allocation2 [shape = 'f32[16,128]{1,0:T(8,128)}', space=vmem, size = 0x2000, scoped, tag = 'scratch operand']
  #allocation3 [shape = 'bf16[48,128]{1,0:T(16,128)(2,1)}', space=vmem, size = 0x3000, scoped, tag = 'scratch operand']
  #allocation4 [shape = 'f32[16,48]{1,0:T(8,128)}', space=vmem, size = 0x2000, scoped, tag = 'scratch operand']
  #allocation5 [shape = 'f32[48,16]{1,0:T(8,128)}', space=vmem, size = 0x6000, scoped, tag = 'scratch operand']
  #allocation6 [shape = 'f32[48,16]{1,0:T(8,128)}', space=vmem, size = 0x6000, scoped, tag = 'scratch operand']
  #allocation7 [shape = 'f32[16,16]{1,0:T(8,128)}', space=vmem, size = 0x2000, scoped, tag = 'scratch operand']
  %s0 = inlined_call_operand.vmem [shape: bf16[3,128,512], index: 0, kind: input, shape index: {}]
  %s1 = inlined_call_operand.vmem [shape: bf16[3,128,128], index: 1, kind: input, shape index: {}]
  %s2 = inlined_call_operand.vmem [shape: bf16[3,128,128], index: 2, kind: input, shape index: {}]
  %s3 = inlined_call_operand.vmem [shape: bf16[3,128,128], index: 3, kind: input, shape index: {}]
  %s4 = inlined_call_operand.vmem [shape: f32[3,1,128], index: 4, kind: input, shape index: {}]
  %s5 = inlined_call_operand.vmem [shape: f32[3,1,128], index: 5, kind: input, shape index: {}]
  %s6 = inlined_call_operand.vmem [shape: f32[3,1,128], index: 6, kind: input, shape index: {}]
  %s7 = inlined_call_operand.vmem [shape: f32[16,8], index: 7, kind: input, shape index: {}]
  %s8 = inlined_call_operand.vmem [shape: f32[32,4], index: 8, kind: input, shape index: {}]
  %s9 = inlined_call_operand.vmem [shape: s32[48,1], index: 9, kind: input, shape index: {}]
  %s10 = inlined_call_operand.vmem [shape: s32[1,48], index: 10, kind: input, shape index: {}]
  %s11 = inlined_call_operand.vmem [shape: s32[48,1], index: 11, kind: input, shape index: {}]
  %s12 = inlined_call_operand.vmem [shape: f32[8,128], index: 12, kind: input, shape index: {}]
  %s13 = inlined_call_operand.vmem [shape: f32[1,128], index: 13, kind: input, shape index: {}]
  %s14 = inlined_call_operand.vmem [shape: f32[4,128], index: 14, kind: input, shape index: {}]
  %s15 = inlined_call_operand.vmem [shape: f32[1,128], index: 15, kind: input, shape index: {}]
  %s16 = inlined_call_operand.vmem [shape: f32[256,512], index: 16, kind: input, shape index: {}]
  %s17 = inlined_call_operand.vmem [shape: f32[128,512], index: 17, kind: input, shape index: {}]
  %s18 = inlined_call_operand.vmem [shape: f32[1,512], index: 18, kind: input, shape index: {}]
  %s19 = inlined_call_operand.vmem [shape: f32[256,128], index: 19, kind: input, shape index: {}]
  %s20 = inlined_call_operand.vmem [shape: f32[1,128], index: 20, kind: input, shape index: {}]
  %s21 = inlined_call_operand.vmem [shape: f32[128,256], index: 21, kind: input, shape index: {}]
  %s22 = inlined_call_operand.vmem [shape: f32[1,256], index: 22, kind: input, shape index: {}]
  %s23 = inlined_call_operand.hbm [shape: f32[1,256], index: 23, kind: output, shape index: {}]
  %s24 = sld [smem:[#allocation0]]
  $region133: #{gnn_encoder_forward.1} parent=0
    _
  %s26 = ssub.s32 1, %s24
  %s27 = scalar_select 0, %s26, %s24
  $region1: #{gnn_encoder_forward.1} parent=0
    #allocation8 [shape = 'u8[1024]{0}', space=vmem, size = 0x400, scoped, tag = 'output window, operand 0, single buffered']
    #allocation9 [shape = 's32[2]{0}', space=sflag, size = 0x8, scoped, tag = 'scoped memory for gnn_encoder_forward.1']
    %28 = vsyncpa [#allocation9], 0
    loop: start=0, step=1, limit=5
    $region2: #{gnn_encoder_forward.1} parent=1 // loop_pre_header
      _
    $region3: #{gnn_encoder_forward.1} parent=1 // loop_header
      %s30 = sphi 0, %s34
      %p31 = scmp.ge.s32.totalorder %s30, 5
      %s40 = sphi 0, %s42
      %s43 = sphi 0, %s40
      %s44 = sphi 0, %s43
      %s60 = sphi 0, %s44
      %s66 = sphi 0, %s68
      %s69 = sphi 0, %s66
      %s70 = sphi 0, %s69
      %s86 = sphi 0, %s70
      %s92 = sphi 0, %s94
      %s95 = sphi 0, %s92
      %s96 = sphi 0, %s95
      %s112 = sphi 0, %s96
      %s118 = sphi 0, %s120
      %s121 = sphi 0, %s118
      %s122 = sphi 0, %s121
      %s138 = sphi 0, %s122
      %s144 = sphi 0, %s146
      %s147 = sphi 0, %s144
      %s148 = sphi 0, %s147
      %s164 = sphi 0, %s148
      %s170 = sphi 0, %s172
      %s173 = sphi 0, %s170
      %s174 = sphi 0, %s173
      %s190 = sphi 0, %s174
      %s196 = sphi 0, %s198
      %s199 = sphi 0, %s196
      %s200 = sphi 0, %s199
      %s216 = sphi 0, %s200
      %s220 = sphi 0, %s220
      %s222 = sphi 0, %s220
      %s223 = sphi 0, %s222
      %s237 = sphi 0, %s223
      %s241 = sphi 0, %s241
      %s243 = sphi 0, %s241
      %s244 = sphi 0, %s243
      %s258 = sphi 0, %s244
      %s262 = sphi 0, %s262
      %s264 = sphi 0, %s262
      %s265 = sphi 0, %s264
      %s279 = sphi 0, %s265
      %s283 = sphi 0, %s283
      %s285 = sphi 0, %s283
      %s286 = sphi 0, %s285
      %s300 = sphi 0, %s286
      %s304 = sphi 0, %s304
      %s306 = sphi 0, %s304
      %s307 = sphi 0, %s306
      %s321 = sphi 0, %s307
      %s325 = sphi 0, %s325
      %s327 = sphi 0, %s325
      %s328 = sphi 0, %s327
      %s342 = sphi 0, %s328
      %s346 = sphi 0, %s346
      %s348 = sphi 0, %s346
      %s349 = sphi 0, %s348
      %s363 = sphi 0, %s349
      %s367 = sphi 0, %s367
      %s369 = sphi 0, %s367
      %s370 = sphi 0, %s369
      %s384 = sphi 0, %s370
      %s388 = sphi 0, %s388
      %s390 = sphi 0, %s388
      %s391 = sphi 0, %s390
      %s405 = sphi 0, %s391
      %s409 = sphi 0, %s409
      %s411 = sphi 0, %s409
      %s412 = sphi 0, %s411
      %s426 = sphi 0, %s412
      %s430 = sphi 0, %s430
      %s432 = sphi 0, %s430
      %s433 = sphi 0, %s432
      %s447 = sphi 0, %s433
      %s451 = sphi 0, %s451
      %s453 = sphi 0, %s451
      %s454 = sphi 0, %s453
      %s468 = sphi 0, %s454
      %s472 = sphi 0, %s472
      %s474 = sphi 0, %s472
      %s475 = sphi 0, %s474
      %s489 = sphi 0, %s475
      %s493 = sphi 0, %s493
      %s495 = sphi 0, %s493
      %s496 = sphi 0, %s495
      %s510 = sphi 0, %s496
      %s514 = sphi 0, %s514
      %s516 = sphi 0, %s514
      %s517 = sphi 0, %s516
      %s531 = sphi 0, %s517
      %s535 = sphi 0, %s535
      %s537 = sphi 0, %s535
      %s538 = sphi 0, %s537
      %s552 = sphi 0, %s538
      %s556 = sphi 0, %s556
      %s558 = sphi 0, %s556
      %s559 = sphi 0, %s558
      %s573 = sphi 0, %s559
    $region4: #{gnn_encoder_forward.1} parent=1 // loop_header_branch
      %33 = sbr.rel (%p31) target = $region8
    $region5: #{gnn_encoder_forward.1} parent=1 // loop_body
      %s35 = ssub.s32 %s30, 1
      %s36 = ssub.s32 %s30, 2
      %s37 = sadd.s32 %s30, 1
      %s38 = ssub.s32 %s30, %s37
      %p39 = scmp.eq.s32.totalorder %s38, 0
      %s41 = sadd.s32 %s40, 1
      %s42 = scalar_select %p39, %s40, %s41
      %p45 = pneg %p39
      %p46 = scmp.eq.s32.totalorder %s30, 2
      %p47 = por %p45, %p46
      %p48 = scmp.ne.s32.totalorder %s40, %s43
      %p49 = scmp.eq.s32.totalorder %s30, 0
      %p50 = por %p48, %p49
      %p51 = scmp.ne.s32.totalorder %s40, %s43
      %p52 = scmp.eq.s32.totalorder %s35, 2
      %p53 = por %p51, %p52
      %p54 = scmp.ne.s32.totalorder %s43, %s44
      %p55 = scmp.eq.s32.totalorder %s35, 0
      %p56 = por %p54, %p55
      %p57 = scmp.ne.s32.totalorder %s43, %s44
      %p58 = scmp.eq.s32.totalorder %s36, 2
      %p59 = por %p57, %p58
      %p61 = scmp.ne.s32.totalorder %s44, %s60
      %p62 = scmp.eq.s32.totalorder %s36, 0
      %p63 = por %p61, %p62
      %s64 = ssub.s32 %s30, %s37
      %p65 = scmp.eq.s32.totalorder %s64, 0
      %s67 = sadd.s32 %s66, 1
      %s68 = scalar_select %p65, %s66, %s67
      %p71 = pneg %p65
      %p72 = scmp.eq.s32.totalorder %s30, 2
      %p73 = por %p71, %p72
      %p74 = scmp.ne.s32.totalorder %s66, %s69
      %p75 = scmp.eq.s32.totalorder %s30, 0
      %p76 = por %p74, %p75
      %p77 = scmp.ne.s32.totalorder %s66, %s69
      %p78 = scmp.eq.s32.totalorder %s35, 2
      %p79 = por %p77, %p78
      %p80 = scmp.ne.s32.totalorder %s69, %s70
      %p81 = scmp.eq.s32.totalorder %s35, 0
      %p82 = por %p80, %p81
      %p83 = scmp.ne.s32.totalorder %s69, %s70
      %p84 = scmp.eq.s32.totalorder %s36, 2
      %p85 = por %p83, %p84
      %p87 = scmp.ne.s32.totalorder %s70, %s86
      %p88 = scmp.eq.s32.totalorder %s36, 0
      %p89 = por %p87, %p88
      %s90 = ssub.s32 %s30, %s37
      %p91 = scmp.eq.s32.totalorder %s90, 0
      %s93 = sadd.s32 %s92, 1
      %s94 = scalar_select %p91, %s92, %s93
      %p97 = pneg %p91
      %p98 = scmp.eq.s32.totalorder %s30, 2
      %p99 = por %p97, %p98
      %p100 = scmp.ne.s32.totalorder %s92, %s95
      %p101 = scmp.eq.s32.totalorder %s30, 0
      %p102 = por %p100, %p101
      %p103 = scmp.ne.s32.totalorder %s92, %s95
      %p104 = scmp.eq.s32.totalorder %s35, 2
      %p105 = por %p103, %p104
      %p106 = scmp.ne.s32.totalorder %s95, %s96
      %p107 = scmp.eq.s32.totalorder %s35, 0
      %p108 = por %p106, %p107
      %p109 = scmp.ne.s32.totalorder %s95, %s96
      %p110 = scmp.eq.s32.totalorder %s36, 2
      %p111 = por %p109, %p110
      %p113 = scmp.ne.s32.totalorder %s96, %s112
      %p114 = scmp.eq.s32.totalorder %s36, 0
      %p115 = por %p113, %p114
      %s116 = ssub.s32 %s30, %s37
      %p117 = scmp.eq.s32.totalorder %s116, 0
      %s119 = sadd.s32 %s118, 1
      %s120 = scalar_select %p117, %s118, %s119
      %p123 = pneg %p117
      %p124 = scmp.eq.s32.totalorder %s30, 2
      %p125 = por %p123, %p124
      %p126 = scmp.ne.s32.totalorder %s118, %s121
      %p127 = scmp.eq.s32.totalorder %s30, 0
      %p128 = por %p126, %p127
      %p129 = scmp.ne.s32.totalorder %s118, %s121
      %p130 = scmp.eq.s32.totalorder %s35, 2
      %p131 = por %p129, %p130
      %p132 = scmp.ne.s32.totalorder %s121, %s122
      %p133 = scmp.eq.s32.totalorder %s35, 0
      %p134 = por %p132, %p133
      %p135 = scmp.ne.s32.totalorder %s121, %s122
      %p136 = scmp.eq.s32.totalorder %s36, 2
      %p137 = por %p135, %p136
      %p139 = scmp.ne.s32.totalorder %s122, %s138
      %p140 = scmp.eq.s32.totalorder %s36, 0
      %p141 = por %p139, %p140
      %s142 = ssub.s32 %s30, %s37
      %p143 = scmp.eq.s32.totalorder %s142, 0
      %s145 = sadd.s32 %s144, 1
      %s146 = scalar_select %p143, %s144, %s145
      %p149 = pneg %p143
      %p150 = scmp.eq.s32.totalorder %s30, 2
      %p151 = por %p149, %p150
      %p152 = scmp.ne.s32.totalorder %s144, %s147
      %p153 = scmp.eq.s32.totalorder %s30, 0
      %p154 = por %p152, %p153
      %p155 = scmp.ne.s32.totalorder %s144, %s147
      %p156 = scmp.eq.s32.totalorder %s35, 2
      %p157 = por %p155, %p156
      %p158 = scmp.ne.s32.totalorder %s147, %s148
      %p159 = scmp.eq.s32.totalorder %s35, 0
      %p160 = por %p158, %p159
      %p161 = scmp.ne.s32.totalorder %s147, %s148
      %p162 = scmp.eq.s32.totalorder %s36, 2
      %p163 = por %p161, %p162
      %p165 = scmp.ne.s32.totalorder %s148, %s164
      %p166 = scmp.eq.s32.totalorder %s36, 0
      %p167 = por %p165, %p166
      %s168 = ssub.s32 %s30, %s37
      %p169 = scmp.eq.s32.totalorder %s168, 0
      %s171 = sadd.s32 %s170, 1
      %s172 = scalar_select %p169, %s170, %s171
      %p175 = pneg %p169
      %p176 = scmp.eq.s32.totalorder %s30, 2
      %p177 = por %p175, %p176
      %p178 = scmp.ne.s32.totalorder %s170, %s173
      %p179 = scmp.eq.s32.totalorder %s30, 0
      %p180 = por %p178, %p179
      %p181 = scmp.ne.s32.totalorder %s170, %s173
      %p182 = scmp.eq.s32.totalorder %s35, 2
      %p183 = por %p181, %p182
      %p184 = scmp.ne.s32.totalorder %s173, %s174
      %p185 = scmp.eq.s32.totalorder %s35, 0
      %p186 = por %p184, %p185
      %p187 = scmp.ne.s32.totalorder %s173, %s174
      %p188 = scmp.eq.s32.totalorder %s36, 2
      %p189 = por %p187, %p188
      %p191 = scmp.ne.s32.totalorder %s174, %s190
      %p192 = scmp.eq.s32.totalorder %s36, 0
      %p193 = por %p191, %p192
      %s194 = ssub.s32 %s30, %s37
      %p195 = scmp.eq.s32.totalorder %s194, 0
      %s197 = sadd.s32 %s196, 1
      %s198 = scalar_select %p195, %s196, %s197
      %p201 = pneg %p195
      %p202 = scmp.eq.s32.totalorder %s30, 2
      %p203 = por %p201, %p202
      %p204 = scmp.ne.s32.totalorder %s196, %s199
      %p205 = scmp.eq.s32.totalorder %s30, 0
      %p206 = por %p204, %p205
      %p207 = scmp.ne.s32.totalorder %s196, %s199
      %p208 = scmp.eq.s32.totalorder %s35, 2
      %p209 = por %p207, %p208
      %p210 = scmp.ne.s32.totalorder %s199, %s200
      %p211 = scmp.eq.s32.totalorder %s35, 0
      %p212 = por %p210, %p211
      %p213 = scmp.ne.s32.totalorder %s199, %s200
      %p214 = scmp.eq.s32.totalorder %s36, 2
      %p215 = por %p213, %p214
      %p217 = scmp.ne.s32.totalorder %s200, %s216
      %p218 = scmp.eq.s32.totalorder %s36, 0
      %p219 = por %p217, %p218
      %s221 = sadd.s32 %s220, 1
      %p224 = scmp.eq.s32.totalorder %s30, 2
      %p225 = scmp.ne.s32.totalorder %s220, %s222
      %p226 = scmp.eq.s32.totalorder %s30, 0
      %p227 = por %p225, %p226
      %p228 = scmp.ne.s32.totalorder %s220, %s222
      %p229 = scmp.eq.s32.totalorder %s35, 2
      %p230 = por %p228, %p229
      %p231 = scmp.ne.s32.totalorder %s222, %s223
      %p232 = scmp.eq.s32.totalorder %s35, 0
      %p233 = por %p231, %p232
      %p234 = scmp.ne.s32.totalorder %s222, %s223
      %p235 = scmp.eq.s32.totalorder %s36, 2
      %p236 = por %p234, %p235
      %p238 = scmp.ne.s32.totalorder %s223, %s237
      %p239 = scmp.eq.s32.totalorder %s36, 0
      %p240 = por %p238, %p239
      %s242 = sadd.s32 %s241, 1
      %p245 = scmp.eq.s32.totalorder %s30, 2
      %p246 = scmp.ne.s32.totalorder %s241, %s243
      %p247 = scmp.eq.s32.totalorder %s30, 0
      %p248 = por %p246, %p247
      %p249 = scmp.ne.s32.totalorder %s241, %s243
      %p250 = scmp.eq.s32.totalorder %s35, 2
      %p251 = por %p249, %p250
      %p252 = scmp.ne.s32.totalorder %s243, %s244
      %p253 = scmp.eq.s32.totalorder %s35, 0
      %p254 = por %p252, %p253
      %p255 = scmp.ne.s32.totalorder %s243, %s244
      %p256 = scmp.eq.s32.totalorder %s36, 2
      %p257 = por %p255, %p256
      %p259 = scmp.ne.s32.totalorder %s244, %s258
      %p260 = scmp.eq.s32.totalorder %s36, 0
      %p261 = por %p259, %p260
      %s263 = sadd.s32 %s262, 1
      %p266 = scmp.eq.s32.totalorder %s30, 2
      %p267 = scmp.ne.s32.totalorder %s262, %s264
      %p268 = scmp.eq.s32.totalorder %s30, 0
      %p269 = por %p267, %p268
      %p270 = scmp.ne.s32.totalorder %s262, %s264
      %p271 = scmp.eq.s32.totalorder %s35, 2
      %p272 = por %p270, %p271
      %p273 = scmp.ne.s32.totalorder %s264, %s265
      %p274 = scmp.eq.s32.totalorder %s35, 0
      %p275 = por %p273, %p274
      %p276 = scmp.ne.s32.totalorder %s264, %s265
      %p277 = scmp.eq.s32.totalorder %s36, 2
      %p278 = por %p276, %p277
      %p280 = scmp.ne.s32.totalorder %s265, %s279
      %p281 = scmp.eq.s32.totalorder %s36, 0
      %p282 = por %p280, %p281
      %s284 = sadd.s32 %s283, 1
      %p287 = scmp.eq.s32.totalorder %s30, 2
      %p288 = scmp.ne.s32.totalorder %s283, %s285
      %p289 = scmp.eq.s32.totalorder %s30, 0
      %p290 = por %p288, %p289
      %p291 = scmp.ne.s32.totalorder %s283, %s285
      %p292 = scmp.eq.s32.totalorder %s35, 2
      %p293 = por %p291, %p292
      %p294 = scmp.ne.s32.totalorder %s285, %s286
      %p295 = scmp.eq.s32.totalorder %s35, 0
      %p296 = por %p294, %p295
      %p297 = scmp.ne.s32.totalorder %s285, %s286
      %p298 = scmp.eq.s32.totalorder %s36, 2
      %p299 = por %p297, %p298
      %p301 = scmp.ne.s32.totalorder %s286, %s300
      %p302 = scmp.eq.s32.totalorder %s36, 0
      %p303 = por %p301, %p302
      %s305 = sadd.s32 %s304, 1
      %p308 = scmp.eq.s32.totalorder %s30, 2
      %p309 = scmp.ne.s32.totalorder %s304, %s306
      %p310 = scmp.eq.s32.totalorder %s30, 0
      %p311 = por %p309, %p310
      %p312 = scmp.ne.s32.totalorder %s304, %s306
      %p313 = scmp.eq.s32.totalorder %s35, 2
      %p314 = por %p312, %p313
      %p315 = scmp.ne.s32.totalorder %s306, %s307
      %p316 = scmp.eq.s32.totalorder %s35, 0
      %p317 = por %p315, %p316
      %p318 = scmp.ne.s32.totalorder %s306, %s307
      %p319 = scmp.eq.s32.totalorder %s36, 2
      %p320 = por %p318, %p319
      %p322 = scmp.ne.s32.totalorder %s307, %s321
      %p323 = scmp.eq.s32.totalorder %s36, 0
      %p324 = por %p322, %p323
      %s326 = sadd.s32 %s325, 1
      %p329 = scmp.eq.s32.totalorder %s30, 2
      %p330 = scmp.ne.s32.totalorder %s325, %s327
      %p331 = scmp.eq.s32.totalorder %s30, 0
      %p332 = por %p330, %p331
      %p333 = scmp.ne.s32.totalorder %s325, %s327
      %p334 = scmp.eq.s32.totalorder %s35, 2
      %p335 = por %p333, %p334
      %p336 = scmp.ne.s32.totalorder %s327, %s328
      %p337 = scmp.eq.s32.totalorder %s35, 0
      %p338 = por %p336, %p337
      %p339 = scmp.ne.s32.totalorder %s327, %s328
      %p340 = scmp.eq.s32.totalorder %s36, 2
      %p341 = por %p339, %p340
      %p343 = scmp.ne.s32.totalorder %s328, %s342
      %p344 = scmp.eq.s32.totalorder %s36, 0
      %p345 = por %p343, %p344
      %s347 = sadd.s32 %s346, 1
      %p350 = scmp.eq.s32.totalorder %s30, 2
      %p351 = scmp.ne.s32.totalorder %s346, %s348
      %p352 = scmp.eq.s32.totalorder %s30, 0
      %p353 = por %p351, %p352
      %p354 = scmp.ne.s32.totalorder %s346, %s348
      %p355 = scmp.eq.s32.totalorder %s35, 2
      %p356 = por %p354, %p355
      %p357 = scmp.ne.s32.totalorder %s348, %s349
      %p358 = scmp.eq.s32.totalorder %s35, 0
      %p359 = por %p357, %p358
      %p360 = scmp.ne.s32.totalorder %s348, %s349
      %p361 = scmp.eq.s32.totalorder %s36, 2
      %p362 = por %p360, %p361
      %p364 = scmp.ne.s32.totalorder %s349, %s363
      %p365 = scmp.eq.s32.totalorder %s36, 0
      %p366 = por %p364, %p365
      %s368 = sadd.s32 %s367, 1
      %p371 = scmp.eq.s32.totalorder %s30, 2
      %p372 = scmp.ne.s32.totalorder %s367, %s369
      %p373 = scmp.eq.s32.totalorder %s30, 0
      %p374 = por %p372, %p373
      %p375 = scmp.ne.s32.totalorder %s367, %s369
      %p376 = scmp.eq.s32.totalorder %s35, 2
      %p377 = por %p375, %p376
      %p378 = scmp.ne.s32.totalorder %s369, %s370
      %p379 = scmp.eq.s32.totalorder %s35, 0
      %p380 = por %p378, %p379
      %p381 = scmp.ne.s32.totalorder %s369, %s370
      %p382 = scmp.eq.s32.totalorder %s36, 2
      %p383 = por %p381, %p382
      %p385 = scmp.ne.s32.totalorder %s370, %s384
      %p386 = scmp.eq.s32.totalorder %s36, 0
      %p387 = por %p385, %p386
      %s389 = sadd.s32 %s388, 1
      %p392 = scmp.eq.s32.totalorder %s30, 2
      %p393 = scmp.ne.s32.totalorder %s388, %s390
      %p394 = scmp.eq.s32.totalorder %s30, 0
      %p395 = por %p393, %p394
      %p396 = scmp.ne.s32.totalorder %s388, %s390
      %p397 = scmp.eq.s32.totalorder %s35, 2
      %p398 = por %p396, %p397
      %p399 = scmp.ne.s32.totalorder %s390, %s391
      %p400 = scmp.eq.s32.totalorder %s35, 0
      %p401 = por %p399, %p400
      %p402 = scmp.ne.s32.totalorder %s390, %s391
      %p403 = scmp.eq.s32.totalorder %s36, 2
      %p404 = por %p402, %p403
      %p406 = scmp.ne.s32.totalorder %s391, %s405
      %p407 = scmp.eq.s32.totalorder %s36, 0
      %p408 = por %p406, %p407
      %s410 = sadd.s32 %s409, 1
      %p413 = scmp.eq.s32.totalorder %s30, 2
      %p414 = scmp.ne.s32.totalorder %s409, %s411
      %p415 = scmp.eq.s32.totalorder %s30, 0
      %p416 = por %p414, %p415
      %p417 = scmp.ne.s32.totalorder %s409, %s411
      %p418 = scmp.eq.s32.totalorder %s35, 2
      %p419 = por %p417, %p418
      %p420 = scmp.ne.s32.totalorder %s411, %s412
      %p421 = scmp.eq.s32.totalorder %s35, 0
      %p422 = por %p420, %p421
      %p423 = scmp.ne.s32.totalorder %s411, %s412
      %p424 = scmp.eq.s32.totalorder %s36, 2
      %p425 = por %p423, %p424
      %p427 = scmp.ne.s32.totalorder %s412, %s426
      %p428 = scmp.eq.s32.totalorder %s36, 0
      %p429 = por %p427, %p428
      %s431 = sadd.s32 %s430, 1
      %p434 = scmp.eq.s32.totalorder %s30, 2
      %p435 = scmp.ne.s32.totalorder %s430, %s432
      %p436 = scmp.eq.s32.totalorder %s30, 0
      %p437 = por %p435, %p436
      %p438 = scmp.ne.s32.totalorder %s430, %s432
      %p439 = scmp.eq.s32.totalorder %s35, 2
      %p440 = por %p438, %p439
      %p441 = scmp.ne.s32.totalorder %s432, %s433
      %p442 = scmp.eq.s32.totalorder %s35, 0
      %p443 = por %p441, %p442
      %p444 = scmp.ne.s32.totalorder %s432, %s433
      %p445 = scmp.eq.s32.totalorder %s36, 2
      %p446 = por %p444, %p445
      %p448 = scmp.ne.s32.totalorder %s433, %s447
      %p449 = scmp.eq.s32.totalorder %s36, 0
      %p450 = por %p448, %p449
      %s452 = sadd.s32 %s451, 1
      %p455 = scmp.eq.s32.totalorder %s30, 2
      %p456 = scmp.ne.s32.totalorder %s451, %s453
      %p457 = scmp.eq.s32.totalorder %s30, 0
      %p458 = por %p456, %p457
      %p459 = scmp.ne.s32.totalorder %s451, %s453
      %p460 = scmp.eq.s32.totalorder %s35, 2
      %p461 = por %p459, %p460
      %p462 = scmp.ne.s32.totalorder %s453, %s454
      %p463 = scmp.eq.s32.totalorder %s35, 0
      %p464 = por %p462, %p463
      %p465 = scmp.ne.s32.totalorder %s453, %s454
      %p466 = scmp.eq.s32.totalorder %s36, 2
      %p467 = por %p465, %p466
      %p469 = scmp.ne.s32.totalorder %s454, %s468
      %p470 = scmp.eq.s32.totalorder %s36, 0
      %p471 = por %p469, %p470
      %s473 = sadd.s32 %s472, 1
      %p476 = scmp.eq.s32.totalorder %s30, 2
      %p477 = scmp.ne.s32.totalorder %s472, %s474
      %p478 = scmp.eq.s32.totalorder %s30, 0
      %p479 = por %p477, %p478
      %p480 = scmp.ne.s32.totalorder %s472, %s474
      %p481 = scmp.eq.s32.totalorder %s35, 2
      %p482 = por %p480, %p481
      %p483 = scmp.ne.s32.totalorder %s474, %s475
      %p484 = scmp.eq.s32.totalorder %s35, 0
      %p485 = por %p483, %p484
      %p486 = scmp.ne.s32.totalorder %s474, %s475
      %p487 = scmp.eq.s32.totalorder %s36, 2
      %p488 = por %p486, %p487
      %p490 = scmp.ne.s32.totalorder %s475, %s489
      %p491 = scmp.eq.s32.totalorder %s36, 0
      %p492 = por %p490, %p491
      %s494 = sadd.s32 %s493, 1
      %p497 = scmp.eq.s32.totalorder %s30, 2
      %p498 = scmp.ne.s32.totalorder %s493, %s495
      %p499 = scmp.eq.s32.totalorder %s30, 0
      %p500 = por %p498, %p499
      %p501 = scmp.ne.s32.totalorder %s493, %s495
      %p502 = scmp.eq.s32.totalorder %s35, 2
      %p503 = por %p501, %p502
      %p504 = scmp.ne.s32.totalorder %s495, %s496
      %p505 = scmp.eq.s32.totalorder %s35, 0
      %p506 = por %p504, %p505
      %p507 = scmp.ne.s32.totalorder %s495, %s496
      %p508 = scmp.eq.s32.totalorder %s36, 2
      %p509 = por %p507, %p508
      %p511 = scmp.ne.s32.totalorder %s496, %s510
      %p512 = scmp.eq.s32.totalorder %s36, 0
      %p513 = por %p511, %p512
      %s515 = sadd.s32 %s514, 1
      %p518 = scmp.eq.s32.totalorder %s30, 2
      %p519 = scmp.ne.s32.totalorder %s514, %s516
      %p520 = scmp.eq.s32.totalorder %s30, 0
      %p521 = por %p519, %p520
      %p522 = scmp.ne.s32.totalorder %s514, %s516
      %p523 = scmp.eq.s32.totalorder %s35, 2
      %p524 = por %p522, %p523
      %p525 = scmp.ne.s32.totalorder %s516, %s517
      %p526 = scmp.eq.s32.totalorder %s35, 0
      %p527 = por %p525, %p526
      %p528 = scmp.ne.s32.totalorder %s516, %s517
      %p529 = scmp.eq.s32.totalorder %s36, 2
      %p530 = por %p528, %p529
      %p532 = scmp.ne.s32.totalorder %s517, %s531
      %p533 = scmp.eq.s32.totalorder %s36, 0
      %p534 = por %p532, %p533
      %s536 = sadd.s32 %s535, 1
      %p539 = scmp.eq.s32.totalorder %s30, 2
      %p540 = scmp.ne.s32.totalorder %s535, %s537
      %p541 = scmp.eq.s32.totalorder %s30, 0
      %p542 = por %p540, %p541
      %p543 = scmp.ne.s32.totalorder %s535, %s537
      %p544 = scmp.eq.s32.totalorder %s35, 2
      %p545 = por %p543, %p544
      %p546 = scmp.ne.s32.totalorder %s537, %s538
      %p547 = scmp.eq.s32.totalorder %s35, 0
      %p548 = por %p546, %p547
      %p549 = scmp.ne.s32.totalorder %s537, %s538
      %p550 = scmp.eq.s32.totalorder %s36, 2
      %p551 = por %p549, %p550
      %p553 = scmp.ne.s32.totalorder %s538, %s552
      %p554 = scmp.eq.s32.totalorder %s36, 0
      %p555 = por %p553, %p554
      %s557 = sadd.s32 %s556, 1
      %p560 = scmp.eq.s32.totalorder %s30, 2
      %p561 = scmp.ne.s32.totalorder %s556, %s558
      %p562 = scmp.eq.s32.totalorder %s30, 0
      %p563 = por %p561, %p562
      %p564 = scmp.ne.s32.totalorder %s556, %s558
      %p565 = scmp.eq.s32.totalorder %s35, 2
      %p566 = por %p564, %p565
      %p567 = scmp.ne.s32.totalorder %s558, %s559
      %p568 = scmp.eq.s32.totalorder %s35, 0
      %p569 = por %p567, %p568
      %p570 = scmp.ne.s32.totalorder %s558, %s559
      %p571 = scmp.eq.s32.totalorder %s36, 2
      %p572 = por %p570, %p571
      %p574 = scmp.ne.s32.totalorder %s559, %s573
      %p575 = scmp.eq.s32.totalorder %s36, 0
      %p576 = por %p574, %p575
      %p577 = scmp.le.s32.totalorder 1, %s30
      %p578 = scmp.lt.s32.totalorder %s30, 4
      %p579 = pnand %p577, %p578
      %p580 = pneg %p579
      // Predicated region
      $region9: #{gnn_encoder_forward.1} parent=5 // pred_check
        _
      $region10: #{gnn_encoder_forward.1} parent=5 // pred_check_branch
        %582 = sbr.rel (%p579) target = $region12
      $region11: #{gnn_encoder_forward.1} parent=5 // pred_region
        %s583 = ssub.s32 %s30, 1
        // Predicated region
        $region13: #{gnn_encoder_forward.1} parent=11 // pred_check
          %p584 = pneg %p233
        $region14: #{gnn_encoder_forward.1} parent=11 // pred_check_branch
          %586 = sbr.rel (%p584) target = $region16
        $region15: #{gnn_encoder_forward.1} parent=11 // pred_region
          _
        $region16: #{gnn_encoder_forward.1} parent=11 // pred_fallthru
          _
        // Predicated region
        $region17: #{gnn_encoder_forward.1} parent=11 // pred_check
          %p587 = pneg %p254
        $region18: #{gnn_encoder_forward.1} parent=11 // pred_check_branch
          %589 = sbr.rel (%p587) target = $region20
        $region19: #{gnn_encoder_forward.1} parent=11 // pred_region
          _
        $region20: #{gnn_encoder_forward.1} parent=11 // pred_fallthru
          _
        // Predicated region
        $region21: #{gnn_encoder_forward.1} parent=11 // pred_check
          %p590 = pneg %p275
        $region22: #{gnn_encoder_forward.1} parent=11 // pred_check_branch
          %592 = sbr.rel (%p590) target = $region24
        $region23: #{gnn_encoder_forward.1} parent=11 // pred_region
          _
        $region24: #{gnn_encoder_forward.1} parent=11 // pred_fallthru
          _
        // Predicated region
        $region25: #{gnn_encoder_forward.1} parent=11 // pred_check
          %p593 = pneg %p296
        $region26: #{gnn_encoder_forward.1} parent=11 // pred_check_branch
          %595 = sbr.rel (%p593) target = $region28
        $region27: #{gnn_encoder_forward.1} parent=11 // pred_region
          _
        $region28: #{gnn_encoder_forward.1} parent=11 // pred_fallthru
          _
        // Predicated region
        $region29: #{gnn_encoder_forward.1} parent=11 // pred_check
          %p596 = pneg %p317
        $region30: #{gnn_encoder_forward.1} parent=11 // pred_check_branch
          %598 = sbr.rel (%p596) target = $region32
        $region31: #{gnn_encoder_forward.1} parent=11 // pred_region
          _
        $region32: #{gnn_encoder_forward.1} parent=11 // pred_fallthru
          _
        // Predicated region
        $region33: #{gnn_encoder_forward.1} parent=11 // pred_check
          %p599 = pneg %p338
        $region34: #{gnn_encoder_forward.1} parent=11 // pred_check_branch
          %601 = sbr.rel (%p599) target = $region36
        $region35: #{gnn_encoder_forward.1} parent=11 // pred_region
          _
        $region36: #{gnn_encoder_forward.1} parent=11 // pred_fallthru
          _
        // Predicated region
        $region37: #{gnn_encoder_forward.1} parent=11 // pred_check
          %p602 = pneg %p359
        $region38: #{gnn_encoder_forward.1} parent=11 // pred_check_branch
          %604 = sbr.rel (%p602) target = $region40
        $region39: #{gnn_encoder_forward.1} parent=11 // pred_region
          _
        $region40: #{gnn_encoder_forward.1} parent=11 // pred_fallthru
          _
        // Predicated region
        $region41: #{gnn_encoder_forward.1} parent=11 // pred_check
          %p605 = pneg %p380
        $region42: #{gnn_encoder_forward.1} parent=11 // pred_check_branch
          %607 = sbr.rel (%p605) target = $region44
        $region43: #{gnn_encoder_forward.1} parent=11 // pred_region
          _
        $region44: #{gnn_encoder_forward.1} parent=11 // pred_fallthru
          _
        // Predicated region
        $region45: #{gnn_encoder_forward.1} parent=11 // pred_check
          %p608 = pneg %p401
        $region46: #{gnn_encoder_forward.1} parent=11 // pred_check_branch
          %610 = sbr.rel (%p608) target = $region48
        $region47: #{gnn_encoder_forward.1} parent=11 // pred_region
          _
        $region48: #{gnn_encoder_forward.1} parent=11 // pred_fallthru
          _
        // Predicated region
        $region49: #{gnn_encoder_forward.1} parent=11 // pred_check
          %p611 = pneg %p422
        $region50: #{gnn_encoder_forward.1} parent=11 // pred_check_branch
          %613 = sbr.rel (%p611) target = $region52
        $region51: #{gnn_encoder_forward.1} parent=11 // pred_region
          _
        $region52: #{gnn_encoder_forward.1} parent=11 // pred_fallthru
          _
        // Predicated region
        $region53: #{gnn_encoder_forward.1} parent=11 // pred_check
          %p614 = pneg %p443
        $region54: #{gnn_encoder_forward.1} parent=11 // pred_check_branch
          %616 = sbr.rel (%p614) target = $region56
        $region55: #{gnn_encoder_forward.1} parent=11 // pred_region
          _
        $region56: #{gnn_encoder_forward.1} parent=11 // pred_fallthru
          _
        // Predicated region
        $region57: #{gnn_encoder_forward.1} parent=11 // pred_check
          %p617 = pneg %p464
        $region58: #{gnn_encoder_forward.1} parent=11 // pred_check_branch
          %619 = sbr.rel (%p617) target = $region60
        $region59: #{gnn_encoder_forward.1} parent=11 // pred_region
          _
        $region60: #{gnn_encoder_forward.1} parent=11 // pred_fallthru
          _
        // Predicated region
        $region61: #{gnn_encoder_forward.1} parent=11 // pred_check
          %p620 = pneg %p485
        $region62: #{gnn_encoder_forward.1} parent=11 // pred_check_branch
          %622 = sbr.rel (%p620) target = $region64
        $region63: #{gnn_encoder_forward.1} parent=11 // pred_region
          _
        $region64: #{gnn_encoder_forward.1} parent=11 // pred_fallthru
          _
        // Predicated region
        $region65: #{gnn_encoder_forward.1} parent=11 // pred_check
          %p623 = pneg %p506
        $region66: #{gnn_encoder_forward.1} parent=11 // pred_check_branch
          %625 = sbr.rel (%p623) target = $region68
        $region67: #{gnn_encoder_forward.1} parent=11 // pred_region
          _
        $region68: #{gnn_encoder_forward.1} parent=11 // pred_fallthru
          _
        // Predicated region
        $region69: #{gnn_encoder_forward.1} parent=11 // pred_check
          %p626 = pneg %p527
        $region70: #{gnn_encoder_forward.1} parent=11 // pred_check_branch
          %628 = sbr.rel (%p626) target = $region72
        $region71: #{gnn_encoder_forward.1} parent=11 // pred_region
          _
        $region72: #{gnn_encoder_forward.1} parent=11 // pred_fallthru
          _
        // Predicated region
        $region73: #{gnn_encoder_forward.1} parent=11 // pred_check
          %p629 = pneg %p548
        $region74: #{gnn_encoder_forward.1} parent=11 // pred_check_branch
          %631 = sbr.rel (%p629) target = $region76
        $region75: #{gnn_encoder_forward.1} parent=11 // pred_region
          _
        $region76: #{gnn_encoder_forward.1} parent=11 // pred_fallthru
          _
      $region12: #{gnn_encoder_forward.1} parent=5 // pred_fallthru
        _
      %p632 = scmp.lt.s32.totalorder %s30, 3
      // Predicated region
      $region77: #{gnn_encoder_forward.1} parent=5 // pred_check
        %p633 = pneg %p632
      $region78: #{gnn_encoder_forward.1} parent=5 // pred_check_branch
        %635 = sbr.rel (%p633) target = $region80
      $region79: #{gnn_encoder_forward.1} parent=5 // pred_region
        // Predicated region
        $region81: #{gnn_encoder_forward.1} parent=79 // pred_check
          %p636 = pneg %p50
        $region82: #{gnn_encoder_forward.1} parent=79 // pred_check_branch
          %638 = sbr.rel (%p636) target = $region84
        $region83: #{gnn_encoder_forward.1} parent=79 // pred_region
          %p639 = scmp.lt.s32.totalorder %s30, 2
          %s640 = scalar_select %p639, %s30, 2
          %s641 = smul.addr %s640, 64
          %s642 = smul.addr %s641, 4
          %s643 = scalar_lea.vmem %s0, %s642
        $region84: #{gnn_encoder_forward.1} parent=79 // pred_fallthru
          _
        // Predicated region
        $region85: #{gnn_encoder_forward.1} parent=79 // pred_check
          %p644 = pneg %p76
        $region86: #{gnn_encoder_forward.1} parent=79 // pred_check_branch
          %646 = sbr.rel (%p644) target = $region88
        $region87: #{gnn_encoder_forward.1} parent=79 // pred_region
          %p647 = scmp.lt.s32.totalorder %s30, 2
          %s648 = scalar_select %p647, %s30, 2
          %s649 = smul.addr %s648, 16
          %s650 = smul.addr %s649, 4
          %s651 = scalar_lea.vmem %s1, %s650
        $region88: #{gnn_encoder_forward.1} parent=79 // pred_fallthru
          _
        // Predicated region
        $region89: #{gnn_encoder_forward.1} parent=79 // pred_check
          %p652 = pneg %p102
        $region90: #{gnn_encoder_forward.1} parent=79 // pred_check_branch
          %654 = sbr.rel (%p652) target = $region92
        $region91: #{gnn_encoder_forward.1} parent=79 // pred_region
          %p655 = scmp.lt.s32.totalorder %s30, 2
          %s656 = scalar_select %p655, %s30, 2
          %s657 = smul.addr %s656, 16
          %s658 = smul.addr %s657, 4
          %s659 = scalar_lea.vmem %s2, %s658
        $region92: #{gnn_encoder_forward.1} parent=79 // pred_fallthru
          _
        // Predicated region
        $region93: #{gnn_encoder_forward.1} parent=79 // pred_check
          %p660 = pneg %p128
        $region94: #{gnn_encoder_forward.1} parent=79 // pred_check_branch
          %662 = sbr.rel (%p660) target = $region96
        $region95: #{gnn_encoder_forward.1} parent=79 // pred_region
          %p663 = scmp.lt.s32.totalorder %s30, 2
          %s664 = scalar_select %p663, %s30, 2
          %s665 = smul.addr %s664, 16
          %s666 = smul.addr %s665, 4
          %s667 = scalar_lea.vmem %s3, %s666
        $region96: #{gnn_encoder_forward.1} parent=79 // pred_fallthru
          _
        // Predicated region
        $region97: #{gnn_encoder_forward.1} parent=79 // pred_check
          %p668 = pneg %p154
        $region98: #{gnn_encoder_forward.1} parent=79 // pred_check_branch
          %670 = sbr.rel (%p668) target = $region100
        $region99: #{gnn_encoder_forward.1} parent=79 // pred_region
          %p671 = scmp.lt.s32.totalorder %s30, 2
          %s672 = scalar_select %p671, %s30, 2
          %s673 = scalar_lea.vmem %s4, %s672
        $region100: #{gnn_encoder_forward.1} parent=79 // pred_fallthru
          _
        // Predicated region
        $region101: #{gnn_encoder_forward.1} parent=79 // pred_check
          %p674 = pneg %p180
        $region102: #{gnn_encoder_forward.1} parent=79 // pred_check_branch
          %676 = sbr.rel (%p674) target = $region104
        $region103: #{gnn_encoder_forward.1} parent=79 // pred_region
          %p677 = scmp.lt.s32.totalorder %s30, 2
          %s678 = scalar_select %p677, %s30, 2
          %s679 = scalar_lea.vmem %s5, %s678
        $region104: #{gnn_encoder_forward.1} parent=79 // pred_fallthru
          _
        // Predicated region
        $region105: #{gnn_encoder_forward.1} parent=79 // pred_check
          %p680 = pneg %p206
        $region106: #{gnn_encoder_forward.1} parent=79 // pred_check_branch
          %682 = sbr.rel (%p680) target = $region108
        $region107: #{gnn_encoder_forward.1} parent=79 // pred_region
          %p683 = scmp.lt.s32.totalorder %s30, 2
          %s684 = scalar_select %p683, %s30, 2
          %s685 = scalar_lea.vmem %s6, %s684
        $region108: #{gnn_encoder_forward.1} parent=79 // pred_fallthru
          _
      $region80: #{gnn_encoder_forward.1} parent=5 // pred_fallthru
        _
      %p686 = scmp.le.s32.totalorder 1, %s30
      %p687 = scmp.lt.s32.totalorder %s30, 4
      %p688 = pnand %p686, %p687
      %p689 = pneg %p688
      // Predicated region
      $region109: #{gnn_encoder_forward.1} parent=5 // pred_check
        _
      $region110: #{gnn_encoder_forward.1} parent=5 // pred_check_branch
        %691 = sbr.rel (%p688) target = $region112
      $region111: #{gnn_encoder_forward.1} parent=5 // pred_region
        %s692 = ssub.s32 %s30, 1
        %p693 = scmp.lt.s32.totalorder %s35, 2
        %s694 = scalar_select %p693, %s35, 2
        %s695 = smul.addr %s694, 64
        %s696 = smul.addr %s695, 4
        %s697 = scalar_lea.vmem %s0, %s696
        %p698 = pneg %p56
        %p699 = pneg %p53
        %p700 = scmp.lt.s32.totalorder %s35, 2
        %s701 = scalar_select %p700, %s35, 2
        %s702 = smul.addr %s701, 16
        %s703 = smul.addr %s702, 4
        %s704 = scalar_lea.vmem %s1, %s703
        %p705 = pneg %p82
        %p706 = pneg %p79
        %p707 = scmp.lt.s32.totalorder %s35, 2
        %s708 = scalar_select %p707, %s35, 2
        %s709 = smul.addr %s708, 16
        %s710 = smul.addr %s709, 4
        %s711 = scalar_lea.vmem %s2, %s710
        %p712 = pneg %p108
        %p713 = pneg %p105
        %p714 = scmp.lt.s32.totalorder %s35, 2
        %s715 = scalar_select %p714, %s35, 2
        %s716 = smul.addr %s715, 16
        %s717 = smul.addr %s716, 4
        %s718 = scalar_lea.vmem %s3, %s717
        %p719 = pneg %p134
        %p720 = pneg %p131
        %p721 = scmp.lt.s32.totalorder %s35, 2
        %s722 = scalar_select %p721, %s35, 2
        %s723 = scalar_lea.vmem %s4, %s722
        %p724 = pneg %p160
        %p725 = pneg %p157
        %p726 = scmp.lt.s32.totalorder %s35, 2
        %s727 = scalar_select %p726, %s35, 2
        %s728 = scalar_lea.vmem %s5, %s727
        %p729 = pneg %p186
        %p730 = pneg %p183
        %p731 = scmp.lt.s32.totalorder %s35, 2
        %s732 = scalar_select %p731, %s35, 2
        %s733 = scalar_lea.vmem %s6, %s732
        %p734 = pneg %p212
        %p735 = pneg %p209
        %p736 = pneg %p233
        %p737 = pneg %p230
        %p738 = pneg %p254
        %p739 = pneg %p251
        %p740 = pneg %p275
        %p741 = pneg %p272
        %p742 = pneg %p296
        %p743 = pneg %p293
        %p744 = pneg %p317
        %p745 = pneg %p314
        %p746 = pneg %p338
        %p747 = pneg %p335
        %p748 = pneg %p359
        %p749 = pneg %p356
        %p750 = pneg %p380
        %p751 = pneg %p377
        %p752 = pneg %p401
        %p753 = pneg %p398
        %p754 = pneg %p422
        %p755 = pneg %p419
        %p756 = pneg %p443
        %p757 = pneg %p440
        %p758 = pneg %p464
        %p759 = pneg %p461
        %p760 = pneg %p485
        %p761 = pneg %p482
        %p762 = pneg %p506
        %p763 = pneg %p503
        %p764 = pneg %p527
        %p765 = pneg %p524
        %p766 = pneg %p548
        %p767 = pneg %p545
        %p768 = pneg %p569
        %p769 = pneg %p566
        %p770 = scmp.lt.s32.totalorder %s35, 2
        %s771 = scalar_select %p770, %s35, 2
        %s772 = smul.addr %s771, 64
        %s773 = smul.addr %s772, 4
        %s774 = scalar_lea.vmem %s0, %s773
        %p775 = scmp.lt.s32.totalorder %s35, 2
        %s776 = scalar_select %p775, %s35, 2
        %s777 = smul.addr %s776, 16
        %s778 = smul.addr %s777, 4
        %s779 = scalar_lea.vmem %s1, %s778
        %p780 = scmp.lt.s32.totalorder %s35, 2
        %s781 = scalar_select %p780, %s35, 2
        %s782 = smul.addr %s781, 16
        %s783 = smul.addr %s782, 4
        %s784 = scalar_lea.vmem %s2, %s783
        %p785 = scmp.lt.s32.totalorder %s35, 2
        %s786 = scalar_select %p785, %s35, 2
        %s787 = smul.addr %s786, 16
        %s788 = smul.addr %s787, 4
        %s789 = scalar_lea.vmem %s3, %s788
        %p790 = scmp.lt.s32.totalorder %s35, 2
        %s791 = scalar_select %p790, %s35, 2
        %s792 = scalar_lea.vmem %s4, %s791
        %p793 = scmp.lt.s32.totalorder %s35, 2
        %s794 = scalar_select %p793, %s35, 2
        %s795 = scalar_lea.vmem %s5, %s794
        %p796 = scmp.lt.s32.totalorder %s35, 2
        %s797 = scalar_select %p796, %s35, 2
        %s798 = scalar_lea.vmem %s6, %s797
        %p800 = scmp.eq.s32.totalorder %s35, 0
        // Predicated region
        $region113: #{gnn_encoder_forward.1} parent=111 // pred_check
          %p801 = pneg %p800
        $region114: #{gnn_encoder_forward.1} parent=111 // pred_check_branch
          %803 = sbr.rel (%p801) target = $region116
        $region115: #{gnn_encoder_forward.1} parent=111 // pred_region
          %v804 = vld [vmem:[%s7] sm:$0xff]
          %v805 = vld [vmem:[%s7 + $0x8] sm:$0xff]
          %v806 = vld [vmem:[%s12] sm:$0xff]
          %v807 = vld [vmem:[%s13] sm:$0x1]
          %v809 = vlaneseq
          %v810 = vshrl.u32 %v809, 7
          %v811 = vsub.s32 0, %v810
          %v812 = vrot.slane %v807, %v811
          %vm814 = vcmask 64512
          %v816 = vsel %vm814, %v804, 0
          %v819 = vsel %vm814, %v805, 0
          %821 = vmatprep.subr.mxu0 0.0
          %822 = vmatpush1.msra.mxu0 %v806
          %823 = vmatprep.subr.mxu0 0.0
          %824 = vmatpush1.msra.mxu0 0.0
          %825 = vmatprep.subr.mxu0 0.0
          %826 = vmatpush1.msra.mxu0 0.0
          %827 = vmatprep.subr.mxu0 0.0
          %828 = vmatpush1.msra.mxu0 0.0
          %829 = vmatprep.subr.mxu0 0.0
          %830 = vmatpush1.msra.mxu0 0.0
          %831 = vmatprep.subr.mxu0 0.0
          %832 = vmatpush1.msra.mxu0 0.0
          %833 = vmatprep.subr.mxu0 0.0
          %834 = vmatpush1.msra.mxu0 0.0
          %835 = vmatprep.subr.mxu0 0.0
          %836 = vmatpush1.msra.mxu0 0.0
          %837 = vmatprep.subr.mxu0 0.0
          %838 = vmatpush1.msra.mxu0 0.0
          %839 = vmatprep.subr.mxu0 0.0
          %840 = vmatpush1.msra.mxu0 0.0
          %841 = vmatprep.subr.mxu0 0.0
          %842 = vmatpush1.msra.mxu0 0.0
          %843 = vmatprep.subr.mxu0 0.0
          %844 = vmatpush1.msra.mxu0 0.0
          %845 = vmatprep.subr.mxu0 0.0
          %846 = vmatpush1.msra.mxu0 0.0
          %847 = vmatprep.subr.mxu0 0.0
          %848 = vmatpush1.msra.mxu0 0.0
          %849 = vmatprep.subr.mxu0 0.0
          %850 = vmatpush1.msra.mxu0 0.0
          %851 = vmatprep.subr.mxu0 0.0
          %852 = vmatpush1.msra.mxu0 0.0
          %853 = vmatprep.subr.mxu0 0.0
          %854 = vmatpush1.msra.mxu0 0.0
          %855 = vmatprep.subr.mxu0 0.0
          %856 = vmatpush1.msra.mxu0 0.0
          %857 = vmatprep.subr.mxu0 0.0
          %858 = vmatpush1.msra.mxu0 0.0
          %859 = vmatprep.subr.mxu0 0.0
          %860 = vmatpush1.msra.mxu0 0.0
          %861 = vmatprep.subr.mxu0 0.0
          %862 = vmatpush1.msra.mxu0 0.0
          %863 = vmatprep.subr.mxu0 0.0
          %864 = vmatpush1.msra.mxu0 0.0
          %865 = vmatprep.subr.mxu0 0.0
          %866 = vmatpush1.msra.mxu0 0.0
          %867 = vmatprep.subr.mxu0 0.0
          %868 = vmatpush1.msra.mxu0 0.0
          %869 = vmatprep.subr.mxu0 0.0
          %870 = vmatpush1.msra.mxu0 0.0
          %871 = vmatprep.subr.mxu0 0.0
          %872 = vmatpush1.msra.mxu0 0.0
          %873 = vmatprep.subr.mxu0 0.0
          %874 = vmatpush1.msra.mxu0 0.0
          %875 = vmatprep.subr.mxu0 0.0
          %876 = vmatpush1.msra.mxu0 0.0
          %877 = vmatprep.subr.mxu0 0.0
          %878 = vmatpush1.msra.mxu0 0.0
          %879 = vmatprep.subr.mxu0 0.0
          %880 = vmatpush1.msra.mxu0 0.0
          %881 = vmatprep.subr.mxu0 0.0
          %882 = vmatpush1.msra.mxu0 0.0
          %883 = vmatprep.subr.mxu0 0.0
          %884 = vmatpush1.msra.mxu0 0.0
          %885 = vmatprep.mubr.f32.mxu0 0.0
          %886 = vmatmul.mubr.f32.gmra.mrb[0].mxu0 %v816
          %v887 = vpop.f32.mrb[0].mxu0
          %v888 = vadd.f32 %v812, %v887
          %v889 = vpop.f32.mrb[0].mxu0
          %890 = vmatprep.mubr.f32.mxu0 0.0
          %891 = vmatmul.mubr.f32.gmra.mrb[0].mxu0 %v819
          %v892 = vpop.f32.mrb[0].mxu0
          %v893 = vadd.f32 %v812, %v892
          %v894 = vpop.f32.mrb[0].mxu0
          %895 = vdwg.mxu0
          %v896 = vld [vmem:[%s8] sm:$0xff]
          %v897 = vld [vmem:[%s8 + $0x8] sm:$0xff]
          %v898 = vld [vmem:[%s8 + $0x10] sm:$0xff]
          %v899 = vld [vmem:[%s8 + $0x18] sm:$0xff]
          %v900 = vld [vmem:[%s14] sm:$0xf]
          %v901 = vld [vmem:[%s15] sm:$0x1]
          %v903 = vlaneseq
          %v904 = vshrl.u32 %v903, 7
          %v905 = vsub.s32 0, %v904
          %v906 = vrot.slane %v901, %v905
          %vm908 = vcmask 31744
          %v910 = vsel %vm908, %v896, 0
          %v913 = vsel %vm908, %v897, 0
          %v916 = vsel %vm908, %v898, 0
          %v919 = vsel %vm908, %v899, 0
          %vm921 = vcmask 1043456
          %v923 = vsel %vm921, %v900, 0
          %925 = vmatprep.subr.mxu0 0.0
          %926 = vmatpush1.msra.mxu0 %v923
          %927 = vmatprep.subr.mxu0 0.0
          %928 = vmatpush1.msra.mxu0 0.0
          %929 = vmatprep.subr.mxu0 0.0
          %930 = vmatpush1.msra.mxu0 0.0
          %931 = vmatprep.subr.mxu0 0.0
          %932 = vmatpush1.msra.mxu0 0.0
          %933 = vmatprep.subr.mxu0 0.0
          %934 = vmatpush1.msra.mxu0 0.0
          %935 = vmatprep.subr.mxu0 0.0
          %936 = vmatpush1.msra.mxu0 0.0
          %937 = vmatprep.subr.mxu0 0.0
          %938 = vmatpush1.msra.mxu0 0.0
          %939 = vmatprep.subr.mxu0 0.0
          %940 = vmatpush1.msra.mxu0 0.0
          %941 = vmatprep.subr.mxu0 0.0
          %942 = vmatpush1.msra.mxu0 0.0
          %943 = vmatprep.subr.mxu0 0.0
          %944 = vmatpush1.msra.mxu0 0.0
          %945 = vmatprep.subr.mxu0 0.0
          %946 = vmatpush1.msra.mxu0 0.0
          %947 = vmatprep.subr.mxu0 0.0
          %948 = vmatpush1.msra.mxu0 0.0
          %949 = vmatprep.subr.mxu0 0.0
          %950 = vmatpush1.msra.mxu0 0.0
          %951 = vmatprep.subr.mxu0 0.0
          %952 = vmatpush1.msra.mxu0 0.0
          %953 = vmatprep.subr.mxu0 0.0
          %954 = vmatpush1.msra.mxu0 0.0
          %955 = vmatprep.subr.mxu0 0.0
          %956 = vmatpush1.msra.mxu0 0.0
          %957 = vmatprep.subr.mxu0 0.0
          %958 = vmatpush1.msra.mxu0 0.0
          %959 = vmatprep.subr.mxu0 0.0
          %960 = vmatpush1.msra.mxu0 0.0
          %961 = vmatprep.subr.mxu0 0.0
          %962 = vmatpush1.msra.mxu0 0.0
          %963 = vmatprep.subr.mxu0 0.0
          %964 = vmatpush1.msra.mxu0 0.0
          %965 = vmatprep.subr.mxu0 0.0
          %966 = vmatpush1.msra.mxu0 0.0
          %967 = vmatprep.subr.mxu0 0.0
          %968 = vmatpush1.msra.mxu0 0.0
          %969 = vmatprep.subr.mxu0 0.0
          %970 = vmatpush1.msra.mxu0 0.0
          %971 = vmatprep.subr.mxu0 0.0
          %972 = vmatpush1.msra.mxu0 0.0
          %973 = vmatprep.subr.mxu0 0.0
          %974 = vmatpush1.msra.mxu0 0.0
          %975 = vmatprep.subr.mxu0 0.0
          %976 = vmatpush1.msra.mxu0 0.0
          %977 = vmatprep.subr.mxu0 0.0
          %978 = vmatpush1.msra.mxu0 0.0
          %979 = vmatprep.subr.mxu0 0.0
          %980 = vmatpush1.msra.mxu0 0.0
          %981 = vmatprep.subr.mxu0 0.0
          %982 = vmatpush1.msra.mxu0 0.0
          %983 = vmatprep.subr.mxu0 0.0
          %984 = vmatpush1.msra.mxu0 0.0
          %985 = vmatprep.subr.mxu0 0.0
          %986 = vmatpush1.msra.mxu0 0.0
          %987 = vmatprep.subr.mxu0 0.0
          %988 = vmatpush1.msra.mxu0 0.0
          %989 = vmatprep.mubr.f32.mxu0 0.0
          %990 = vmatmul.mubr.f32.gmra.mrb[0].mxu0 %v910
          %v991 = vpop.f32.mrb[0].mxu0
          %v992 = vadd.f32 %v906, %v991
          %v993 = vpop.f32.mrb[0].mxu0
          %994 = vmatprep.mubr.f32.mxu0 0.0
          %995 = vmatmul.mubr.f32.gmra.mrb[0].mxu0 %v913
          %v996 = vpop.f32.mrb[0].mxu0
          %v997 = vadd.f32 %v906, %v996
          %v998 = vpop.f32.mrb[0].mxu0
          %999 = vmatprep.mubr.f32.mxu0 0.0
          %1000 = vmatmul.mubr.f32.gmra.mrb[0].mxu0 %v916
          %v1001 = vpop.f32.mrb[0].mxu0
          %v1002 = vadd.f32 %v906, %v1001
          %v1003 = vpop.f32.mrb[0].mxu0
          %1004 = vmatprep.mubr.f32.mxu0 0.0
          %1005 = vmatmul.mubr.f32.gmra.mrb[0].mxu0 %v919
          %v1006 = vpop.f32.mrb[0].mxu0
          %v1007 = vadd.f32 %v906, %v1006
          %v1008 = vpop.f32.mrb[0].mxu0
          %1009 = vdwg.mxu0
          %v1010 = vmul.f32 %v992, %v992
          %v1011 = vmul.f32 %v997, %v997
          %v1012 = vmul.f32 %v1002, %v1002
          %v1013 = vmul.f32 %v1007, %v1007
          %1014 = vadd.xlane.f32.xlu0 %v1010
          %v1015 = vpop.xlane.xlu0 %1014
          %1016 = vadd.xlane.f32.xlu0 %v1011
          %v1017 = vpop.xlane.xlu0 %1016
          %1018 = vadd.xlane.f32.xlu0 %v1012
          %v1019 = vpop.xlane.xlu0 %1018
          %1020 = vadd.xlane.f32.xlu0 %v1013
          %v1021 = vpop.xlane.xlu0 %1020
          %v1022 = vmax.f32 %v1015, 1e-24
          %v1023 = vmax.f32 %v1017, 1e-24
          %v1024 = vmax.f32 %v1019, 1e-24
          %v1025 = vmax.f32 %v1021, 1e-24
          %v1026 = vrsqrt.pop %v1022
          %v1027 = vrsqrt.pop %v1023
          %v1028 = vrsqrt.pop %v1024
          %v1029 = vrsqrt.pop %v1025
          %v1030 = vmul.f32 %v992, %v1026
          %v1031 = vmul.f32 %v997, %v1027
          %v1032 = vmul.f32 %v1002, %v1028
          %v1033 = vmul.f32 %v1007, %v1029
          %v1034 = vlaneseq
          %v1035 = vshrl.u32 %v1034, 7
          %v1036 = vadd.s32 %v1035, 8
          %v1037 = vld [vmem:[%s10] sm:$0x1]
          %v1038 = vlaneseq
          %v1039 = vshrl.u32 %v1038, 7
          %v1040 = vsub.s32 0, %v1039
          %v1041 = vrot.slane %v1037, %v1040
          %vm1042 = vcmp.eq.s32.totalorder %v1035, %v1041
          %vm1043 = vcmp.eq.s32.totalorder %v1036, %v1041
          %v1044 = vsel %vm1042, 1, 0
          %v1045 = vsel %vm1043, 1, 0
          %v1046 = vcvt.s32.f32 %v1044
          %v1047 = vcvt.s32.f32 %v1045
          %v1048 = vlaneseq
          %v1049 = vand.u32 %v1048, 127
          %v1050 = vld [vmem:[%s9] sm:$0xff]
          %v1051 = vld [vmem:[%s9 + $0x8] sm:$0xff]
          %v1052 = vld [vmem:[%s9 + $0x10] sm:$0xff]
          %v1053 = vld [vmem:[%s9 + $0x18] sm:$0xff]
          %v1054 = vld [vmem:[%s9 + $0x20] sm:$0xff]
          %v1055 = vld [vmem:[%s9 + $0x28] sm:$0xff]
          %1056 = vset.pattern.permute.xlu0 0
          %1057 = vperm.xlu0 %1056, %v1050
          %v1058 = vpop.permute.xlu0 %1057
          %1059 = vset.pattern.permute.xlu0 0
          %1060 = vperm.xlu0 %1059, %v1051
          %v1061 = vpop.permute.xlu0 %1060
          %1062 = vset.pattern.permute.xlu0 0
          %1063 = vperm.xlu0 %1062, %v1052
          %v1064 = vpop.permute.xlu0 %1063
          %1065 = vset.pattern.permute.xlu0 0
          %1066 = vperm.xlu0 %1065, %v1053
          %v1067 = vpop.permute.xlu0 %1066
          %1068 = vset.pattern.permute.xlu0 0
          %1069 = vperm.xlu0 %1068, %v1054
          %v1070 = vpop.permute.xlu0 %1069
          %1071 = vset.pattern.permute.xlu0 0
          %1072 = vperm.xlu0 %1071, %v1055
          %v1073 = vpop.permute.xlu0 %1072
          %vm1074 = vcmp.eq.s32.totalorder %v1049, %v1058
          %vm1075 = vcmp.eq.s32.totalorder %v1049, %v1061
          %vm1076 = vcmp.eq.s32.totalorder %v1049, %v1064
          %vm1077 = vcmp.eq.s32.totalorder %v1049, %v1067
          %vm1078 = vcmp.eq.s32.totalorder %v1049, %v1070
          %vm1079 = vcmp.eq.s32.totalorder %v1049, %v1073
          %v1080 = vsel %vm1074, 1, 0
          %v1081 = vsel %vm1075, 1, 0
          %v1082 = vsel %vm1076, 1, 0
          %v1083 = vsel %vm1077, 1, 0
          %v1084 = vsel %vm1078, 1, 0
          %v1085 = vsel %vm1079, 1, 0
          %v1086 = vcvt.s32.f32 %v1080
          %v1087 = vcvt.s32.f32 %v1081
          %v1088 = vcvt.s32.f32 %v1082
          %v1089 = vcvt.s32.f32 %v1083
          %v1090 = vcvt.s32.f32 %v1084
          %v1091 = vcvt.s32.f32 %v1085
          %v1092 = vld [vmem:[%s11] sm:$0xff]
          %v1093 = vld [vmem:[%s11 + $0x8] sm:$0xff]
          %v1094 = vld [vmem:[%s11 + $0x10] sm:$0xff]
          %v1095 = vld [vmem:[%s11 + $0x18] sm:$0xff]
          %v1096 = vld [vmem:[%s11 + $0x20] sm:$0xff]
          %v1097 = vld [vmem:[%s11 + $0x28] sm:$0xff]
          %1098 = vset.pattern.permute.xlu0 0
          %1099 = vperm.xlu0 %1098, %v1092
          %v1100 = vpop.permute.xlu0 %1099
          %1101 = vset.pattern.permute.xlu0 0
          %1102 = vperm.xlu0 %1101, %v1093
          %v1103 = vpop.permute.xlu0 %1102
          %1104 = vset.pattern.permute.xlu0 0
          %1105 = vperm.xlu0 %1104, %v1094
          %v1106 = vpop.permute.xlu0 %1105
          %1107 = vset.pattern.permute.xlu0 0
          %1108 = vperm.xlu0 %1107, %v1095
          %v1109 = vpop.permute.xlu0 %1108
          %1110 = vset.pattern.permute.xlu0 0
          %1111 = vperm.xlu0 %1110, %v1096
          %v1112 = vpop.permute.xlu0 %1111
          %1113 = vset.pattern.permute.xlu0 0
          %1114 = vperm.xlu0 %1113, %v1097
          %v1115 = vpop.permute.xlu0 %1114
          %vm1116 = vcmp.eq.s32.totalorder %v1049, %v1100
          %vm1117 = vcmp.eq.s32.totalorder %v1049, %v1103
          %vm1118 = vcmp.eq.s32.totalorder %v1049, %v1106
          %vm1119 = vcmp.eq.s32.totalorder %v1049, %v1109
          %vm1120 = vcmp.eq.s32.totalorder %v1049, %v1112
          %vm1121 = vcmp.eq.s32.totalorder %v1049, %v1115
          %v1122 = vsel %vm1116, 1, 0
          %v1123 = vsel %vm1117, 1, 0
          %v1124 = vsel %vm1118, 1, 0
          %v1125 = vsel %vm1119, 1, 0
          %v1126 = vsel %vm1120, 1, 0
          %v1127 = vsel %vm1121, 1, 0
          %v1128 = vcvt.s32.f32 %v1122
          %v1129 = vcvt.s32.f32 %v1123
          %v1130 = vcvt.s32.f32 %v1124
          %v1131 = vcvt.s32.f32 %v1125
          %v1132 = vcvt.s32.f32 %v1126
          %v1133 = vcvt.s32.f32 %v1127
          %vm1134 = vcmask 392192
          %v1136 = vsel %vm1134, %v1046, 0
          %v1139 = vsel %vm1134, %v1047, 0
          %1141 = vmatprep.subr.mxu0 0.0
          %1142 = vmatpush1.msra.mxu0 %v1086
          %1143 = vmatprep.subr.mxu0 0.0
          %1144 = vmatpush1.msra.mxu0 %v1087
          %1145 = vmatprep.subr.mxu0 0.0
          %1146 = vmatpush1.msra.mxu0 %v1088
          %1147 = vmatprep.subr.mxu0 0.0
          %1148 = vmatpush1.msra.mxu0 %v1089
          %1149 = vmatprep.subr.mxu0 0.0
          %1150 = vmatpush1.msra.mxu0 %v1090
          %1151 = vmatprep.subr.mxu0 0.0
          %1152 = vmatpush1.msra.mxu0 %v1091
          %1153 = vmatprep.subr.mxu0 0.0
          %1154 = vmatpush1.msra.mxu0 0.0
          %1155 = vmatprep.subr.mxu0 0.0
          %1156 = vmatpush1.msra.mxu0 0.0
          %1157 = vmatprep.subr.mxu0 0.0
          %1158 = vmatpush1.msra.mxu0 0.0
          %1159 = vmatprep.subr.mxu0 0.0
          %1160 = vmatpush1.msra.mxu0 0.0
          %1161 = vmatprep.subr.mxu0 0.0
          %1162 = vmatpush1.msra.mxu0 0.0
          %1163 = vmatprep.subr.mxu0 0.0
          %1164 = vmatpush1.msra.mxu0 0.0
          %1165 = vmatprep.subr.mxu0 0.0
          %1166 = vmatpush1.msra.mxu0 0.0
          %1167 = vmatprep.subr.mxu0 0.0
          %1168 = vmatpush1.msra.mxu0 0.0
          %1169 = vmatprep.subr.mxu0 0.0
          %1170 = vmatpush1.msra.mxu0 0.0
          %1171 = vmatprep.subr.mxu0 0.0
          %1172 = vmatpush1.msra.mxu0 0.0
          %1173 = vmatprep.subr.mxu0 0.0
          %1174 = vmatpush1.msra.mxu0 0.0
          %1175 = vmatprep.subr.mxu0 0.0
          %1176 = vmatpush1.msra.mxu0 0.0
          %1177 = vmatprep.subr.mxu0 0.0
          %1178 = vmatpush1.msra.mxu0 0.0
          %1179 = vmatprep.subr.mxu0 0.0
          %1180 = vmatpush1.msra.mxu0 0.0
          %1181 = vmatprep.subr.mxu0 0.0
          %1182 = vmatpush1.msra.mxu0 0.0
          %1183 = vmatprep.subr.mxu0 0.0
          %1184 = vmatpush1.msra.mxu0 0.0
          %1185 = vmatprep.subr.mxu0 0.0
          %1186 = vmatpush1.msra.mxu0 0.0
          %1187 = vmatprep.subr.mxu0 0.0
          %1188 = vmatpush1.msra.mxu0 0.0
          %1189 = vmatprep.subr.mxu0 0.0
          %1190 = vmatpush1.msra.mxu0 0.0
          %1191 = vmatprep.subr.mxu0 0.0
          %1192 = vmatpush1.msra.mxu0 0.0
          %1193 = vmatprep.subr.mxu0 0.0
          %1194 = vmatpush1.msra.mxu0 0.0
          %1195 = vmatprep.subr.mxu0 0.0
          %1196 = vmatpush1.msra.mxu0 0.0
          %1197 = vmatprep.subr.mxu0 0.0
          %1198 = vmatpush1.msra.mxu0 0.0
          %1199 = vmatprep.subr.mxu0 0.0
          %1200 = vmatpush1.msra.mxu0 0.0
          %1201 = vmatprep.subr.mxu0 0.0
          %1202 = vmatpush1.msra.mxu0 0.0
          %1203 = vmatprep.subr.mxu0 0.0
          %1204 = vmatpush1.msra.mxu0 0.0
          %1205 = vmatprep.mubr.f32.mxu0 0.0
          %1206 = vmatmul.mubr.f32.gmra.mrb[0].mxu0 %v1136
          %v1207 = vpop.f32.mrb[0].mxu0
          %v1208 = vadd.f32 0.0, %v1207
          %v1209 = vpop.f32.mrb[0].mxu0
          %1210 = vmatprep.mubr.f32.mxu0 0.0
          %1211 = vmatmul.mubr.f32.gmra.mrb[0].mxu0 %v1139
          %v1212 = vpop.f32.mrb[0].mxu0
          %v1213 = vadd.f32 0.0, %v1212
          %v1214 = vpop.f32.mrb[0].mxu0
          %1215 = vdwg.mxu0
          %vm1216 = vcmask 261120
          %v1217 = vsel %vm1216, %v1046, 0.0
          %1218 = vadd.xlane.f32.xlu0 %v1217
          %v1219 = vpop.xlane.xlu0 %1218
          %v1220 = vsel %vm1216, %v1047, 0.0
          %1221 = vadd.xlane.f32.xlu0 %v1220
          %v1222 = vpop.xlane.xlu0 %1221
          %v1223 = vsel %vm1216, %v1046, 0
          %v1225 = vsel %vm1216, %v1047, 0
          %1227 = vmatprep.subr.mxu0 0.0
          %1228 = vmatpush1.msra.mxu0 %v1030
          %1229 = vmatprep.subr.mxu0 0.0
          %1230 = vmatpush1.msra.mxu0 %v1031
          %1231 = vmatprep.subr.mxu0 0.0
          %1232 = vmatpush1.msra.mxu0 %v1032
          %1233 = vmatprep.subr.mxu0 0.0
          %1234 = vmatpush1.msra.mxu0 %v1033
          %1235 = vmatprep.subr.mxu0 0.0
          %1236 = vmatpush1.msra.mxu0 0.0
          %1237 = vmatprep.subr.mxu0 0.0
          %1238 = vmatpush1.msra.mxu0 0.0
          %1239 = vmatprep.subr.mxu0 0.0
          %1240 = vmatpush1.msra.mxu0 0.0
          %1241 = vmatprep.subr.mxu0 0.0
          %1242 = vmatpush1.msra.mxu0 0.0
          %1243 = vmatprep.subr.mxu0 0.0
          %1244 = vmatpush1.msra.mxu0 0.0
          %1245 = vmatprep.subr.mxu0 0.0
          %1246 = vmatpush1.msra.mxu0 0.0
          %1247 = vmatprep.subr.mxu0 0.0
          %1248 = vmatpush1.msra.mxu0 0.0
          %1249 = vmatprep.subr.mxu0 0.0
          %1250 = vmatpush1.msra.mxu0 0.0
          %1251 = vmatprep.subr.mxu0 0.0
          %1252 = vmatpush1.msra.mxu0 0.0
          %1253 = vmatprep.subr.mxu0 0.0
          %1254 = vmatpush1.msra.mxu0 0.0
          %1255 = vmatprep.subr.mxu0 0.0
          %1256 = vmatpush1.msra.mxu0 0.0
          %1257 = vmatprep.subr.mxu0 0.0
          %1258 = vmatpush1.msra.mxu0 0.0
          %1259 = vmatprep.subr.mxu0 0.0
          %1260 = vmatpush1.msra.mxu0 0.0
          %1261 = vmatprep.subr.mxu0 0.0
          %1262 = vmatpush1.msra.mxu0 0.0
          %1263 = vmatprep.subr.mxu0 0.0
          %1264 = vmatpush1.msra.mxu0 0.0
          %1265 = vmatprep.subr.mxu0 0.0
          %1266 = vmatpush1.msra.mxu0 0.0
          %1267 = vmatprep.subr.mxu0 0.0
          %1268 = vmatpush1.msra.mxu0 0.0
          %1269 = vmatprep.subr.mxu0 0.0
          %1270 = vmatpush1.msra.mxu0 0.0
          %1271 = vmatprep.subr.mxu0 0.0
          %1272 = vmatpush1.msra.mxu0 0.0
          %1273 = vmatprep.subr.mxu0 0.0
          %1274 = vmatpush1.msra.mxu0 0.0
          %1275 = vmatprep.subr.mxu0 0.0
          %1276 = vmatpush1.msra.mxu0 0.0
          %1277 = vmatprep.subr.mxu0 0.0
          %1278 = vmatpush1.msra.mxu0 0.0
          %1279 = vmatprep.subr.mxu0 0.0
          %1280 = vmatpush1.msra.mxu0 0.0
          %1281 = vmatprep.subr.mxu0 0.0
          %1282 = vmatpush1.msra.mxu0 0.0
          %1283 = vmatprep.subr.mxu0 0.0
          %1284 = vmatpush1.msra.mxu0 0.0
          %1285 = vmatprep.subr.mxu0 0.0
          %1286 = vmatpush1.msra.mxu0 0.0
          %1287 = vmatprep.subr.mxu0 0.0
          %1288 = vmatpush1.msra.mxu0 0.0
          %1289 = vmatprep.subr.mxu0 0.0
          %1290 = vmatpush1.msra.mxu0 0.0
          %1291 = vmatprep.mubr.f32.mxu0 0.0
          %1292 = vmatmul.mubr.f32.gmra.mrb[0].mxu0 %v1223
          %v1293 = vpop.f32.mrb[0].mxu0
          %v1294 = vadd.f32 0.0, %v1293
          %v1295 = vpop.f32.mrb[0].mxu0
          %1296 = vmatprep.mubr.f32.mxu0 0.0
          %1297 = vmatmul.mubr.f32.gmra.mrb[0].mxu0 %v1225
          %v1298 = vpop.f32.mrb[0].mxu0
          %v1299 = vadd.f32 0.0, %v1298
          %v1300 = vpop.f32.mrb[0].mxu0
          %1301 = vdwg.mxu0
          %v1302 = vmax.f32 %v1219, 1.0
          %v1303 = vmax.f32 %v1222, 1.0
          %v1304 = vrcp.pop %v1302
          %v1305 = vmul.f32 %v1294, %v1304
          %v1306 = vrcp.pop %v1303
          %v1307 = vmul.f32 %v1299, %v1306
          %1308 = vst [vmem:[#allocation2] sm:$0xff] %v888
          %1309 = vst [vmem:[#allocation2 + $0x8] sm:$0xff] %v893
          %v1310 = vpack.c.bf16 %v1031, %v1030
          %v1311 = vpack.c.bf16 %v1033, %v1032
          %v1312 = vpack.c.bf16 %v1307, %v1305
          %1313 = vst [vmem:[#allocation3] sm:$0xff] %v1310
          %1314 = vst [vmem:[#allocation3 + $0x8] sm:$0xff] %v1311
          %1315 = vst [vmem:[#allocation3 + $0x10] sm:$0xff] %v1312
          %1316 = vst.msk [vmem:[#allocation4] sm:$0xff] %vm1134, %v1046
          %1317 = vst.msk [vmem:[#allocation4 + $0x8] sm:$0xff] %vm1134, %v1047
          %vm1318 = vcmask 130048
          %1319 = vst.msk [vmem:[#allocation5] sm:$0xff] %vm1318, %v1086
          %1320 = vst.msk [vmem:[#allocation5 + $0x8] sm:$0xff] %vm1318, %v1087
          %1321 = vst.msk [vmem:[#allocation5 + $0x10] sm:$0xff] %vm1318, %v1088
          %1322 = vst.msk [vmem:[#allocation5 + $0x18] sm:$0xff] %vm1318, %v1089
          %1323 = vst.msk [vmem:[#allocation5 + $0x20] sm:$0xff] %vm1318, %v1090
          %1324 = vst.msk [vmem:[#allocation5 + $0x28] sm:$0xff] %vm1318, %v1091
          %1325 = vst.msk [vmem:[#allocation6] sm:$0xff] %vm1318, %v1128
          %1326 = vst.msk [vmem:[#allocation6 + $0x8] sm:$0xff] %vm1318, %v1129
          %1327 = vst.msk [vmem:[#allocation6 + $0x10] sm:$0xff] %vm1318, %v1130
          %1328 = vst.msk [vmem:[#allocation6 + $0x18] sm:$0xff] %vm1318, %v1131
          %1329 = vst.msk [vmem:[#allocation6 + $0x20] sm:$0xff] %vm1318, %v1132
          %1330 = vst.msk [vmem:[#allocation6 + $0x28] sm:$0xff] %vm1318, %v1133
          %1331 = vst.msk [vmem:[#allocation7] sm:$0xff] %vm1318, %v1208
          %1332 = vst.msk [vmem:[#allocation7 + $0x8] sm:$0xff] %vm1318, %v1213
        $region116: #{gnn_encoder_forward.1} parent=111 // pred_fallthru
          _
        %v1333 = vld [vmem:[#allocation2] sm:$0xff]
        %v1334 = vld [vmem:[#allocation2 + $0x8] sm:$0xff]
        %v1335 = vpack.c.bf16 %v1334, %v1333
        %v1336 = vld [vmem:[#allocation5] sm:$0xff]
        %v1337 = vld [vmem:[#allocation5 + $0x8] sm:$0xff]
        %v1338 = vld [vmem:[#allocation5 + $0x10] sm:$0xff]
        %v1339 = vld [vmem:[#allocation5 + $0x18] sm:$0xff]
        %v1340 = vld [vmem:[#allocation5 + $0x20] sm:$0xff]
        %v1341 = vld [vmem:[#allocation5 + $0x28] sm:$0xff]
        %v1342 = vld [vmem:[#allocation4] sm:$0xff]
        %v1343 = vld [vmem:[#allocation4 + $0x8] sm:$0xff]
        %v1344 = vld [vmem:[#allocation7] sm:$0xff]
        %v1345 = vld [vmem:[#allocation7 + $0x8] sm:$0xff]
        %vm1346 = vcmp.gt.f32.partialorder %v1344, 0.5
        %vm1347 = vcmp.gt.f32.partialorder %v1345, 0.5
        %v1348 = vld [vmem:[%s774] sm:$0xff]
        %v1349 = vld [vmem:[%s774 + $0x8] sm:$0xff]
        %v1350 = vld [vmem:[%s774 + $0x10] sm:$0xff]
        %v1351 = vld [vmem:[%s774 + $0x18] sm:$0xff]
        %v1352 = vld [vmem:[%s774 + $0x20] sm:$0xff]
        %v1353 = vld [vmem:[%s774 + $0x28] sm:$0xff]
        %v1354 = vld [vmem:[%s774 + $0x30] sm:$0xff]
        %v1355 = vld [vmem:[%s774 + $0x38] sm:$0xff]
        %v1356 = vld [vmem:[%s774 + $0x40] sm:$0xff]
        %v1357 = vld [vmem:[%s774 + $0x48] sm:$0xff]
        %v1358 = vld [vmem:[%s774 + $0x50] sm:$0xff]
        %v1359 = vld [vmem:[%s774 + $0x58] sm:$0xff]
        %v1360 = vld [vmem:[%s774 + $0x60] sm:$0xff]
        %v1361 = vld [vmem:[%s774 + $0x68] sm:$0xff]
        %v1362 = vld [vmem:[%s774 + $0x70] sm:$0xff]
        %v1363 = vld [vmem:[%s774 + $0x78] sm:$0xff]
        %v1364 = vld [vmem:[%s774 + $0x80] sm:$0xff]
        %v1365 = vld [vmem:[%s774 + $0x88] sm:$0xff]
        %v1366 = vld [vmem:[%s774 + $0x90] sm:$0xff]
        %v1367 = vld [vmem:[%s774 + $0x98] sm:$0xff]
        %v1368 = vld [vmem:[%s774 + $0xa0] sm:$0xff]
        %v1369 = vld [vmem:[%s774 + $0xa8] sm:$0xff]
        %v1370 = vld [vmem:[%s774 + $0xb0] sm:$0xff]
        %v1371 = vld [vmem:[%s774 + $0xb8] sm:$0xff]
        %v1372 = vld [vmem:[%s774 + $0xc0] sm:$0xff]
        %v1373 = vld [vmem:[%s774 + $0xc8] sm:$0xff]
        %v1374 = vld [vmem:[%s774 + $0xd0] sm:$0xff]
        %v1375 = vld [vmem:[%s774 + $0xd8] sm:$0xff]
        %v1376 = vld [vmem:[%s774 + $0xe0] sm:$0xff]
        %v1377 = vld [vmem:[%s774 + $0xe8] sm:$0xff]
        %v1378 = vld [vmem:[%s774 + $0xf0] sm:$0xff]
        %v1379 = vld [vmem:[%s774 + $0xf8] sm:$0xff]
        %v1412 = vunpack.c.l.b16 %v1348
        %v1413 = vunpack.c.h.b16 %v1348
        %v1414 = vunpack.c.l.b16 %v1349
        %v1415 = vunpack.c.h.b16 %v1349
        %v1416 = vunpack.c.l.b16 %v1350
        %v1417 = vunpack.c.h.b16 %v1350
        %v1418 = vunpack.c.l.b16 %v1351
        %v1419 = vunpack.c.h.b16 %v1351
        %v1420 = vunpack.c.l.b16 %v1352
        %v1421 = vunpack.c.h.b16 %v1352
        %v1422 = vunpack.c.l.b16 %v1353
        %v1423 = vunpack.c.h.b16 %v1353
        %v1424 = vunpack.c.l.b16 %v1354
        %v1425 = vunpack.c.h.b16 %v1354
        %v1426 = vunpack.c.l.b16 %v1355
        %v1427 = vunpack.c.h.b16 %v1355
        %v1428 = vunpack.c.l.b16 %v1356
        %v1429 = vunpack.c.h.b16 %v1356
        %v1430 = vunpack.c.l.b16 %v1357
        %v1431 = vunpack.c.h.b16 %v1357
        %v1432 = vunpack.c.l.b16 %v1358
        %v1433 = vunpack.c.h.b16 %v1358
        %v1434 = vunpack.c.l.b16 %v1359
        %v1435 = vunpack.c.h.b16 %v1359
        %v1436 = vunpack.c.l.b16 %v1360
        %v1437 = vunpack.c.h.b16 %v1360
        %v1438 = vunpack.c.l.b16 %v1361
        %v1439 = vunpack.c.h.b16 %v1361
        %v1440 = vunpack.c.l.b16 %v1362
        %v1441 = vunpack.c.h.b16 %v1362
        %v1442 = vunpack.c.l.b16 %v1363
        %v1443 = vunpack.c.h.b16 %v1363
        %v1444 = vunpack.c.l.b16 %v1364
        %v1445 = vunpack.c.h.b16 %v1364
        %v1446 = vunpack.c.l.b16 %v1365
        %v1447 = vunpack.c.h.b16 %v1365
        %v1448 = vunpack.c.l.b16 %v1366
        %v1449 = vunpack.c.h.b16 %v1366
        %v1450 = vunpack.c.l.b16 %v1367
        %v1451 = vunpack.c.h.b16 %v1367
        %v1452 = vunpack.c.l.b16 %v1368
        %v1453 = vunpack.c.h.b16 %v1368
        %v1454 = vunpack.c.l.b16 %v1369
        %v1455 = vunpack.c.h.b16 %v1369
        %v1456 = vunpack.c.l.b16 %v1370
        %v1457 = vunpack.c.h.b16 %v1370
        %v1458 = vunpack.c.l.b16 %v1371
        %v1459 = vunpack.c.h.b16 %v1371
        %v1460 = vunpack.c.l.b16 %v1372
        %v1461 = vunpack.c.h.b16 %v1372
        %v1462 = vunpack.c.l.b16 %v1373
        %v1463 = vunpack.c.h.b16 %v1373
        %v1464 = vunpack.c.l.b16 %v1374
        %v1465 = vunpack.c.h.b16 %v1374
        %v1466 = vunpack.c.l.b16 %v1375
        %v1467 = vunpack.c.h.b16 %v1375
        %v1468 = vunpack.c.l.b16 %v1376
        %v1469 = vunpack.c.h.b16 %v1376
        %v1470 = vunpack.c.l.b16 %v1377
        %v1471 = vunpack.c.h.b16 %v1377
        %v1472 = vunpack.c.l.b16 %v1378
        %v1473 = vunpack.c.h.b16 %v1378
        %v1474 = vunpack.c.l.b16 %v1379
        %v1475 = vunpack.c.h.b16 %v1379
        %v1476 = vpack.c.b16 %v1416, %v1412
        %v1477 = vpack.c.b16 %v1417, %v1413
        %v1478 = vpack.c.b16 %v1418, %v1414
        %v1479 = vpack.c.b16 %v1419, %v1415
        %v1480 = vpack.c.b16 %v1424, %v1420
        %v1481 = vpack.c.b16 %v1425, %v1421
        %v1482 = vpack.c.b16 %v1426, %v1422
        %v1483 = vpack.c.b16 %v1427, %v1423
        %v1484 = vpack.c.b16 %v1432, %v1428
        %v1485 = vpack.c.b16 %v1433, %v1429
        %v1486 = vpack.c.b16 %v1434, %v1430
        %v1487 = vpack.c.b16 %v1435, %v1431
        %v1488 = vpack.c.b16 %v1440, %v1436
        %v1489 = vpack.c.b16 %v1441, %v1437
        %v1490 = vpack.c.b16 %v1442, %v1438
        %v1491 = vpack.c.b16 %v1443, %v1439
        %v1492 = vpack.c.b16 %v1448, %v1444
        %v1493 = vpack.c.b16 %v1449, %v1445
        %v1494 = vpack.c.b16 %v1450, %v1446
        %v1495 = vpack.c.b16 %v1451, %v1447
        %v1496 = vpack.c.b16 %v1456, %v1452
        %v1497 = vpack.c.b16 %v1457, %v1453
        %v1498 = vpack.c.b16 %v1458, %v1454
        %v1499 = vpack.c.b16 %v1459, %v1455
        %v1500 = vpack.c.b16 %v1464, %v1460
        %v1501 = vpack.c.b16 %v1465, %v1461
        %v1502 = vpack.c.b16 %v1466, %v1462
        %v1503 = vpack.c.b16 %v1467, %v1463
        %v1504 = vpack.c.b16 %v1472, %v1468
        %v1505 = vpack.c.b16 %v1473, %v1469
        %v1506 = vpack.c.b16 %v1474, %v1470
        %v1507 = vpack.c.b16 %v1475, %v1471
        %1540 = vmatprep.subr.bf16.mxu0 %v1477
        %1541 = vmatpush1.bf16.msra.mxu0 %v1476
        %1542 = vmatprep.subr.bf16.mxu0 %v1481
        %1543 = vmatpush1.bf16.msra.mxu0 %v1480
        %1544 = vmatprep.subr.bf16.mxu0 %v1485
        %1545 = vmatpush1.bf16.msra.mxu0 %v1484
        %1546 = vmatprep.subr.bf16.mxu0 %v1489
        %1547 = vmatpush1.bf16.msra.mxu0 %v1488
        %1548 = vmatprep.subr.bf16.mxu0 %v1493
        %1549 = vmatpush1.bf16.msra.mxu0 %v1492
        %1550 = vmatprep.subr.bf16.mxu0 %v1497
        %1551 = vmatpush1.bf16.msra.mxu0 %v1496
        %1552 = vmatprep.subr.bf16.mxu0 %v1501
        %1553 = vmatpush1.bf16.msra.mxu0 %v1500
        %1554 = vmatprep.subr.bf16.mxu0 %v1505
        %1555 = vmatpush1.bf16.msra.mxu0 %v1504
        %1556 = vmatprep.subr.bf16.mxu0 0
        %1557 = vmatpush1.bf16.msra.mxu0 0
        %1558 = vmatprep.subr.bf16.mxu0 0
        %1559 = vmatpush1.bf16.msra.mxu0 0
        %1560 = vmatprep.subr.bf16.mxu0 0
        %1561 = vmatpush1.bf16.msra.mxu0 0
        %1562 = vmatprep.subr.bf16.mxu0 0
        %1563 = vmatpush1.bf16.msra.mxu0 0
        %1564 = vmatprep.subr.bf16.mxu0 0
        %1565 = vmatpush1.bf16.msra.mxu0 0
        %1566 = vmatprep.subr.bf16.mxu0 0
        %1567 = vmatpush1.bf16.msra.mxu0 0
        %1568 = vmatprep.subr.bf16.mxu0 0
        %1569 = vmatpush1.bf16.msra.mxu0 0
        %1570 = vmatprep.subr.bf16.mxu0 0
        %1571 = vmatpush1.bf16.msra.mxu0 0
        %1572 = vmatprep.mubr.bf16.mxu0 0
        %1573 = vmatmul.mubr.bf16.gmra.mrb[0].mxu0 %v1335
        %v1574 = vpop.f32.mrb[0].mxu0
        %v1575 = vadd.f32 0.0, %v1574
        %v1576 = vpop.f32.mrb[0].mxu0
        %v1577 = vadd.f32 0.0, %v1576
        %v1578 = vpop.f32.mrb[0].mxu0
        %v1579 = vadd.f32 0.0, %v1578
        %v1580 = vpop.f32.mrb[0].mxu0
        %v1581 = vadd.f32 0.0, %v1580
        %1582 = vdwg.mxu0
        %1583 = vmatprep.subr.bf16.mxu0 %v1479
        %1584 = vmatpush1.bf16.msra.mxu0 %v1478
        %1585 = vmatprep.subr.bf16.mxu0 %v1483
        %1586 = vmatpush1.bf16.msra.mxu0 %v1482
        %1587 = vmatprep.subr.bf16.mxu0 %v1487
        %1588 = vmatpush1.bf16.msra.mxu0 %v1486
        %1589 = vmatprep.subr.bf16.mxu0 %v1491
        %1590 = vmatpush1.bf16.msra.mxu0 %v1490
        %1591 = vmatprep.subr.bf16.mxu0 %v1495
        %1592 = vmatpush1.bf16.msra.mxu0 %v1494
        %1593 = vmatprep.subr.bf16.mxu0 %v1499
        %1594 = vmatpush1.bf16.msra.mxu0 %v1498
        %1595 = vmatprep.subr.bf16.mxu0 %v1503
        %1596 = vmatpush1.bf16.msra.mxu0 %v1502
        %1597 = vmatprep.subr.bf16.mxu0 %v1507
        %1598 = vmatpush1.bf16.msra.mxu0 %v1506
        %1599 = vmatprep.subr.bf16.mxu0 0
        %1600 = vmatpush1.bf16.msra.mxu0 0
        %1601 = vmatprep.subr.bf16.mxu0 0
        %1602 = vmatpush1.bf16.msra.mxu0 0
        %1603 = vmatprep.subr.bf16.mxu0 0
        %1604 = vmatpush1.bf16.msra.mxu0 0
        %1605 = vmatprep.subr.bf16.mxu0 0
        %1606 = vmatpush1.bf16.msra.mxu0 0
        %1607 = vmatprep.subr.bf16.mxu0 0
        %1608 = vmatpush1.bf16.msra.mxu0 0
        %1609 = vmatprep.subr.bf16.mxu0 0
        %1610 = vmatpush1.bf16.msra.mxu0 0
        %1611 = vmatprep.subr.bf16.mxu0 0
        %1612 = vmatpush1.bf16.msra.mxu0 0
        %1613 = vmatprep.subr.bf16.mxu0 0
        %1614 = vmatpush1.bf16.msra.mxu0 0
        %1615 = vmatprep.mubr.bf16.mxu0 0
        %1616 = vmatmul.mubr.bf16.gmra.mrb[0].mxu0 %v1335
        %v1617 = vpop.f32.mrb[0].mxu0
        %v1618 = vadd.f32 0.0, %v1617
        %v1619 = vpop.f32.mrb[0].mxu0
        %v1620 = vadd.f32 0.0, %v1619
        %v1621 = vpop.f32.mrb[0].mxu0
        %v1622 = vadd.f32 0.0, %v1621
        %v1623 = vpop.f32.mrb[0].mxu0
        %v1624 = vadd.f32 0.0, %v1623
        %1625 = vdwg.mxu0
        %v1626 = vld [vmem:[%s779] sm:$0xf]
        %v1627 = vld [vmem:[%s779 + $0x4] sm:$0xf]
        %v1628 = vld [vmem:[%s779 + $0x8] sm:$0xf]
        %v1629 = vld [vmem:[%s779 + $0xc] sm:$0xf]
        %v1630 = vld [vmem:[%s779 + $0x10] sm:$0xf]
        %v1631 = vld [vmem:[%s779 + $0x14] sm:$0xf]
        %v1632 = vld [vmem:[%s779 + $0x18] sm:$0xf]
        %v1633 = vld [vmem:[%s779 + $0x1c] sm:$0xf]
        %v1634 = vld [vmem:[%s779 + $0x20] sm:$0xf]
        %v1635 = vld [vmem:[%s779 + $0x24] sm:$0xf]
        %v1636 = vld [vmem:[%s779 + $0x28] sm:$0xf]
        %v1637 = vld [vmem:[%s779 + $0x2c] sm:$0xf]
        %v1638 = vld [vmem:[%s779 + $0x30] sm:$0xf]
        %v1639 = vld [vmem:[%s779 + $0x34] sm:$0xf]
        %v1640 = vld [vmem:[%s779 + $0x38] sm:$0xf]
        %v1641 = vld [vmem:[%s779 + $0x3c] sm:$0xf]
        %v1658 = vunpack.c.l.b16 %v1626
        %v1659 = vunpack.c.l.b16 %v1627
        %v1660 = vunpack.c.l.b16 %v1628
        %v1661 = vunpack.c.l.b16 %v1629
        %v1662 = vunpack.c.l.b16 %v1630
        %v1663 = vunpack.c.l.b16 %v1631
        %v1664 = vunpack.c.l.b16 %v1632
        %v1665 = vunpack.c.l.b16 %v1633
        %v1666 = vunpack.c.l.b16 %v1634
        %v1667 = vunpack.c.l.b16 %v1635
        %v1668 = vunpack.c.l.b16 %v1636
        %v1669 = vunpack.c.l.b16 %v1637
        %v1670 = vunpack.c.l.b16 %v1638
        %v1671 = vunpack.c.l.b16 %v1639
        %v1672 = vunpack.c.l.b16 %v1640
        %v1673 = vunpack.c.l.b16 %v1641
        %v1674 = vpack.c.b16 %v1659, %v1658
        %v1675 = vpack.c.b16 %v1661, %v1660
        %v1676 = vpack.c.b16 %v1663, %v1662
        %v1677 = vpack.c.b16 %v1665, %v1664
        %v1678 = vpack.c.b16 %v1667, %v1666
        %v1679 = vpack.c.b16 %v1669, %v1668
        %v1680 = vpack.c.b16 %v1671, %v1670
        %v1681 = vpack.c.b16 %v1673, %v1672
        %1690 = vmatprep.subr.bf16.mxu0 0
        %1691 = vmatpush1.bf16.msra.mxu0 %v1674
        %1692 = vmatprep.subr.bf16.mxu0 0
        %1693 = vmatpush1.bf16.msra.mxu0 %v1675
        %1694 = vmatprep.subr.bf16.mxu0 0
        %1695 = vmatpush1.bf16.msra.mxu0 %v1676
        %1696 = vmatprep.subr.bf16.mxu0 0
        %1697 = vmatpush1.bf16.msra.mxu0 %v1677
        %1698 = vmatprep.subr.bf16.mxu0 0
        %1699 = vmatpush1.bf16.msra.mxu0 %v1678
        %1700 = vmatprep.subr.bf16.mxu0 0
        %1701 = vmatpush1.bf16.msra.mxu0 %v1679
        %1702 = vmatprep.subr.bf16.mxu0 0
        %1703 = vmatpush1.bf16.msra.mxu0 %v1680
        %1704 = vmatprep.subr.bf16.mxu0 0
        %1705 = vmatpush1.bf16.msra.mxu0 %v1681
        %1706 = vmatprep.subr.bf16.mxu0 0
        %1707 = vmatpush1.bf16.msra.mxu0 0
        %1708 = vmatprep.subr.bf16.mxu0 0
        %1709 = vmatpush1.bf16.msra.mxu0 0
        %1710 = vmatprep.subr.bf16.mxu0 0
        %1711 = vmatpush1.bf16.msra.mxu0 0
        %1712 = vmatprep.subr.bf16.mxu0 0
        %1713 = vmatpush1.bf16.msra.mxu0 0
        %1714 = vmatprep.subr.bf16.mxu0 0
        %1715 = vmatpush1.bf16.msra.mxu0 0
        %1716 = vmatprep.subr.bf16.mxu0 0
        %1717 = vmatpush1.bf16.msra.mxu0 0
        %1718 = vmatprep.subr.bf16.mxu0 0
        %1719 = vmatpush1.bf16.msra.mxu0 0
        %1720 = vmatprep.subr.bf16.mxu0 0
        %1721 = vmatpush1.bf16.msra.mxu0 0
        %1722 = vmatprep.mubr.bf16.mxu0 0
        %1723 = vmatmul.mubr.bf16.gmra.mrb[0].mxu0 %v1335
        %v1724 = vpop.f32.mrb[0].mxu0
        %v1725 = vadd.f32 0.0, %v1724
        %v1726 = vpop.f32.mrb[0].mxu0
        %v1727 = vpop.f32.mrb[0].mxu0
        %v1728 = vadd.f32 0.0, %v1727
        %v1729 = vpop.f32.mrb[0].mxu0
        %1730 = vdwg.mxu0
        %v1731 = vld [vmem:[%s784] sm:$0xf]
        %v1732 = vld [vmem:[%s784 + $0x4] sm:$0xf]
        %v1733 = vld [vmem:[%s784 + $0x8] sm:$0xf]
        %v1734 = vld [vmem:[%s784 + $0xc] sm:$0xf]
        %v1735 = vld [vmem:[%s784 + $0x10] sm:$0xf]
        %v1736 = vld [vmem:[%s784 + $0x14] sm:$0xf]
        %v1737 = vld [vmem:[%s784 + $0x18] sm:$0xf]
        %v1738 = vld [vmem:[%s784 + $0x1c] sm:$0xf]
        %v1739 = vld [vmem:[%s784 + $0x20] sm:$0xf]
        %v1740 = vld [vmem:[%s784 + $0x24] sm:$0xf]
        %v1741 = vld [vmem:[%s784 + $0x28] sm:$0xf]
        %v1742 = vld [vmem:[%s784 + $0x2c] sm:$0xf]
        %v1743 = vld [vmem:[%s784 + $0x30] sm:$0xf]
        %v1744 = vld [vmem:[%s784 + $0x34] sm:$0xf]
        %v1745 = vld [vmem:[%s784 + $0x38] sm:$0xf]
        %v1746 = vld [vmem:[%s784 + $0x3c] sm:$0xf]
        %v1763 = vunpack.c.l.b16 %v1731
        %v1764 = vunpack.c.l.b16 %v1732
        %v1765 = vunpack.c.l.b16 %v1733
        %v1766 = vunpack.c.l.b16 %v1734
        %v1767 = vunpack.c.l.b16 %v1735
        %v1768 = vunpack.c.l.b16 %v1736
        %v1769 = vunpack.c.l.b16 %v1737
        %v1770 = vunpack.c.l.b16 %v1738
        %v1771 = vunpack.c.l.b16 %v1739
        %v1772 = vunpack.c.l.b16 %v1740
        %v1773 = vunpack.c.l.b16 %v1741
        %v1774 = vunpack.c.l.b16 %v1742
        %v1775 = vunpack.c.l.b16 %v1743
        %v1776 = vunpack.c.l.b16 %v1744
        %v1777 = vunpack.c.l.b16 %v1745
        %v1778 = vunpack.c.l.b16 %v1746
        %v1779 = vpack.c.b16 %v1764, %v1763
        %v1780 = vpack.c.b16 %v1766, %v1765
        %v1781 = vpack.c.b16 %v1768, %v1767
        %v1782 = vpack.c.b16 %v1770, %v1769
        %v1783 = vpack.c.b16 %v1772, %v1771
        %v1784 = vpack.c.b16 %v1774, %v1773
        %v1785 = vpack.c.b16 %v1776, %v1775
        %v1786 = vpack.c.b16 %v1778, %v1777
        %1795 = vmatprep.subr.bf16.mxu0 0
        %1796 = vmatpush1.bf16.msra.mxu0 %v1779
        %1797 = vmatprep.subr.bf16.mxu0 0
        %1798 = vmatpush1.bf16.msra.mxu0 %v1780
        %1799 = vmatprep.subr.bf16.mxu0 0
        %1800 = vmatpush1.bf16.msra.mxu0 %v1781
        %1801 = vmatprep.subr.bf16.mxu0 0
        %1802 = vmatpush1.bf16.msra.mxu0 %v1782
        %1803 = vmatprep.subr.bf16.mxu0 0
        %1804 = vmatpush1.bf16.msra.mxu0 %v1783
        %1805 = vmatprep.subr.bf16.mxu0 0
        %1806 = vmatpush1.bf16.msra.mxu0 %v1784
        %1807 = vmatprep.subr.bf16.mxu0 0
        %1808 = vmatpush1.bf16.msra.mxu0 %v1785
        %1809 = vmatprep.subr.bf16.mxu0 0
        %1810 = vmatpush1.bf16.msra.mxu0 %v1786
        %1811 = vmatprep.subr.bf16.mxu0 0
        %1812 = vmatpush1.bf16.msra.mxu0 0
        %1813 = vmatprep.subr.bf16.mxu0 0
        %1814 = vmatpush1.bf16.msra.mxu0 0
        %1815 = vmatprep.subr.bf16.mxu0 0
        %1816 = vmatpush1.bf16.msra.mxu0 0
        %1817 = vmatprep.subr.bf16.mxu0 0
        %1818 = vmatpush1.bf16.msra.mxu0 0
        %1819 = vmatprep.subr.bf16.mxu0 0
        %1820 = vmatpush1.bf16.msra.mxu0 0
        %1821 = vmatprep.subr.bf16.mxu0 0
        %1822 = vmatpush1.bf16.msra.mxu0 0
        %1823 = vmatprep.subr.bf16.mxu0 0
        %1824 = vmatpush1.bf16.msra.mxu0 0
        %1825 = vmatprep.subr.bf16.mxu0 0
        %1826 = vmatpush1.bf16.msra.mxu0 0
        %1827 = vmatprep.mubr.bf16.mxu0 0
        %1828 = vmatmul.mubr.bf16.gmra.mrb[0].mxu0 %v1335
        %v1829 = vpop.f32.mrb[0].mxu0
        %v1830 = vadd.f32 0.0, %v1829
        %v1831 = vpop.f32.mrb[0].mxu0
        %v1832 = vpop.f32.mrb[0].mxu0
        %v1833 = vadd.f32 0.0, %v1832
        %v1834 = vpop.f32.mrb[0].mxu0
        %1835 = vdwg.mxu0
        %v1836 = vld [vmem:[#allocation3] sm:$0xff]
        %v1837 = vld [vmem:[#allocation3 + $0x8] sm:$0xff]
        %v1838 = vld [vmem:[#allocation3 + $0x10] sm:$0xff]
        %v1839 = vld [vmem:[%s789] sm:$0xf]
        %v1840 = vld [vmem:[%s789 + $0x4] sm:$0xf]
        %v1841 = vld [vmem:[%s789 + $0x8] sm:$0xf]
        %v1842 = vld [vmem:[%s789 + $0xc] sm:$0xf]
        %v1843 = vld [vmem:[%s789 + $0x10] sm:$0xf]
        %v1844 = vld [vmem:[%s789 + $0x14] sm:$0xf]
        %v1845 = vld [vmem:[%s789 + $0x18] sm:$0xf]
        %v1846 = vld [vmem:[%s789 + $0x1c] sm:$0xf]
        %v1847 = vld [vmem:[%s789 + $0x20] sm:$0xf]
        %v1848 = vld [vmem:[%s789 + $0x24] sm:$0xf]
        %v1849 = vld [vmem:[%s789 + $0x28] sm:$0xf]
        %v1850 = vld [vmem:[%s789 + $0x2c] sm:$0xf]
        %v1851 = vld [vmem:[%s789 + $0x30] sm:$0xf]
        %v1852 = vld [vmem:[%s789 + $0x34] sm:$0xf]
        %v1853 = vld [vmem:[%s789 + $0x38] sm:$0xf]
        %v1854 = vld [vmem:[%s789 + $0x3c] sm:$0xf]
        %v1871 = vunpack.c.l.b16 %v1839
        %v1872 = vunpack.c.l.b16 %v1840
        %v1873 = vunpack.c.l.b16 %v1841
        %v1874 = vunpack.c.l.b16 %v1842
        %v1875 = vunpack.c.l.b16 %v1843
        %v1876 = vunpack.c.l.b16 %v1844
        %v1877 = vunpack.c.l.b16 %v1845
        %v1878 = vunpack.c.l.b16 %v1846
        %v1879 = vunpack.c.l.b16 %v1847
        %v1880 = vunpack.c.l.b16 %v1848
        %v1881 = vunpack.c.l.b16 %v1849
        %v1882 = vunpack.c.l.b16 %v1850
        %v1883 = vunpack.c.l.b16 %v1851
        %v1884 = vunpack.c.l.b16 %v1852
        %v1885 = vunpack.c.l.b16 %v1853
        %v1886 = vunpack.c.l.b16 %v1854
        %v1887 = vpack.c.b16 %v1872, %v1871
        %v1888 = vpack.c.b16 %v1874, %v1873
        %v1889 = vpack.c.b16 %v1876, %v1875
        %v1890 = vpack.c.b16 %v1878, %v1877
        %v1891 = vpack.c.b16 %v1880, %v1879
        %v1892 = vpack.c.b16 %v1882, %v1881
        %v1893 = vpack.c.b16 %v1884, %v1883
        %v1894 = vpack.c.b16 %v1886, %v1885
        %1903 = vmatprep.subr.bf16.mxu0 0
        %1904 = vmatpush1.bf16.msra.mxu0 %v1887
        %1905 = vmatprep.subr.bf16.mxu0 0
        %1906 = vmatpush1.bf16.msra.mxu0 %v1888
        %1907 = vmatprep.subr.bf16.mxu0 0
        %1908 = vmatpush1.bf16.msra.mxu0 %v1889
        %1909 = vmatprep.subr.bf16.mxu0 0
        %1910 = vmatpush1.bf16.msra.mxu0 %v1890
        %1911 = vmatprep.subr.bf16.mxu0 0
        %1912 = vmatpush1.bf16.msra.mxu0 %v1891
        %1913 = vmatprep.subr.bf16.mxu0 0
        %1914 = vmatpush1.bf16.msra.mxu0 %v1892
        %1915 = vmatprep.subr.bf16.mxu0 0
        %1916 = vmatpush1.bf16.msra.mxu0 %v1893
        %1917 = vmatprep.subr.bf16.mxu0 0
        %1918 = vmatpush1.bf16.msra.mxu0 %v1894
        %1919 = vmatprep.subr.bf16.mxu0 0
        %1920 = vmatpush1.bf16.msra.mxu0 0
        %1921 = vmatprep.subr.bf16.mxu0 0
        %1922 = vmatpush1.bf16.msra.mxu0 0
        %1923 = vmatprep.subr.bf16.mxu0 0
        %1924 = vmatpush1.bf16.msra.mxu0 0
        %1925 = vmatprep.subr.bf16.mxu0 0
        %1926 = vmatpush1.bf16.msra.mxu0 0
        %1927 = vmatprep.subr.bf16.mxu0 0
        %1928 = vmatpush1.bf16.msra.mxu0 0
        %1929 = vmatprep.subr.bf16.mxu0 0
        %1930 = vmatpush1.bf16.msra.mxu0 0
        %1931 = vmatprep.subr.bf16.mxu0 0
        %1932 = vmatpush1.bf16.msra.mxu0 0
        %1933 = vmatprep.subr.bf16.mxu0 0
        %1934 = vmatpush1.bf16.msra.mxu0 0
        %1935 = vmatprep.mubr.bf16.mxu0 0
        %1936 = vmatmul.mubr.bf16.gmra.mrb[0].mxu0 %v1836
        %v1937 = vpop.f32.mrb[0].mxu0
        %v1938 = vadd.f32 0.0, %v1937
        %v1939 = vpop.f32.mrb[0].mxu0
        %v1940 = vpop.f32.mrb[0].mxu0
        %v1941 = vadd.f32 0.0, %v1940
        %v1942 = vpop.f32.mrb[0].mxu0
        %1943 = vmatprep.mubr.bf16.mxu0 0
        %1944 = vmatmul.mubr.bf16.gmra.mrb[0].mxu0 %v1837
        %v1945 = vpop.f32.mrb[0].mxu0
        %v1946 = vadd.f32 0.0, %v1945
        %v1947 = vpop.f32.mrb[0].mxu0
        %v1948 = vpop.f32.mrb[0].mxu0
        %v1949 = vadd.f32 0.0, %v1948
        %v1950 = vpop.f32.mrb[0].mxu0
        %1951 = vmatprep.mubr.bf16.mxu0 0
        %1952 = vmatmul.mubr.bf16.gmra.mrb[0].mxu0 %v1838
        %v1953 = vpop.f32.mrb[0].mxu0
        %v1954 = vadd.f32 0.0, %v1953
        %v1955 = vpop.f32.mrb[0].mxu0
        %v1956 = vpop.f32.mrb[0].mxu0
        %v1957 = vadd.f32 0.0, %v1956
        %v1958 = vpop.f32.mrb[0].mxu0
        %1959 = vdwg.mxu0
        %v1960 = vld [vmem:[#allocation6] sm:$0xff]
        %v1961 = vld [vmem:[#allocation6 + $0x8] sm:$0xff]
        %v1962 = vld [vmem:[#allocation6 + $0x10] sm:$0xff]
        %v1963 = vld [vmem:[#allocation6 + $0x18] sm:$0xff]
        %v1964 = vld [vmem:[#allocation6 + $0x20] sm:$0xff]
        %v1965 = vld [vmem:[#allocation6 + $0x28] sm:$0xff]
        %vm1966 = vcmask 130048
        %v1968 = vsel %vm1966, %v1336, 0
        %v1971 = vsel %vm1966, %v1337, 0
        %v1974 = vsel %vm1966, %v1338, 0
        %v1977 = vsel %vm1966, %v1339, 0
        %v1980 = vsel %vm1966, %v1340, 0
        %v1983 = vsel %vm1966, %v1341, 0
        %1985 = vmatprep.subr.mxu0 0.0
        %1986 = vmatpush1.msra.mxu0 %v1725
        %1987 = vmatprep.subr.mxu0 0.0
        %1988 = vmatpush1.msra.mxu0 %v1728
        %1989 = vmatprep.subr.mxu0 0.0
        %1990 = vmatpush1.msra.mxu0 0.0
        %1991 = vmatprep.subr.mxu0 0.0
        %1992 = vmatpush1.msra.mxu0 0.0
        %1993 = vmatprep.subr.mxu0 0.0
        %1994 = vmatpush1.msra.mxu0 0.0
        %1995 = vmatprep.subr.mxu0 0.0
        %1996 = vmatpush1.msra.mxu0 0.0
        %1997 = vmatprep.subr.mxu0 0.0
        %1998 = vmatpush1.msra.mxu0 0.0
        %1999 = vmatprep.subr.mxu0 0.0
        %2000 = vmatpush1.msra.mxu0 0.0
        %2001 = vmatprep.subr.mxu0 0.0
        %2002 = vmatpush1.msra.mxu0 0.0
        %2003 = vmatprep.subr.mxu0 0.0
        %2004 = vmatpush1.msra.mxu0 0.0
        %2005 = vmatprep.subr.mxu0 0.0
        %2006 = vmatpush1.msra.mxu0 0.0
        %2007 = vmatprep.subr.mxu0 0.0
        %2008 = vmatpush1.msra.mxu0 0.0
        %2009 = vmatprep.subr.mxu0 0.0
        %2010 = vmatpush1.msra.mxu0 0.0
        %2011 = vmatprep.subr.mxu0 0.0
        %2012 = vmatpush1.msra.mxu0 0.0
        %2013 = vmatprep.subr.mxu0 0.0
        %2014 = vmatpush1.msra.mxu0 0.0
        %2015 = vmatprep.subr.mxu0 0.0
        %2016 = vmatpush1.msra.mxu0 0.0
        %2017 = vmatprep.subr.mxu0 0.0
        %2018 = vmatpush1.msra.mxu0 0.0
        %2019 = vmatprep.subr.mxu0 0.0
        %2020 = vmatpush1.msra.mxu0 0.0
        %2021 = vmatprep.subr.mxu0 0.0
        %2022 = vmatpush1.msra.mxu0 0.0
        %2023 = vmatprep.subr.mxu0 0.0
        %2024 = vmatpush1.msra.mxu0 0.0
        %2025 = vmatprep.subr.mxu0 0.0
        %2026 = vmatpush1.msra.mxu0 0.0
        %2027 = vmatprep.subr.mxu0 0.0
        %2028 = vmatpush1.msra.mxu0 0.0
        %2029 = vmatprep.subr.mxu0 0.0
        %2030 = vmatpush1.msra.mxu0 0.0
        %2031 = vmatprep.subr.mxu0 0.0
        %2032 = vmatpush1.msra.mxu0 0.0
        %2033 = vmatprep.subr.mxu0 0.0
        %2034 = vmatpush1.msra.mxu0 0.0
        %2035 = vmatprep.subr.mxu0 0.0
        %2036 = vmatpush1.msra.mxu0 0.0
        %2037 = vmatprep.subr.mxu0 0.0
        %2038 = vmatpush1.msra.mxu0 0.0
        %2039 = vmatprep.subr.mxu0 0.0
        %2040 = vmatpush1.msra.mxu0 0.0
        %2041 = vmatprep.subr.mxu0 0.0
        %2042 = vmatpush1.msra.mxu0 0.0
        %2043 = vmatprep.subr.mxu0 0.0
        %2044 = vmatpush1.msra.mxu0 0.0
        %2045 = vmatprep.subr.mxu0 0.0
        %2046 = vmatpush1.msra.mxu0 0.0
        %2047 = vmatprep.subr.mxu0 0.0
        %2048 = vmatpush1.msra.mxu0 0.0
        %2049 = vmatprep.mubr.f32.mxu0 0.0
        %2050 = vmatmul.mubr.f32.gmra.mrb[0].mxu0 %v1968
        %v2051 = vpop.f32.mrb[0].mxu0
        %v2052 = vadd.f32 0.0, %v2051
        %v2053 = vpop.f32.mrb[0].mxu0
        %2054 = vmatprep.mubr.f32.mxu0 0.0
        %2055 = vmatmul.mubr.f32.gmra.mrb[0].mxu0 %v1971
        %v2056 = vpop.f32.mrb[0].mxu0
        %v2057 = vadd.f32 0.0, %v2056
        %v2058 = vpop.f32.mrb[0].mxu0
        %2059 = vmatprep.mubr.f32.mxu0 0.0
        %2060 = vmatmul.mubr.f32.gmra.mrb[0].mxu0 %v1974
        %v2061 = vpop.f32.mrb[0].mxu0
        %v2062 = vadd.f32 0.0, %v2061
        %v2063 = vpop.f32.mrb[0].mxu0
        %2064 = vmatprep.mubr.f32.mxu0 0.0
        %2065 = vmatmul.mubr.f32.gmra.mrb[0].mxu0 %v1977
        %v2066 = vpop.f32.mrb[0].mxu0
        %v2067 = vadd.f32 0.0, %v2066
        %v2068 = vpop.f32.mrb[0].mxu0
        %2069 = vmatprep.mubr.f32.mxu0 0.0
        %2070 = vmatmul.mubr.f32.gmra.mrb[0].mxu0 %v1980
        %v2071 = vpop.f32.mrb[0].mxu0
        %v2072 = vadd.f32 0.0, %v2071
        %v2073 = vpop.f32.mrb[0].mxu0
        %2074 = vmatprep.mubr.f32.mxu0 0.0
        %2075 = vmatmul.mubr.f32.gmra.mrb[0].mxu0 %v1983
        %v2076 = vpop.f32.mrb[0].mxu0
        %v2077 = vadd.f32 0.0, %v2076
        %v2078 = vpop.f32.mrb[0].mxu0
        %2079 = vdwg.mxu0
        %v2081 = vsel %vm1966, %v1960, 0
        %v2084 = vsel %vm1966, %v1961, 0
        %v2087 = vsel %vm1966, %v1962, 0
        %v2090 = vsel %vm1966, %v1963, 0
        %v2093 = vsel %vm1966, %v1964, 0
        %v2096 = vsel %vm1966, %v1965, 0
        %2098 = vmatprep.subr.mxu0 0.0
        %2099 = vmatpush1.msra.mxu0 %v1830
        %2100 = vmatprep.subr.mxu0 0.0
        %2101 = vmatpush1.msra.mxu0 %v1833
        %2102 = vmatprep.subr.mxu0 0.0
        %2103 = vmatpush1.msra.mxu0 0.0
        %2104 = vmatprep.subr.mxu0 0.0
        %2105 = vmatpush1.msra.mxu0 0.0
        %2106 = vmatprep.subr.mxu0 0.0
        %2107 = vmatpush1.msra.mxu0 0.0
        %2108 = vmatprep.subr.mxu0 0.0
        %2109 = vmatpush1.msra.mxu0 0.0
        %2110 = vmatprep.subr.mxu0 0.0
        %2111 = vmatpush1.msra.mxu0 0.0
        %2112 = vmatprep.subr.mxu0 0.0
        %2113 = vmatpush1.msra.mxu0 0.0
        %2114 = vmatprep.subr.mxu0 0.0
        %2115 = vmatpush1.msra.mxu0 0.0
        %2116 = vmatprep.subr.mxu0 0.0
        %2117 = vmatpush1.msra.mxu0 0.0
        %2118 = vmatprep.subr.mxu0 0.0
        %2119 = vmatpush1.msra.mxu0 0.0
        %2120 = vmatprep.subr.mxu0 0.0
        %2121 = vmatpush1.msra.mxu0 0.0
        %2122 = vmatprep.subr.mxu0 0.0
        %2123 = vmatpush1.msra.mxu0 0.0
        %2124 = vmatprep.subr.mxu0 0.0
        %2125 = vmatpush1.msra.mxu0 0.0
        %2126 = vmatprep.subr.mxu0 0.0
        %2127 = vmatpush1.msra.mxu0 0.0
        %2128 = vmatprep.subr.mxu0 0.0
        %2129 = vmatpush1.msra.mxu0 0.0
        %2130 = vmatprep.subr.mxu0 0.0
        %2131 = vmatpush1.msra.mxu0 0.0
        %2132 = vmatprep.subr.mxu0 0.0
        %2133 = vmatpush1.msra.mxu0 0.0
        %2134 = vmatprep.subr.mxu0 0.0
        %2135 = vmatpush1.msra.mxu0 0.0
        %2136 = vmatprep.subr.mxu0 0.0
        %2137 = vmatpush1.msra.mxu0 0.0
        %2138 = vmatprep.subr.mxu0 0.0
        %2139 = vmatpush1.msra.mxu0 0.0
        %2140 = vmatprep.subr.mxu0 0.0
        %2141 = vmatpush1.msra.mxu0 0.0
        %2142 = vmatprep.subr.mxu0 0.0
        %2143 = vmatpush1.msra.mxu0 0.0
        %2144 = vmatprep.subr.mxu0 0.0
        %2145 = vmatpush1.msra.mxu0 0.0
        %2146 = vmatprep.subr.mxu0 0.0
        %2147 = vmatpush1.msra.mxu0 0.0
        %2148 = vmatprep.subr.mxu0 0.0
        %2149 = vmatpush1.msra.mxu0 0.0
        %2150 = vmatprep.subr.mxu0 0.0
        %2151 = vmatpush1.msra.mxu0 0.0
        %2152 = vmatprep.subr.mxu0 0.0
        %2153 = vmatpush1.msra.mxu0 0.0
        %2154 = vmatprep.subr.mxu0 0.0
        %2155 = vmatpush1.msra.mxu0 0.0
        %2156 = vmatprep.subr.mxu0 0.0
        %2157 = vmatpush1.msra.mxu0 0.0
        %2158 = vmatprep.subr.mxu0 0.0
        %2159 = vmatpush1.msra.mxu0 0.0
        %2160 = vmatprep.subr.mxu0 0.0
        %2161 = vmatpush1.msra.mxu0 0.0
        %2162 = vmatprep.mubr.f32.mxu0 0.0
        %2163 = vmatmul.mubr.f32.gmra.mrb[0].mxu0 %v2081
        %v2164 = vpop.f32.mrb[0].mxu0
        %v2165 = vadd.f32 %v2052, %v2164
        %v2166 = vpop.f32.mrb[0].mxu0
        %2167 = vmatprep.mubr.f32.mxu0 0.0
        %2168 = vmatmul.mubr.f32.gmra.mrb[0].mxu0 %v2084
        %v2169 = vpop.f32.mrb[0].mxu0
        %v2170 = vadd.f32 %v2057, %v2169
        %v2171 = vpop.f32.mrb[0].mxu0
        %2172 = vmatprep.mubr.f32.mxu0 0.0
        %2173 = vmatmul.mubr.f32.gmra.mrb[0].mxu0 %v2087
        %v2174 = vpop.f32.mrb[0].mxu0
        %v2175 = vadd.f32 %v2062, %v2174
        %v2176 = vpop.f32.mrb[0].mxu0
        %2177 = vmatprep.mubr.f32.mxu0 0.0
        %2178 = vmatmul.mubr.f32.gmra.mrb[0].mxu0 %v2090
        %v2179 = vpop.f32.mrb[0].mxu0
        %v2180 = vadd.f32 %v2067, %v2179
        %v2181 = vpop.f32.mrb[0].mxu0
        %2182 = vmatprep.mubr.f32.mxu0 0.0
        %2183 = vmatmul.mubr.f32.gmra.mrb[0].mxu0 %v2093
        %v2184 = vpop.f32.mrb[0].mxu0
        %v2185 = vadd.f32 %v2072, %v2184
        %v2186 = vpop.f32.mrb[0].mxu0
        %2187 = vmatprep.mubr.f32.mxu0 0.0
        %2188 = vmatmul.mubr.f32.gmra.mrb[0].mxu0 %v2096
        %v2189 = vpop.f32.mrb[0].mxu0
        %v2190 = vadd.f32 %v2077, %v2189
        %v2191 = vpop.f32.mrb[0].mxu0
        %2192 = vdwg.mxu0
        %v2193 = vadd.f32 %v2165, %v1938
        %v2194 = vadd.f32 %v2170, %v1941
        %v2195 = vadd.f32 %v2175, %v1946
        %v2196 = vadd.f32 %v2180, %v1949
        %v2197 = vadd.f32 %v2185, %v1954
        %v2198 = vadd.f32 %v2190, %v1957
        %vm2199 = vcmp.ge.f32.partialorder %v2193, 0.0
        %vm2200 = vcmp.ge.f32.partialorder %v2194, 0.0
        %vm2201 = vcmp.ge.f32.partialorder %v2195, 0.0
        %vm2202 = vcmp.ge.f32.partialorder %v2196, 0.0
        %vm2203 = vcmp.ge.f32.partialorder %v2197, 0.0
        %vm2204 = vcmp.ge.f32.partialorder %v2198, 0.0
        %v2205 = vmul.f32 %v2193, 0.2
        %v2206 = vmul.f32 %v2194, 0.2
        %v2207 = vmul.f32 %v2195, 0.2
        %v2208 = vmul.f32 %v2196, 0.2
        %v2209 = vmul.f32 %v2197, 0.2
        %v2210 = vmul.f32 %v2198, 0.2
        %v2211 = vsel %vm2199, %v2193, %v2205
        %v2212 = vsel %vm2200, %v2194, %v2206
        %v2213 = vsel %vm2201, %v2195, %v2207
        %v2214 = vsel %vm2202, %v2196, %v2208
        %v2215 = vsel %vm2203, %v2197, %v2209
        %v2216 = vsel %vm2204, %v2198, %v2210
        %2218 = vset.pattern.permute.xlu0 0
        %2219 = vperm.xlu0 %2218, %v2211
        %v2220 = vpop.permute.xlu0 %2219
        %2223 = vset.pattern.permute.xlu0 0
        %2224 = vperm.xlu0 %2223, %v2212
        %v2225 = vpop.permute.xlu0 %2224
        %2228 = vset.pattern.permute.xlu0 0
        %2229 = vperm.xlu0 %2228, %v2213
        %v2230 = vpop.permute.xlu0 %2229
        %2233 = vset.pattern.permute.xlu0 0
        %2234 = vperm.xlu0 %2233, %v2214
        %v2235 = vpop.permute.xlu0 %2234
        %2238 = vset.pattern.permute.xlu0 0
        %2239 = vperm.xlu0 %2238, %v2215
        %v2240 = vpop.permute.xlu0 %2239
        %2243 = vset.pattern.permute.xlu0 0
        %2244 = vperm.xlu0 %2243, %v2216
        %v2245 = vpop.permute.xlu0 %2244
        %v2247 = vmul.f32 %v2220, %v1336
        %v2248 = vmul.f32 %v2225, %v1337
        %v2249 = vmul.f32 %v2230, %v1338
        %v2250 = vmul.f32 %v2235, %v1339
        %v2251 = vmul.f32 %v2240, %v1340
        %v2252 = vmul.f32 %v2245, %v1341
        %2253 = vset.pattern.permute.xlu0 1
        %2254 = vperm.xlu0 %2253, %v2211
        %v2255 = vpop.permute.xlu0 %2254
        %2257 = vset.pattern.permute.xlu0 1
        %2258 = vperm.xlu0 %2257, %v2212
        %v2259 = vpop.permute.xlu0 %2258
        %2261 = vset.pattern.permute.xlu0 1
        %2262 = vperm.xlu0 %2261, %v2213
        %v2263 = vpop.permute.xlu0 %2262
        %2265 = vset.pattern.permute.xlu0 1
        %2266 = vperm.xlu0 %2265, %v2214
        %v2267 = vpop.permute.xlu0 %2266
        %2269 = vset.pattern.permute.xlu0 1
        %2270 = vperm.xlu0 %2269, %v2215
        %v2271 = vpop.permute.xlu0 %2270
        %2273 = vset.pattern.permute.xlu0 1
        %2274 = vperm.xlu0 %2273, %v2216
        %v2275 = vpop.permute.xlu0 %2274
        %v2277 = vmul.f32 %v2255, %v1336
        %v2278 = vmul.f32 %v2259, %v1337
        %v2279 = vmul.f32 %v2263, %v1338
        %v2280 = vmul.f32 %v2267, %v1339
        %v2281 = vmul.f32 %v2271, %v1340
        %v2282 = vmul.f32 %v2275, %v1341
        %2283 = vset.pattern.permute.xlu0 2
        %2284 = vperm.xlu0 %2283, %v2211
        %v2285 = vpop.permute.xlu0 %2284
        %2287 = vset.pattern.permute.xlu0 2
        %2288 = vperm.xlu0 %2287, %v2212
        %v2289 = vpop.permute.xlu0 %2288
        %2291 = vset.pattern.permute.xlu0 2
        %2292 = vperm.xlu0 %2291, %v2213
        %v2293 = vpop.permute.xlu0 %2292
        %2295 = vset.pattern.permute.xlu0 2
        %2296 = vperm.xlu0 %2295, %v2214
        %v2297 = vpop.permute.xlu0 %2296
        %2299 = vset.pattern.permute.xlu0 2
        %2300 = vperm.xlu0 %2299, %v2215
        %v2301 = vpop.permute.xlu0 %2300
        %2303 = vset.pattern.permute.xlu0 2
        %2304 = vperm.xlu0 %2303, %v2216
        %v2305 = vpop.permute.xlu0 %2304
        %v2307 = vmul.f32 %v2285, %v1336
        %v2308 = vmul.f32 %v2289, %v1337
        %v2309 = vmul.f32 %v2293, %v1338
        %v2310 = vmul.f32 %v2297, %v1339
        %v2311 = vmul.f32 %v2301, %v1340
        %v2312 = vmul.f32 %v2305, %v1341
        %2313 = vset.pattern.permute.xlu0 3
        %2314 = vperm.xlu0 %2313, %v2211
        %v2315 = vpop.permute.xlu0 %2314
        %2317 = vset.pattern.permute.xlu0 3
        %2318 = vperm.xlu0 %2317, %v2212
        %v2319 = vpop.permute.xlu0 %2318
        %2321 = vset.pattern.permute.xlu0 3
        %2322 = vperm.xlu0 %2321, %v2213
        %v2323 = vpop.permute.xlu0 %2322
        %2325 = vset.pattern.permute.xlu0 3
        %2326 = vperm.xlu0 %2325, %v2214
        %v2327 = vpop.permute.xlu0 %2326
        %2329 = vset.pattern.permute.xlu0 3
        %2330 = vperm.xlu0 %2329, %v2215
        %v2331 = vpop.permute.xlu0 %2330
        %2333 = vset.pattern.permute.xlu0 3
        %2334 = vperm.xlu0 %2333, %v2216
        %v2335 = vpop.permute.xlu0 %2334
        %v2337 = vmul.f32 %v2315, %v1336
        %v2338 = vmul.f32 %v2319, %v1337
        %v2339 = vmul.f32 %v2323, %v1338
        %v2340 = vmul.f32 %v2327, %v1339
        %v2341 = vmul.f32 %v2331, %v1340
        %v2342 = vmul.f32 %v2335, %v1341
        %2349 = vrot.lane.b32.xlu0 %v2277, 16
        %v2350 = vpop.permute.xlu0 %2349
        %2351 = vrot.lane.b32.xlu0 %v2278, 16
        %v2352 = vpop.permute.xlu0 %2351
        %2353 = vrot.lane.b32.xlu0 %v2279, 16
        %v2354 = vpop.permute.xlu0 %2353
        %2355 = vrot.lane.b32.xlu0 %v2280, 16
        %v2356 = vpop.permute.xlu0 %2355
        %2357 = vrot.lane.b32.xlu0 %v2281, 16
        %v2358 = vpop.permute.xlu0 %2357
        %2359 = vrot.lane.b32.xlu0 %v2282, 16
        %v2360 = vpop.permute.xlu0 %2359
        %2373 = vrot.lane.b32.xlu0 %v2307, 32
        %v2374 = vpop.permute.xlu0 %2373
        %2375 = vrot.lane.b32.xlu0 %v2308, 32
        %v2376 = vpop.permute.xlu0 %2375
        %2377 = vrot.lane.b32.xlu0 %v2309, 32
        %v2378 = vpop.permute.xlu0 %2377
        %2379 = vrot.lane.b32.xlu0 %v2310, 32
        %v2380 = vpop.permute.xlu0 %2379
        %2381 = vrot.lane.b32.xlu0 %v2311, 32
        %v2382 = vpop.permute.xlu0 %2381
        %2383 = vrot.lane.b32.xlu0 %v2312, 32
        %v2384 = vpop.permute.xlu0 %2383
        %2397 = vrot.lane.b32.xlu0 %v2337, 48
        %v2398 = vpop.permute.xlu0 %2397
        %2399 = vrot.lane.b32.xlu0 %v2338, 48
        %v2400 = vpop.permute.xlu0 %2399
        %2401 = vrot.lane.b32.xlu0 %v2339, 48
        %v2402 = vpop.permute.xlu0 %2401
        %2403 = vrot.lane.b32.xlu0 %v2340, 48
        %v2404 = vpop.permute.xlu0 %2403
        %2405 = vrot.lane.b32.xlu0 %v2341, 48
        %v2406 = vpop.permute.xlu0 %2405
        %2407 = vrot.lane.b32.xlu0 %v2342, 48
        %v2408 = vpop.permute.xlu0 %2407
        %v2415 = vsel %vm1966, %v2247, %v2350
        %v2416 = vsel %vm1966, %v2248, %v2352
        %v2417 = vsel %vm1966, %v2249, %v2354
        %v2418 = vsel %vm1966, %v2250, %v2356
        %v2419 = vsel %vm1966, %v2251, %v2358
        %v2420 = vsel %vm1966, %v2252, %v2360
        %vm2421 = vcmask 261120
        %v2422 = vsel %vm2421, %v2415, %v2374
        %v2423 = vsel %vm2421, %v2416, %v2376
        %v2424 = vsel %vm2421, %v2417, %v2378
        %v2425 = vsel %vm2421, %v2418, %v2380
        %v2426 = vsel %vm2421, %v2419, %v2382
        %v2427 = vsel %vm2421, %v2420, %v2384
        %vm2428 = vcmask 392192
        %v2429 = vsel %vm2428, %v2422, %v2398
        %v2430 = vsel %vm2428, %v2423, %v2400
        %v2431 = vsel %vm2428, %v2424, %v2402
        %v2432 = vsel %vm2428, %v2425, %v2404
        %v2433 = vsel %vm2428, %v2426, %v2406
        %v2434 = vsel %vm2428, %v2427, %v2408
        %v2436 = vsel %vm2428, %v1342, 0
        %v2439 = vsel %vm2428, %v1343, 0
        %2441 = vmatprep.subr.mxu0 0.0
        %2442 = vmatpush1.msra.mxu0 %v2429
        %2443 = vmatprep.subr.mxu0 0.0
        %2444 = vmatpush1.msra.mxu0 %v2430
        %2445 = vmatprep.subr.mxu0 0.0
        %2446 = vmatpush1.msra.mxu0 %v2431
        %2447 = vmatprep.subr.mxu0 0.0
        %2448 = vmatpush1.msra.mxu0 %v2432
        %2449 = vmatprep.subr.mxu0 0.0
        %2450 = vmatpush1.msra.mxu0 %v2433
        %2451 = vmatprep.subr.mxu0 0.0
        %2452 = vmatpush1.msra.mxu0 %v2434
        %2453 = vmatprep.subr.mxu0 0.0
        %2454 = vmatpush1.msra.mxu0 0.0
        %2455 = vmatprep.subr.mxu0 0.0
        %2456 = vmatpush1.msra.mxu0 0.0
        %2457 = vmatprep.subr.mxu0 0.0
        %2458 = vmatpush1.msra.mxu0 0.0
        %2459 = vmatprep.subr.mxu0 0.0
        %2460 = vmatpush1.msra.mxu0 0.0
        %2461 = vmatprep.subr.mxu0 0.0
        %2462 = vmatpush1.msra.mxu0 0.0
        %2463 = vmatprep.subr.mxu0 0.0
        %2464 = vmatpush1.msra.mxu0 0.0
        %2465 = vmatprep.subr.mxu0 0.0
        %2466 = vmatpush1.msra.mxu0 0.0
        %2467 = vmatprep.subr.mxu0 0.0
        %2468 = vmatpush1.msra.mxu0 0.0
        %2469 = vmatprep.subr.mxu0 0.0
        %2470 = vmatpush1.msra.mxu0 0.0
        %2471 = vmatprep.subr.mxu0 0.0
        %2472 = vmatpush1.msra.mxu0 0.0
        %2473 = vmatprep.subr.mxu0 0.0
        %2474 = vmatpush1.msra.mxu0 0.0
        %2475 = vmatprep.subr.mxu0 0.0
        %2476 = vmatpush1.msra.mxu0 0.0
        %2477 = vmatprep.subr.mxu0 0.0
        %2478 = vmatpush1.msra.mxu0 0.0
        %2479 = vmatprep.subr.mxu0 0.0
        %2480 = vmatpush1.msra.mxu0 0.0
        %2481 = vmatprep.subr.mxu0 0.0
        %2482 = vmatpush1.msra.mxu0 0.0
        %2483 = vmatprep.subr.mxu0 0.0
        %2484 = vmatpush1.msra.mxu0 0.0
        %2485 = vmatprep.subr.mxu0 0.0
        %2486 = vmatpush1.msra.mxu0 0.0
        %2487 = vmatprep.subr.mxu0 0.0
        %2488 = vmatpush1.msra.mxu0 0.0
        %2489 = vmatprep.subr.mxu0 0.0
        %2490 = vmatpush1.msra.mxu0 0.0
        %2491 = vmatprep.subr.mxu0 0.0
        %2492 = vmatpush1.msra.mxu0 0.0
        %2493 = vmatprep.subr.mxu0 0.0
        %2494 = vmatpush1.msra.mxu0 0.0
        %2495 = vmatprep.subr.mxu0 0.0
        %2496 = vmatpush1.msra.mxu0 0.0
        %2497 = vmatprep.subr.mxu0 0.0
        %2498 = vmatpush1.msra.mxu0 0.0
        %2499 = vmatprep.subr.mxu0 0.0
        %2500 = vmatpush1.msra.mxu0 0.0
        %2501 = vmatprep.subr.mxu0 0.0
        %2502 = vmatpush1.msra.mxu0 0.0
        %2503 = vmatprep.subr.mxu0 0.0
        %2504 = vmatpush1.msra.mxu0 0.0
        %2505 = vmatprep.mubr.f32.mxu0 0.0
        %2506 = vmatmul.mubr.f32.gmra.mrb[0].mxu0 %v2436
        %v2507 = vpop.f32.mrb[0].mxu0
        %v2508 = vadd.f32 0.0, %v2507
        %v2509 = vpop.f32.mrb[0].mxu0
        %2510 = vmatprep.mubr.f32.mxu0 0.0
        %2511 = vmatmul.mubr.f32.gmra.mrb[0].mxu0 %v2439
        %v2512 = vpop.f32.mrb[0].mxu0
        %v2513 = vadd.f32 0.0, %v2512
        %v2514 = vpop.f32.mrb[0].mxu0
        %2515 = vdwg.mxu0
        %v2516 = vsel %vm1346, %v2508, -1e+30
        %v2517 = vsel %vm1347, %v2513, -1e+30
        %v2518 = vsel %vm1966, %v2516, -inf
        %2519 = vmax.xlane.f32.xlu0 %v2518
        %v2520 = vpop.xlane.xlu0 %2519
        %v2521 = vsel %vm1966, %v2517, -inf
        %2522 = vmax.xlane.f32.xlu0 %v2521
        %v2523 = vpop.xlane.xlu0 %2522
        %v2524 = vsub.f32 %v2516, %v2520
        %v2525 = vsub.f32 %v2517, %v2523
        %v2526 = vmul.f32 %v2524, 1.442695
        %v2527 = vpow.pop %v2526
        %v2528 = vmul.f32 %v2525, 1.442695
        %v2529 = vpow.pop %v2528
        %v2530 = vsel %vm1966, %v2527, 0.0
        %2531 = vadd.xlane.f32.xlu0 %v2530
        %v2532 = vpop.xlane.xlu0 %2531
        %v2533 = vsel %vm1966, %v2529, 0.0
        %2534 = vadd.xlane.f32.xlu0 %v2533
        %v2535 = vpop.xlane.xlu0 %2534
        %v2536 = vrcp.pop %v2532
        %v2537 = vrcp.pop %v2535
        %v2538 = vmul.f32 %v2527, %v2536
        %v2539 = vmul.f32 %v2529, %v2537
        %2542 = vrot.lane.b32.xlu0 %v2508, 112
        %v2543 = vpop.permute.xlu0 %2542
        %2544 = vrot.lane.b32.xlu0 %v2513, 112
        %v2545 = vpop.permute.xlu0 %2544
        %v2548 = vsel %vm1346, %v2543, -1e+30
        %v2549 = vsel %vm1347, %v2545, -1e+30
        %v2550 = vsel %vm1966, %v2548, -inf
        %2551 = vmax.xlane.f32.xlu0 %v2550
        %v2552 = vpop.xlane.xlu0 %2551
        %v2553 = vsel %vm1966, %v2549, -inf
        %2554 = vmax.xlane.f32.xlu0 %v2553
        %v2555 = vpop.xlane.xlu0 %2554
        %v2556 = vsub.f32 %v2548, %v2552
        %v2557 = vsub.f32 %v2549, %v2555
        %v2558 = vmul.f32 %v2556, 1.442695
        %v2559 = vpow.pop %v2558
        %v2560 = vmul.f32 %v2557, 1.442695
        %v2561 = vpow.pop %v2560
        %v2562 = vsel %vm1966, %v2559, 0.0
        %2563 = vadd.xlane.f32.xlu0 %v2562
        %v2564 = vpop.xlane.xlu0 %2563
        %v2565 = vsel %vm1966, %v2561, 0.0
        %2566 = vadd.xlane.f32.xlu0 %v2565
        %v2567 = vpop.xlane.xlu0 %2566
        %v2568 = vrcp.pop %v2564
        %v2569 = vrcp.pop %v2567
        %v2570 = vmul.f32 %v2559, %v2568
        %v2571 = vmul.f32 %v2561, %v2569
        %2572 = vrot.lane.b32.xlu0 %v2508, 96
        %v2573 = vpop.permute.xlu0 %2572
        %2574 = vrot.lane.b32.xlu0 %v2513, 96
        %v2575 = vpop.permute.xlu0 %2574
        %v2578 = vsel %vm1346, %v2573, -1e+30
        %v2579 = vsel %vm1347, %v2575, -1e+30
        %v2580 = vsel %vm1966, %v2578, -inf
        %2581 = vmax.xlane.f32.xlu0 %v2580
        %v2582 = vpop.xlane.xlu0 %2581
        %v2583 = vsel %vm1966, %v2579, -inf
        %2584 = vmax.xlane.f32.xlu0 %v2583
        %v2585 = vpop.xlane.xlu0 %2584
        %v2586 = vsub.f32 %v2578, %v2582
        %v2587 = vsub.f32 %v2579, %v2585
        %v2588 = vmul.f32 %v2586, 1.442695
        %v2589 = vpow.pop %v2588
        %v2590 = vmul.f32 %v2587, 1.442695
        %v2591 = vpow.pop %v2590
        %v2592 = vsel %vm1966, %v2589, 0.0
        %2593 = vadd.xlane.f32.xlu0 %v2592
        %v2594 = vpop.xlane.xlu0 %2593
        %v2595 = vsel %vm1966, %v2591, 0.0
        %2596 = vadd.xlane.f32.xlu0 %v2595
        %v2597 = vpop.xlane.xlu0 %2596
        %v2598 = vrcp.pop %v2594
        %v2599 = vrcp.pop %v2597
        %v2600 = vmul.f32 %v2589, %v2598
        %v2601 = vmul.f32 %v2591, %v2599
        %2602 = vrot.lane.b32.xlu0 %v2508, 80
        %v2603 = vpop.permute.xlu0 %2602
        %2604 = vrot.lane.b32.xlu0 %v2513, 80
        %v2605 = vpop.permute.xlu0 %2604
        %v2608 = vsel %vm1346, %v2603, -1e+30
        %v2609 = vsel %vm1347, %v2605, -1e+30
        %v2610 = vsel %vm1966, %v2608, -inf
        %2611 = vmax.xlane.f32.xlu0 %v2610
        %v2612 = vpop.xlane.xlu0 %2611
        %v2613 = vsel %vm1966, %v2609, -inf
        %2614 = vmax.xlane.f32.xlu0 %v2613
        %v2615 = vpop.xlane.xlu0 %2614
        %v2616 = vsub.f32 %v2608, %v2612
        %v2617 = vsub.f32 %v2609, %v2615
        %v2618 = vmul.f32 %v2616, 1.442695
        %v2619 = vpow.pop %v2618
        %v2620 = vmul.f32 %v2617, 1.442695
        %v2621 = vpow.pop %v2620
        %v2622 = vsel %vm1966, %v2619, 0.0
        %2623 = vadd.xlane.f32.xlu0 %v2622
        %v2624 = vpop.xlane.xlu0 %2623
        %v2625 = vsel %vm1966, %v2621, 0.0
        %2626 = vadd.xlane.f32.xlu0 %v2625
        %v2627 = vpop.xlane.xlu0 %2626
        %v2628 = vrcp.pop %v2624
        %v2629 = vrcp.pop %v2627
        %v2630 = vmul.f32 %v2619, %v2628
        %v2631 = vmul.f32 %v2621, %v2629
        %2634 = vrot.lane.b32.xlu0 %v2570, 16
        %v2635 = vpop.permute.xlu0 %2634
        %2636 = vrot.lane.b32.xlu0 %v2571, 16
        %v2637 = vpop.permute.xlu0 %2636
        %2642 = vrot.lane.b32.xlu0 %v2600, 32
        %v2643 = vpop.permute.xlu0 %2642
        %2644 = vrot.lane.b32.xlu0 %v2601, 32
        %v2645 = vpop.permute.xlu0 %2644
        %2650 = vrot.lane.b32.xlu0 %v2630, 48
        %v2651 = vpop.permute.xlu0 %2650
        %2652 = vrot.lane.b32.xlu0 %v2631, 48
        %v2653 = vpop.permute.xlu0 %2652
        %v2656 = vsel %vm1966, %v2538, %v2635
        %v2657 = vsel %vm1966, %v2539, %v2637
        %v2658 = vsel %vm2421, %v2656, %v2643
        %v2659 = vsel %vm2421, %v2657, %v2645
        %v2660 = vsel %vm2428, %v2658, %v2651
        %v2661 = vsel %vm2428, %v2659, %v2653
        %vm2662 = vcmask 523264
        %v2664 = vsel %vm2662, %v2660, 0
        %v2667 = vsel %vm2662, %v2661, 0
        %2669 = vmatprep.subr.mxu0 0.0
        %2670 = vmatpush1.msra.mxu0 %v1575
        %2671 = vmatprep.subr.mxu0 0.0
        %2672 = vmatpush1.msra.mxu0 %v1579
        %2673 = vmatprep.subr.mxu0 0.0
        %2674 = vmatpush1.msra.mxu0 %v1577
        %2675 = vmatprep.subr.mxu0 0.0
        %2676 = vmatpush1.msra.mxu0 %v1581
        %2677 = vmatprep.subr.mxu0 0.0
        %2678 = vmatpush1.msra.mxu0 %v1618
        %2679 = vmatprep.subr.mxu0 0.0
        %2680 = vmatpush1.msra.mxu0 %v1622
        %2681 = vmatprep.subr.mxu0 0.0
        %2682 = vmatpush1.msra.mxu0 %v1620
        %2683 = vmatprep.subr.mxu0 0.0
        %2684 = vmatpush1.msra.mxu0 %v1624
        %2685 = vmatprep.subr.mxu0 0.0
        %2686 = vmatpush1.msra.mxu0 0.0
        %2687 = vmatprep.subr.mxu0 0.0
        %2688 = vmatpush1.msra.mxu0 0.0
        %2689 = vmatprep.subr.mxu0 0.0
        %2690 = vmatpush1.msra.mxu0 0.0
        %2691 = vmatprep.subr.mxu0 0.0
        %2692 = vmatpush1.msra.mxu0 0.0
        %2693 = vmatprep.subr.mxu0 0.0
        %2694 = vmatpush1.msra.mxu0 0.0
        %2695 = vmatprep.subr.mxu0 0.0
        %2696 = vmatpush1.msra.mxu0 0.0
        %2697 = vmatprep.subr.mxu0 0.0
        %2698 = vmatpush1.msra.mxu0 0.0
        %2699 = vmatprep.subr.mxu0 0.0
        %2700 = vmatpush1.msra.mxu0 0.0
        %2701 = vmatprep.subr.mxu0 0.0
        %2702 = vmatpush1.msra.mxu0 0.0
        %2703 = vmatprep.subr.mxu0 0.0
        %2704 = vmatpush1.msra.mxu0 0.0
        %2705 = vmatprep.subr.mxu0 0.0
        %2706 = vmatpush1.msra.mxu0 0.0
        %2707 = vmatprep.subr.mxu0 0.0
        %2708 = vmatpush1.msra.mxu0 0.0
        %2709 = vmatprep.subr.mxu0 0.0
        %2710 = vmatpush1.msra.mxu0 0.0
        %2711 = vmatprep.subr.mxu0 0.0
        %2712 = vmatpush1.msra.mxu0 0.0
        %2713 = vmatprep.subr.mxu0 0.0
        %2714 = vmatpush1.msra.mxu0 0.0
        %2715 = vmatprep.subr.mxu0 0.0
        %2716 = vmatpush1.msra.mxu0 0.0
        %2717 = vmatprep.subr.mxu0 0.0
        %2718 = vmatpush1.msra.mxu0 0.0
        %2719 = vmatprep.subr.mxu0 0.0
        %2720 = vmatpush1.msra.mxu0 0.0
        %2721 = vmatprep.subr.mxu0 0.0
        %2722 = vmatpush1.msra.mxu0 0.0
        %2723 = vmatprep.subr.mxu0 0.0
        %2724 = vmatpush1.msra.mxu0 0.0
        %2725 = vmatprep.subr.mxu0 0.0
        %2726 = vmatpush1.msra.mxu0 0.0
        %2727 = vmatprep.subr.mxu0 0.0
        %2728 = vmatpush1.msra.mxu0 0.0
        %2729 = vmatprep.subr.mxu0 0.0
        %2730 = vmatpush1.msra.mxu0 0.0
        %2731 = vmatprep.subr.mxu0 0.0
        %2732 = vmatpush1.msra.mxu0 0.0
        %2733 = vmatprep.mubr.f32.mxu0 0.0
        %2734 = vmatmul.mubr.f32.gmra.mrb[0].mxu0 %v2664
        %v2735 = vpop.f32.mrb[0].mxu0
        %v2736 = vadd.f32 0.0, %v2735
        %v2737 = vpop.f32.mrb[0].mxu0
        %2738 = vmatprep.mubr.f32.mxu0 0.0
        %2739 = vmatmul.mubr.f32.gmra.mrb[0].mxu0 %v2667
        %v2740 = vpop.f32.mrb[0].mxu0
        %v2741 = vadd.f32 0.0, %v2740
        %v2742 = vpop.f32.mrb[0].mxu0
        %2743 = vdwg.mxu0
        %v2744 = vmul.f32 %v2736, 0.25
        %v2745 = vmul.f32 %v2741, 0.25
        %v2746 = vld [vmem:[%s792] sm:$0x1]
        %v2748 = vlaneseq
        %v2749 = vshrl.u32 %v2748, 7
        %v2750 = vsub.s32 0, %v2749
        %v2751 = vrot.slane %v2746, %v2750
        %v2753 = vadd.f32 %v2744, %v2751
        %v2754 = vadd.f32 %v2745, %v2751
        %v2756 = vsel %vm1966, 1.0, 0
        %2758 = vmatprep.subr.mxu0 0.0
        %2759 = vmatpush1.msra.mxu0 %v2753
        %2760 = vmatprep.subr.mxu0 0.0
        %2761 = vmatpush1.msra.mxu0 %v2754
        %2762 = vmatprep.subr.mxu0 0.0
        %2763 = vmatpush1.msra.mxu0 0.0
        %2764 = vmatprep.subr.mxu0 0.0
        %2765 = vmatpush1.msra.mxu0 0.0
        %2766 = vmatprep.subr.mxu0 0.0
        %2767 = vmatpush1.msra.mxu0 0.0
        %2768 = vmatprep.subr.mxu0 0.0
        %2769 = vmatpush1.msra.mxu0 0.0
        %2770 = vmatprep.subr.mxu0 0.0
        %2771 = vmatpush1.msra.mxu0 0.0
        %2772 = vmatprep.subr.mxu0 0.0
        %2773 = vmatpush1.msra.mxu0 0.0
        %2774 = vmatprep.subr.mxu0 0.0
        %2775 = vmatpush1.msra.mxu0 0.0
        %2776 = vmatprep.subr.mxu0 0.0
        %2777 = vmatpush1.msra.mxu0 0.0
        %2778 = vmatprep.subr.mxu0 0.0
        %2779 = vmatpush1.msra.mxu0 0.0
        %2780 = vmatprep.subr.mxu0 0.0
        %2781 = vmatpush1.msra.mxu0 0.0
        %2782 = vmatprep.subr.mxu0 0.0
        %2783 = vmatpush1.msra.mxu0 0.0
        %2784 = vmatprep.subr.mxu0 0.0
        %2785 = vmatpush1.msra.mxu0 0.0
        %2786 = vmatprep.subr.mxu0 0.0
        %2787 = vmatpush1.msra.mxu0 0.0
        %2788 = vmatprep.subr.mxu0 0.0
        %2789 = vmatpush1.msra.mxu0 0.0
        %2790 = vmatprep.subr.mxu0 0.0
        %2791 = vmatpush1.msra.mxu0 0.0
        %2792 = vmatprep.subr.mxu0 0.0
        %2793 = vmatpush1.msra.mxu0 0.0
        %2794 = vmatprep.subr.mxu0 0.0
        %2795 = vmatpush1.msra.mxu0 0.0
        %2796 = vmatprep.subr.mxu0 0.0
        %2797 = vmatpush1.msra.mxu0 0.0
        %2798 = vmatprep.subr.mxu0 0.0
        %2799 = vmatpush1.msra.mxu0 0.0
        %2800 = vmatprep.subr.mxu0 0.0
        %2801 = vmatpush1.msra.mxu0 0.0
        %2802 = vmatprep.subr.mxu0 0.0
        %2803 = vmatpush1.msra.mxu0 0.0
        %2804 = vmatprep.subr.mxu0 0.0
        %2805 = vmatpush1.msra.mxu0 0.0
        %2806 = vmatprep.subr.mxu0 0.0
        %2807 = vmatpush1.msra.mxu0 0.0
        %2808 = vmatprep.subr.mxu0 0.0
        %2809 = vmatpush1.msra.mxu0 0.0
        %2810 = vmatprep.subr.mxu0 0.0
        %2811 = vmatpush1.msra.mxu0 0.0
        %2812 = vmatprep.subr.mxu0 0.0
        %2813 = vmatpush1.msra.mxu0 0.0
        %2814 = vmatprep.subr.mxu0 0.0
        %2815 = vmatpush1.msra.mxu0 0.0
        %2816 = vmatprep.subr.mxu0 0.0
        %2817 = vmatpush1.msra.mxu0 0.0
        %2818 = vmatprep.subr.mxu0 0.0
        %2819 = vmatpush1.msra.mxu0 0.0
        %2820 = vmatprep.subr.mxu0 0.0
        %2821 = vmatpush1.msra.mxu0 0.0
        %2822 = vmatprep.mubr.f32.mxu0 0.0
        %2823 = vmatmul.mubr.f32.gmra.mrb[0].mxu0 %v2756
        %v2824 = vpop.f32.mrb[0].mxu0
        %v2825 = vadd.f32 0.0, %v2824
        %v2826 = vpop.f32.mrb[0].mxu0
        %2827 = vdwg.mxu0
        %v2828 = vmul.f32 %v2825, 0.0625
        %v2829 = vlaneseq
        %v2830 = vshrl.u32 %v2829, 7
        %v2831 = vsub.s32 0, %v2830
        %v2832 = vrot.slane %v2828, %v2831
        %v2833 = vsub.f32 %v2753, %v2832
        %v2834 = vsub.f32 %v2754, %v2832
        %v2835 = vmul.f32 %v2833, %v2833
        %v2836 = vmul.f32 %v2834, %v2834
        %2837 = vmatprep.subr.mxu0 0.0
        %2838 = vmatpush1.msra.mxu0 %v2835
        %2839 = vmatprep.subr.mxu0 0.0
        %2840 = vmatpush1.msra.mxu0 %v2836
        %2841 = vmatprep.subr.mxu0 0.0
        %2842 = vmatpush1.msra.mxu0 0.0
        %2843 = vmatprep.subr.mxu0 0.0
        %2844 = vmatpush1.msra.mxu0 0.0
        %2845 = vmatprep.subr.mxu0 0.0
        %2846 = vmatpush1.msra.mxu0 0.0
        %2847 = vmatprep.subr.mxu0 0.0
        %2848 = vmatpush1.msra.mxu0 0.0
        %2849 = vmatprep.subr.mxu0 0.0
        %2850 = vmatpush1.msra.mxu0 0.0
        %2851 = vmatprep.subr.mxu0 0.0
        %2852 = vmatpush1.msra.mxu0 0.0
        %2853 = vmatprep.subr.mxu0 0.0
        %2854 = vmatpush1.msra.mxu0 0.0
        %2855 = vmatprep.subr.mxu0 0.0
        %2856 = vmatpush1.msra.mxu0 0.0
        %2857 = vmatprep.subr.mxu0 0.0
        %2858 = vmatpush1.msra.mxu0 0.0
        %2859 = vmatprep.subr.mxu0 0.0
        %2860 = vmatpush1.msra.mxu0 0.0
        %2861 = vmatprep.subr.mxu0 0.0
        %2862 = vmatpush1.msra.mxu0 0.0
        %2863 = vmatprep.subr.mxu0 0.0
        %2864 = vmatpush1.msra.mxu0 0.0
        %2865 = vmatprep.subr.mxu0 0.0
        %2866 = vmatpush1.msra.mxu0 0.0
        %2867 = vmatprep.subr.mxu0 0.0
        %2868 = vmatpush1.msra.mxu0 0.0
        %2869 = vmatprep.subr.mxu0 0.0
        %2870 = vmatpush1.msra.mxu0 0.0
        %2871 = vmatprep.subr.mxu0 0.0
        %2872 = vmatpush1.msra.mxu0 0.0
        %2873 = vmatprep.subr.mxu0 0.0
        %2874 = vmatpush1.msra.mxu0 0.0
        %2875 = vmatprep.subr.mxu0 0.0
        %2876 = vmatpush1.msra.mxu0 0.0
        %2877 = vmatprep.subr.mxu0 0.0
        %2878 = vmatpush1.msra.mxu0 0.0
        %2879 = vmatprep.subr.mxu0 0.0
        %2880 = vmatpush1.msra.mxu0 0.0
        %2881 = vmatprep.subr.mxu0 0.0
        %2882 = vmatpush1.msra.mxu0 0.0
        %2883 = vmatprep.subr.mxu0 0.0
        %2884 = vmatpush1.msra.mxu0 0.0
        %2885 = vmatprep.subr.mxu0 0.0
        %2886 = vmatpush1.msra.mxu0 0.0
        %2887 = vmatprep.subr.mxu0 0.0
        %2888 = vmatpush1.msra.mxu0 0.0
        %2889 = vmatprep.subr.mxu0 0.0
        %2890 = vmatpush1.msra.mxu0 0.0
        %2891 = vmatprep.subr.mxu0 0.0
        %2892 = vmatpush1.msra.mxu0 0.0
        %2893 = vmatprep.subr.mxu0 0.0
        %2894 = vmatpush1.msra.mxu0 0.0
        %2895 = vmatprep.subr.mxu0 0.0
        %2896 = vmatpush1.msra.mxu0 0.0
        %2897 = vmatprep.subr.mxu0 0.0
        %2898 = vmatpush1.msra.mxu0 0.0
        %2899 = vmatprep.subr.mxu0 0.0
        %2900 = vmatpush1.msra.mxu0 0.0
        %2901 = vmatprep.mubr.f32.mxu0 0.0
        %2902 = vmatmul.mubr.f32.gmra.mrb[0].mxu0 %v2756
        %v2903 = vpop.f32.mrb[0].mxu0
        %v2904 = vadd.f32 0.0, %v2903
        %v2905 = vpop.f32.mrb[0].mxu0
        %2906 = vdwg.mxu0
        %v2907 = vmul.f32 %v2904, 0.0625
        %v2908 = vadd.f32 %v2907, 1e-05
        %v2909 = vrsqrt.pop %v2908
        %v2910 = vlaneseq
        %v2911 = vshrl.u32 %v2910, 7
        %v2912 = vsub.s32 0, %v2911
        %v2913 = vrot.slane %v2909, %v2912
        %v2914 = vmul.f32 %v2833, %v2913
        %v2915 = vmul.f32 %v2834, %v2913
        %v2916 = vld [vmem:[%s795] sm:$0x1]
        %v2918 = vlaneseq
        %v2919 = vshrl.u32 %v2918, 7
        %v2920 = vsub.s32 0, %v2919
        %v2921 = vrot.slane %v2916, %v2920
        %v2923 = vmul.f32 %v2914, %v2921
        %v2924 = vmul.f32 %v2915, %v2921
        %v2925 = vld [vmem:[%s798] sm:$0x1]
        %v2927 = vlaneseq
        %v2928 = vshrl.u32 %v2927, 7
        %v2929 = vsub.s32 0, %v2928
        %v2930 = vrot.slane %v2925, %v2929
        %v2932 = vadd.f32 %v2923, %v2930
        %v2933 = vadd.f32 %v2924, %v2930
        %v2934 = vmax.f32 %v2932, 0.0
        %v2935 = vmax.f32 %v2933, 0.0
        %v2936 = vadd.f32 %v2934, %v1333
        %v2937 = vadd.f32 %v2935, %v1334
        %2938 = vst [vmem:[#allocation2] sm:$0xff] %v2936
        %2939 = vst [vmem:[#allocation2 + $0x8] sm:$0xff] %v2937
        %p2940 = scmp.eq.s32.totalorder %s35, 2
        // Predicated region
        $region117: #{gnn_encoder_forward.1} parent=111 // pred_check
          %p2941 = pneg %p2940
        $region118: #{gnn_encoder_forward.1} parent=111 // pred_check_branch
          %2943 = sbr.rel (%p2941) target = $region120
        $region119: #{gnn_encoder_forward.1} parent=111 // pred_region
          %v2944 = vld [vmem:[%s16] sm:$0xff]
          %v2945 = vld [vmem:[%s16 + $0x8] sm:$0xff]
          %v2946 = vld [vmem:[%s16 + $0x10] sm:$0xff]
          %v2947 = vld [vmem:[%s16 + $0x18] sm:$0xff]
          %v2948 = vld [vmem:[%s16 + $0x20] sm:$0xff]
          %v2949 = vld [vmem:[%s16 + $0x28] sm:$0xff]
          %v2950 = vld [vmem:[%s16 + $0x30] sm:$0xff]
          %v2951 = vld [vmem:[%s16 + $0x38] sm:$0xff]
          %v2952 = vld [vmem:[%s16 + $0x40] sm:$0xff]
          %v2953 = vld [vmem:[%s16 + $0x48] sm:$0xff]
          %v2954 = vld [vmem:[%s16 + $0x50] sm:$0xff]
          %v2955 = vld [vmem:[%s16 + $0x58] sm:$0xff]
          %v2956 = vld [vmem:[%s16 + $0x60] sm:$0xff]
          %v2957 = vld [vmem:[%s16 + $0x68] sm:$0xff]
          %v2958 = vld [vmem:[%s16 + $0x70] sm:$0xff]
          %v2959 = vld [vmem:[%s16 + $0x78] sm:$0xff]
          %v2960 = vld [vmem:[%s16 + $0x80] sm:$0xff]
          %v2961 = vld [vmem:[%s16 + $0x88] sm:$0xff]
          %v2962 = vld [vmem:[%s16 + $0x90] sm:$0xff]
          %v2963 = vld [vmem:[%s16 + $0x98] sm:$0xff]
          %v2964 = vld [vmem:[%s16 + $0xa0] sm:$0xff]
          %v2965 = vld [vmem:[%s16 + $0xa8] sm:$0xff]
          %v2966 = vld [vmem:[%s16 + $0xb0] sm:$0xff]
          %v2967 = vld [vmem:[%s16 + $0xb8] sm:$0xff]
          %v2968 = vld [vmem:[%s16 + $0xc0] sm:$0xff]
          %v2969 = vld [vmem:[%s16 + $0xc8] sm:$0xff]
          %v2970 = vld [vmem:[%s16 + $0xd0] sm:$0xff]
          %v2971 = vld [vmem:[%s16 + $0xd8] sm:$0xff]
          %v2972 = vld [vmem:[%s16 + $0xe0] sm:$0xff]
          %v2973 = vld [vmem:[%s16 + $0xe8] sm:$0xff]
          %v2974 = vld [vmem:[%s16 + $0xf0] sm:$0xff]
          %v2975 = vld [vmem:[%s16 + $0xf8] sm:$0xff]
          %v2976 = vld [vmem:[%s16 + $0x100] sm:$0xff]
          %v2977 = vld [vmem:[%s16 + $0x108] sm:$0xff]
          %v2978 = vld [vmem:[%s16 + $0x110] sm:$0xff]
          %v2979 = vld [vmem:[%s16 + $0x118] sm:$0xff]
          %v2980 = vld [vmem:[%s16 + $0x120] sm:$0xff]
          %v2981 = vld [vmem:[%s16 + $0x128] sm:$0xff]
          %v2982 = vld [vmem:[%s16 + $0x130] sm:$0xff]
          %v2983 = vld [vmem:[%s16 + $0x138] sm:$0xff]
          %v2984 = vld [vmem:[%s16 + $0x140] sm:$0xff]
          %v2985 = vld [vmem:[%s16 + $0x148] sm:$0xff]
          %v2986 = vld [vmem:[%s16 + $0x150] sm:$0xff]
          %v2987 = vld [vmem:[%s16 + $0x158] sm:$0xff]
          %v2988 = vld [vmem:[%s16 + $0x160] sm:$0xff]
          %v2989 = vld [vmem:[%s16 + $0x168] sm:$0xff]
          %v2990 = vld [vmem:[%s16 + $0x170] sm:$0xff]
          %v2991 = vld [vmem:[%s16 + $0x178] sm:$0xff]
          %v2992 = vld [vmem:[%s16 + $0x180] sm:$0xff]
          %v2993 = vld [vmem:[%s16 + $0x188] sm:$0xff]
          %v2994 = vld [vmem:[%s16 + $0x190] sm:$0xff]
          %v2995 = vld [vmem:[%s16 + $0x198] sm:$0xff]
          %v2996 = vld [vmem:[%s16 + $0x1a0] sm:$0xff]
          %v2997 = vld [vmem:[%s16 + $0x1a8] sm:$0xff]
          %v2998 = vld [vmem:[%s16 + $0x1b0] sm:$0xff]
          %v2999 = vld [vmem:[%s16 + $0x1b8] sm:$0xff]
          %v3000 = vld [vmem:[%s16 + $0x1c0] sm:$0xff]
          %v3001 = vld [vmem:[%s16 + $0x1c8] sm:$0xff]
          %v3002 = vld [vmem:[%s16 + $0x1d0] sm:$0xff]
          %v3003 = vld [vmem:[%s16 + $0x1d8] sm:$0xff]
          %v3004 = vld [vmem:[%s16 + $0x1e0] sm:$0xff]
          %v3005 = vld [vmem:[%s16 + $0x1e8] sm:$0xff]
          %v3006 = vld [vmem:[%s16 + $0x1f0] sm:$0xff]
          %v3007 = vld [vmem:[%s16 + $0x1f8] sm:$0xff]
          %v3008 = vld [vmem:[%s16 + $0x200] sm:$0xff]
          %v3009 = vld [vmem:[%s16 + $0x208] sm:$0xff]
          %v3010 = vld [vmem:[%s16 + $0x210] sm:$0xff]
          %v3011 = vld [vmem:[%s16 + $0x218] sm:$0xff]
          %v3012 = vld [vmem:[%s16 + $0x220] sm:$0xff]
          %v3013 = vld [vmem:[%s16 + $0x228] sm:$0xff]
          %v3014 = vld [vmem:[%s16 + $0x230] sm:$0xff]
          %v3015 = vld [vmem:[%s16 + $0x238] sm:$0xff]
          %v3016 = vld [vmem:[%s16 + $0x240] sm:$0xff]
          %v3017 = vld [vmem:[%s16 + $0x248] sm:$0xff]
          %v3018 = vld [vmem:[%s16 + $0x250] sm:$0xff]
          %v3019 = vld [vmem:[%s16 + $0x258] sm:$0xff]
          %v3020 = vld [vmem:[%s16 + $0x260] sm:$0xff]
          %v3021 = vld [vmem:[%s16 + $0x268] sm:$0xff]
          %v3022 = vld [vmem:[%s16 + $0x270] sm:$0xff]
          %v3023 = vld [vmem:[%s16 + $0x278] sm:$0xff]
          %v3024 = vld [vmem:[%s16 + $0x280] sm:$0xff]
          %v3025 = vld [vmem:[%s16 + $0x288] sm:$0xff]
          %v3026 = vld [vmem:[%s16 + $0x290] sm:$0xff]
          %v3027 = vld [vmem:[%s16 + $0x298] sm:$0xff]
          %v3028 = vld [vmem:[%s16 + $0x2a0] sm:$0xff]
          %v3029 = vld [vmem:[%s16 + $0x2a8] sm:$0xff]
          %v3030 = vld [vmem:[%s16 + $0x2b0] sm:$0xff]
          %v3031 = vld [vmem:[%s16 + $0x2b8] sm:$0xff]
          %v3032 = vld [vmem:[%s16 + $0x2c0] sm:$0xff]
          %v3033 = vld [vmem:[%s16 + $0x2c8] sm:$0xff]
          %v3034 = vld [vmem:[%s16 + $0x2d0] sm:$0xff]
          %v3035 = vld [vmem:[%s16 + $0x2d8] sm:$0xff]
          %v3036 = vld [vmem:[%s16 + $0x2e0] sm:$0xff]
          %v3037 = vld [vmem:[%s16 + $0x2e8] sm:$0xff]
          %v3038 = vld [vmem:[%s16 + $0x2f0] sm:$0xff]
          %v3039 = vld [vmem:[%s16 + $0x2f8] sm:$0xff]
          %v3040 = vld [vmem:[%s16 + $0x300] sm:$0xff]
          %v3041 = vld [vmem:[%s16 + $0x308] sm:$0xff]
          %v3042 = vld [vmem:[%s16 + $0x310] sm:$0xff]
          %v3043 = vld [vmem:[%s16 + $0x318] sm:$0xff]
          %v3044 = vld [vmem:[%s16 + $0x320] sm:$0xff]
          %v3045 = vld [vmem:[%s16 + $0x328] sm:$0xff]
          %v3046 = vld [vmem:[%s16 + $0x330] sm:$0xff]
          %v3047 = vld [vmem:[%s16 + $0x338] sm:$0xff]
          %v3048 = vld [vmem:[%s16 + $0x340] sm:$0xff]
          %v3049 = vld [vmem:[%s16 + $0x348] sm:$0xff]
          %v3050 = vld [vmem:[%s16 + $0x350] sm:$0xff]
          %v3051 = vld [vmem:[%s16 + $0x358] sm:$0xff]
          %v3052 = vld [vmem:[%s16 + $0x360] sm:$0xff]
          %v3053 = vld [vmem:[%s16 + $0x368] sm:$0xff]
          %v3054 = vld [vmem:[%s16 + $0x370] sm:$0xff]
          %v3055 = vld [vmem:[%s16 + $0x378] sm:$0xff]
          %v3056 = vld [vmem:[%s16 + $0x380] sm:$0xff]
          %v3057 = vld [vmem:[%s16 + $0x388] sm:$0xff]
          %v3058 = vld [vmem:[%s16 + $0x390] sm:$0xff]
          %v3059 = vld [vmem:[%s16 + $0x398] sm:$0xff]
          %v3060 = vld [vmem:[%s16 + $0x3a0] sm:$0xff]
          %v3061 = vld [vmem:[%s16 + $0x3a8] sm:$0xff]
          %v3062 = vld [vmem:[%s16 + $0x3b0] sm:$0xff]
          %v3063 = vld [vmem:[%s16 + $0x3b8] sm:$0xff]
          %v3064 = vld [vmem:[%s16 + $0x3c0] sm:$0xff]
          %v3065 = vld [vmem:[%s16 + $0x3c8] sm:$0xff]
          %v3066 = vld [vmem:[%s16 + $0x3d0] sm:$0xff]
          %v3067 = vld [vmem:[%s16 + $0x3d8] sm:$0xff]
          %v3068 = vld [vmem:[%s16 + $0x3e0] sm:$0xff]
          %v3069 = vld [vmem:[%s16 + $0x3e8] sm:$0xff]
          %v3070 = vld [vmem:[%s16 + $0x3f0] sm:$0xff]
          %v3071 = vld [vmem:[%s16 + $0x3f8] sm:$0xff]
          %v3072 = vld [vmem:[%s17] sm:$0xff]
          %v3073 = vld [vmem:[%s17 + $0x8] sm:$0xff]
          %v3074 = vld [vmem:[%s17 + $0x10] sm:$0xff]
          %v3075 = vld [vmem:[%s17 + $0x18] sm:$0xff]
          %v3076 = vld [vmem:[%s17 + $0x20] sm:$0xff]
          %v3077 = vld [vmem:[%s17 + $0x28] sm:$0xff]
          %v3078 = vld [vmem:[%s17 + $0x30] sm:$0xff]
          %v3079 = vld [vmem:[%s17 + $0x38] sm:$0xff]
          %v3080 = vld [vmem:[%s17 + $0x40] sm:$0xff]
          %v3081 = vld [vmem:[%s17 + $0x48] sm:$0xff]
          %v3082 = vld [vmem:[%s17 + $0x50] sm:$0xff]
          %v3083 = vld [vmem:[%s17 + $0x58] sm:$0xff]
          %v3084 = vld [vmem:[%s17 + $0x60] sm:$0xff]
          %v3085 = vld [vmem:[%s17 + $0x68] sm:$0xff]
          %v3086 = vld [vmem:[%s17 + $0x70] sm:$0xff]
          %v3087 = vld [vmem:[%s17 + $0x78] sm:$0xff]
          %v3088 = vld [vmem:[%s17 + $0x80] sm:$0xff]
          %v3089 = vld [vmem:[%s17 + $0x88] sm:$0xff]
          %v3090 = vld [vmem:[%s17 + $0x90] sm:$0xff]
          %v3091 = vld [vmem:[%s17 + $0x98] sm:$0xff]
          %v3092 = vld [vmem:[%s17 + $0xa0] sm:$0xff]
          %v3093 = vld [vmem:[%s17 + $0xa8] sm:$0xff]
          %v3094 = vld [vmem:[%s17 + $0xb0] sm:$0xff]
          %v3095 = vld [vmem:[%s17 + $0xb8] sm:$0xff]
          %v3096 = vld [vmem:[%s17 + $0xc0] sm:$0xff]
          %v3097 = vld [vmem:[%s17 + $0xc8] sm:$0xff]
          %v3098 = vld [vmem:[%s17 + $0xd0] sm:$0xff]
          %v3099 = vld [vmem:[%s17 + $0xd8] sm:$0xff]
          %v3100 = vld [vmem:[%s17 + $0xe0] sm:$0xff]
          %v3101 = vld [vmem:[%s17 + $0xe8] sm:$0xff]
          %v3102 = vld [vmem:[%s17 + $0xf0] sm:$0xff]
          %v3103 = vld [vmem:[%s17 + $0xf8] sm:$0xff]
          %v3104 = vld [vmem:[%s17 + $0x100] sm:$0xff]
          %v3105 = vld [vmem:[%s17 + $0x108] sm:$0xff]
          %v3106 = vld [vmem:[%s17 + $0x110] sm:$0xff]
          %v3107 = vld [vmem:[%s17 + $0x118] sm:$0xff]
          %v3108 = vld [vmem:[%s17 + $0x120] sm:$0xff]
          %v3109 = vld [vmem:[%s17 + $0x128] sm:$0xff]
          %v3110 = vld [vmem:[%s17 + $0x130] sm:$0xff]
          %v3111 = vld [vmem:[%s17 + $0x138] sm:$0xff]
          %v3112 = vld [vmem:[%s17 + $0x140] sm:$0xff]
          %v3113 = vld [vmem:[%s17 + $0x148] sm:$0xff]
          %v3114 = vld [vmem:[%s17 + $0x150] sm:$0xff]
          %v3115 = vld [vmem:[%s17 + $0x158] sm:$0xff]
          %v3116 = vld [vmem:[%s17 + $0x160] sm:$0xff]
          %v3117 = vld [vmem:[%s17 + $0x168] sm:$0xff]
          %v3118 = vld [vmem:[%s17 + $0x170] sm:$0xff]
          %v3119 = vld [vmem:[%s17 + $0x178] sm:$0xff]
          %v3120 = vld [vmem:[%s17 + $0x180] sm:$0xff]
          %v3121 = vld [vmem:[%s17 + $0x188] sm:$0xff]
          %v3122 = vld [vmem:[%s17 + $0x190] sm:$0xff]
          %v3123 = vld [vmem:[%s17 + $0x198] sm:$0xff]
          %v3124 = vld [vmem:[%s17 + $0x1a0] sm:$0xff]
          %v3125 = vld [vmem:[%s17 + $0x1a8] sm:$0xff]
          %v3126 = vld [vmem:[%s17 + $0x1b0] sm:$0xff]
          %v3127 = vld [vmem:[%s17 + $0x1b8] sm:$0xff]
          %v3128 = vld [vmem:[%s17 + $0x1c0] sm:$0xff]
          %v3129 = vld [vmem:[%s17 + $0x1c8] sm:$0xff]
          %v3130 = vld [vmem:[%s17 + $0x1d0] sm:$0xff]
          %v3131 = vld [vmem:[%s17 + $0x1d8] sm:$0xff]
          %v3132 = vld [vmem:[%s17 + $0x1e0] sm:$0xff]
          %v3133 = vld [vmem:[%s17 + $0x1e8] sm:$0xff]
          %v3134 = vld [vmem:[%s17 + $0x1f0] sm:$0xff]
          %v3135 = vld [vmem:[%s17 + $0x1f8] sm:$0xff]
          %3136 = vmatprep.subr.mxu0 %v3073
          %3137 = vmatpush1.msra.mxu0 %v3072
          %3138 = vmatprep.subr.mxu0 %v3077
          %3139 = vmatpush1.msra.mxu0 %v3076
          %3140 = vmatprep.subr.mxu0 %v3081
          %3141 = vmatpush1.msra.mxu0 %v3080
          %3142 = vmatprep.subr.mxu0 %v3085
          %3143 = vmatpush1.msra.mxu0 %v3084
          %3144 = vmatprep.subr.mxu0 %v3089
          %3145 = vmatpush1.msra.mxu0 %v3088
          %3146 = vmatprep.subr.mxu0 %v3093
          %3147 = vmatpush1.msra.mxu0 %v3092
          %3148 = vmatprep.subr.mxu0 %v3097
          %3149 = vmatpush1.msra.mxu0 %v3096
          %3150 = vmatprep.subr.mxu0 %v3101
          %3151 = vmatpush1.msra.mxu0 %v3100
          %3152 = vmatprep.subr.mxu0 %v3105
          %3153 = vmatpush1.msra.mxu0 %v3104
          %3154 = vmatprep.subr.mxu0 %v3109
          %3155 = vmatpush1.msra.mxu0 %v3108
          %3156 = vmatprep.subr.mxu0 %v3113
          %3157 = vmatpush1.msra.mxu0 %v3112
          %3158 = vmatprep.subr.mxu0 %v3117
          %3159 = vmatpush1.msra.mxu0 %v3116
          %3160 = vmatprep.subr.mxu0 %v3121
          %3161 = vmatpush1.msra.mxu0 %v3120
          %3162 = vmatprep.subr.mxu0 %v3125
          %3163 = vmatpush1.msra.mxu0 %v3124
          %3164 = vmatprep.subr.mxu0 %v3129
          %3165 = vmatpush1.msra.mxu0 %v3128
          %3166 = vmatprep.subr.mxu0 %v3133
          %3167 = vmatpush1.msra.mxu0 %v3132
          %3168 = vmatprep.subr.mxu0 0.0
          %3169 = vmatpush1.msra.mxu0 0.0
          %3170 = vmatprep.subr.mxu0 0.0
          %3171 = vmatpush1.msra.mxu0 0.0
          %3172 = vmatprep.subr.mxu0 0.0
          %3173 = vmatpush1.msra.mxu0 0.0
          %3174 = vmatprep.subr.mxu0 0.0
          %3175 = vmatpush1.msra.mxu0 0.0
          %3176 = vmatprep.subr.mxu0 0.0
          %3177 = vmatpush1.msra.mxu0 0.0
          %3178 = vmatprep.subr.mxu0 0.0
          %3179 = vmatpush1.msra.mxu0 0.0
          %3180 = vmatprep.subr.mxu0 0.0
          %3181 = vmatpush1.msra.mxu0 0.0
          %3182 = vmatprep.subr.mxu0 0.0
          %3183 = vmatpush1.msra.mxu0 0.0
          %3184 = vmatprep.subr.mxu0 0.0
          %3185 = vmatpush1.msra.mxu0 0.0
          %3186 = vmatprep.subr.mxu0 0.0
          %3187 = vmatpush1.msra.mxu0 0.0
          %3188 = vmatprep.subr.mxu0 0.0
          %3189 = vmatpush1.msra.mxu0 0.0
          %3190 = vmatprep.subr.mxu0 0.0
          %3191 = vmatpush1.msra.mxu0 0.0
          %3192 = vmatprep.subr.mxu0 0.0
          %3193 = vmatpush1.msra.mxu0 0.0
          %3194 = vmatprep.subr.mxu0 0.0
          %3195 = vmatpush1.msra.mxu0 0.0
          %3196 = vmatprep.subr.mxu0 0.0
          %3197 = vmatpush1.msra.mxu0 0.0
          %3198 = vmatprep.subr.mxu0 0.0
          %3199 = vmatpush1.msra.mxu0 0.0
          %3200 = vmatprep.mubr.f32.mxu0 0.0
          %3201 = vmatmul.mubr.f32.gmra.mrb[0].mxu0 0.0
          %v3202 = vpop.f32.mrb[0].mxu0
          %v3203 = vadd.f32 0.0, %v3202
          %v3204 = vpop.f32.mrb[0].mxu0
          %v3205 = vadd.f32 0.0, %v3204
          %3206 = vdwg.mxu0
          %3207 = vmatprep.subr.mxu0 %v3075
          %3208 = vmatpush1.msra.mxu0 %v3074
          %3209 = vmatprep.subr.mxu0 %v3079
          %3210 = vmatpush1.msra.mxu0 %v3078
          %3211 = vmatprep.subr.mxu0 %v3083
          %3212 = vmatpush1.msra.mxu0 %v3082
          %3213 = vmatprep.subr.mxu0 %v3087
          %3214 = vmatpush1.msra.mxu0 %v3086
          %3215 = vmatprep.subr.mxu0 %v3091
          %3216 = vmatpush1.msra.mxu0 %v3090
          %3217 = vmatprep.subr.mxu0 %v3095
          %3218 = vmatpush1.msra.mxu0 %v3094
          %3219 = vmatprep.subr.mxu0 %v3099
          %3220 = vmatpush1.msra.mxu0 %v3098
          %3221 = vmatprep.subr.mxu0 %v3103
          %3222 = vmatpush1.msra.mxu0 %v3102
          %3223 = vmatprep.subr.mxu0 %v3107
          %3224 = vmatpush1.msra.mxu0 %v3106
          %3225 = vmatprep.subr.mxu0 %v3111
          %3226 = vmatpush1.msra.mxu0 %v3110
          %3227 = vmatprep.subr.mxu0 %v3115
          %3228 = vmatpush1.msra.mxu0 %v3114
          %3229 = vmatprep.subr.mxu0 %v3119
          %3230 = vmatpush1.msra.mxu0 %v3118
          %3231 = vmatprep.subr.mxu0 %v3123
          %3232 = vmatpush1.msra.mxu0 %v3122
          %3233 = vmatprep.subr.mxu0 %v3127
          %3234 = vmatpush1.msra.mxu0 %v3126
          %3235 = vmatprep.subr.mxu0 %v3131
          %3236 = vmatpush1.msra.mxu0 %v3130
          %3237 = vmatprep.subr.mxu0 %v3135
          %3238 = vmatpush1.msra.mxu0 %v3134
          %3239 = vmatprep.subr.mxu0 0.0
          %3240 = vmatpush1.msra.mxu0 0.0
          %3241 = vmatprep.subr.mxu0 0.0
          %3242 = vmatpush1.msra.mxu0 0.0
          %3243 = vmatprep.subr.mxu0 0.0
          %3244 = vmatpush1.msra.mxu0 0.0
          %3245 = vmatprep.subr.mxu0 0.0
          %3246 = vmatpush1.msra.mxu0 0.0
          %3247 = vmatprep.subr.mxu0 0.0
          %3248 = vmatpush1.msra.mxu0 0.0
          %3249 = vmatprep.subr.mxu0 0.0
          %3250 = vmatpush1.msra.mxu0 0.0
          %3251 = vmatprep.subr.mxu0 0.0
          %3252 = vmatpush1.msra.mxu0 0.0
          %3253 = vmatprep.subr.mxu0 0.0
          %3254 = vmatpush1.msra.mxu0 0.0
          %3255 = vmatprep.subr.mxu0 0.0
          %3256 = vmatpush1.msra.mxu0 0.0
          %3257 = vmatprep.subr.mxu0 0.0
          %3258 = vmatpush1.msra.mxu0 0.0
          %3259 = vmatprep.subr.mxu0 0.0
          %3260 = vmatpush1.msra.mxu0 0.0
          %3261 = vmatprep.subr.mxu0 0.0
          %3262 = vmatpush1.msra.mxu0 0.0
          %3263 = vmatprep.subr.mxu0 0.0
          %3264 = vmatpush1.msra.mxu0 0.0
          %3265 = vmatprep.subr.mxu0 0.0
          %3266 = vmatpush1.msra.mxu0 0.0
          %3267 = vmatprep.subr.mxu0 0.0
          %3268 = vmatpush1.msra.mxu0 0.0
          %3269 = vmatprep.subr.mxu0 0.0
          %3270 = vmatpush1.msra.mxu0 0.0
          %3271 = vmatprep.mubr.f32.mxu0 0.0
          %3272 = vmatmul.mubr.f32.gmra.mrb[0].mxu0 0.0
          %v3273 = vpop.f32.mrb[0].mxu0
          %v3274 = vadd.f32 0.0, %v3273
          %v3275 = vpop.f32.mrb[0].mxu0
          %v3276 = vadd.f32 0.0, %v3275
          %3277 = vdwg.mxu0
          %3278 = vmatprep.subr.mxu0 %v2945
          %3279 = vmatpush1.msra.mxu0 %v2944
          %3280 = vmatprep.subr.mxu0 %v2949
          %3281 = vmatpush1.msra.mxu0 %v2948
          %3282 = vmatprep.subr.mxu0 %v2953
          %3283 = vmatpush1.msra.mxu0 %v2952
          %3284 = vmatprep.subr.mxu0 %v2957
          %3285 = vmatpush1.msra.mxu0 %v2956
          %3286 = vmatprep.subr.mxu0 %v2961
          %3287 = vmatpush1.msra.mxu0 %v2960
          %3288 = vmatprep.subr.mxu0 %v2965
          %3289 = vmatpush1.msra.mxu0 %v2964
          %3290 = vmatprep.subr.mxu0 %v2969
          %3291 = vmatpush1.msra.mxu0 %v2968
          %3292 = vmatprep.subr.mxu0 %v2973
          %3293 = vmatpush1.msra.mxu0 %v2972
          %3294 = vmatprep.subr.mxu0 %v2977
          %3295 = vmatpush1.msra.mxu0 %v2976
          %3296 = vmatprep.subr.mxu0 %v2981
          %3297 = vmatpush1.msra.mxu0 %v2980
          %3298 = vmatprep.subr.mxu0 %v2985
          %3299 = vmatpush1.msra.mxu0 %v2984
          %3300 = vmatprep.subr.mxu0 %v2989
          %3301 = vmatpush1.msra.mxu0 %v2988
          %3302 = vmatprep.subr.mxu0 %v2993
          %3303 = vmatpush1.msra.mxu0 %v2992
          %3304 = vmatprep.subr.mxu0 %v2997
          %3305 = vmatpush1.msra.mxu0 %v2996
          %3306 = vmatprep.subr.mxu0 %v3001
          %3307 = vmatpush1.msra.mxu0 %v3000
          %3308 = vmatprep.subr.mxu0 %v3005
          %3309 = vmatpush1.msra.mxu0 %v3004
          %3310 = vmatprep.subr.mxu0 %v3009
          %3311 = vmatpush1.msra.mxu0 %v3008
          %3312 = vmatprep.subr.mxu0 %v3013
          %3313 = vmatpush1.msra.mxu0 %v3012
          %3314 = vmatprep.subr.mxu0 %v3017
          %3315 = vmatpush1.msra.mxu0 %v3016
          %3316 = vmatprep.subr.mxu0 %v3021
          %3317 = vmatpush1.msra.mxu0 %v3020
          %3318 = vmatprep.subr.mxu0 %v3025
          %3319 = vmatpush1.msra.mxu0 %v3024
          %3320 = vmatprep.subr.mxu0 %v3029
          %3321 = vmatpush1.msra.mxu0 %v3028
          %3322 = vmatprep.subr.mxu0 %v3033
          %3323 = vmatpush1.msra.mxu0 %v3032
          %3324 = vmatprep.subr.mxu0 %v3037
          %3325 = vmatpush1.msra.mxu0 %v3036
          %3326 = vmatprep.subr.mxu0 %v3041
          %3327 = vmatpush1.msra.mxu0 %v3040
          %3328 = vmatprep.subr.mxu0 %v3045
          %3329 = vmatpush1.msra.mxu0 %v3044
          %3330 = vmatprep.subr.mxu0 %v3049
          %3331 = vmatpush1.msra.mxu0 %v3048
          %3332 = vmatprep.subr.mxu0 %v3053
          %3333 = vmatpush1.msra.mxu0 %v3052
          %3334 = vmatprep.subr.mxu0 %v3057
          %3335 = vmatpush1.msra.mxu0 %v3056
          %3336 = vmatprep.subr.mxu0 %v3061
          %3337 = vmatpush1.msra.mxu0 %v3060
          %3338 = vmatprep.subr.mxu0 %v3065
          %3339 = vmatpush1.msra.mxu0 %v3064
          %3340 = vmatprep.subr.mxu0 %v3069
          %3341 = vmatpush1.msra.mxu0 %v3068
          %3342 = vmatprep.mubr.f32.mxu0 0.0
          %3343 = vmatmul.mubr.f32.gmra.mrb[0].mxu0 0.0
          %v3344 = vpop.f32.mrb[0].mxu0
          %v3345 = vadd.f32 %v3203, %v3344
          %v3346 = vpop.f32.mrb[0].mxu0
          %v3347 = vadd.f32 %v3205, %v3346
          %3348 = vdwg.mxu0
          %3349 = vmatprep.subr.mxu0 %v2947
          %3350 = vmatpush1.msra.mxu0 %v2946
          %3351 = vmatprep.subr.mxu0 %v2951
          %3352 = vmatpush1.msra.mxu0 %v2950
          %3353 = vmatprep.subr.mxu0 %v2955
          %3354 = vmatpush1.msra.mxu0 %v2954
          %3355 = vmatprep.subr.mxu0 %v2959
          %3356 = vmatpush1.msra.mxu0 %v2958
          %3357 = vmatprep.subr.mxu0 %v2963
          %3358 = vmatpush1.msra.mxu0 %v2962
          %3359 = vmatprep.subr.mxu0 %v2967
          %3360 = vmatpush1.msra.mxu0 %v2966
          %3361 = vmatprep.subr.mxu0 %v2971
          %3362 = vmatpush1.msra.mxu0 %v2970
          %3363 = vmatprep.subr.mxu0 %v2975
          %3364 = vmatpush1.msra.mxu0 %v2974
          %3365 = vmatprep.subr.mxu0 %v2979
          %3366 = vmatpush1.msra.mxu0 %v2978
          %3367 = vmatprep.subr.mxu0 %v2983
          %3368 = vmatpush1.msra.mxu0 %v2982
          %3369 = vmatprep.subr.mxu0 %v2987
          %3370 = vmatpush1.msra.mxu0 %v2986
          %3371 = vmatprep.subr.mxu0 %v2991
          %3372 = vmatpush1.msra.mxu0 %v2990
          %3373 = vmatprep.subr.mxu0 %v2995
          %3374 = vmatpush1.msra.mxu0 %v2994
          %3375 = vmatprep.subr.mxu0 %v2999
          %3376 = vmatpush1.msra.mxu0 %v2998
          %3377 = vmatprep.subr.mxu0 %v3003
          %3378 = vmatpush1.msra.mxu0 %v3002
          %3379 = vmatprep.subr.mxu0 %v3007
          %3380 = vmatpush1.msra.mxu0 %v3006
          %3381 = vmatprep.subr.mxu0 %v3011
          %3382 = vmatpush1.msra.mxu0 %v3010
          %3383 = vmatprep.subr.mxu0 %v3015
          %3384 = vmatpush1.msra.mxu0 %v3014
          %3385 = vmatprep.subr.mxu0 %v3019
          %3386 = vmatpush1.msra.mxu0 %v3018
          %3387 = vmatprep.subr.mxu0 %v3023
          %3388 = vmatpush1.msra.mxu0 %v3022
          %3389 = vmatprep.subr.mxu0 %v3027
          %3390 = vmatpush1.msra.mxu0 %v3026
          %3391 = vmatprep.subr.mxu0 %v3031
          %3392 = vmatpush1.msra.mxu0 %v3030
          %3393 = vmatprep.subr.mxu0 %v3035
          %3394 = vmatpush1.msra.mxu0 %v3034
          %3395 = vmatprep.subr.mxu0 %v3039
          %3396 = vmatpush1.msra.mxu0 %v3038
          %3397 = vmatprep.subr.mxu0 %v3043
          %3398 = vmatpush1.msra.mxu0 %v3042
          %3399 = vmatprep.subr.mxu0 %v3047
          %3400 = vmatpush1.msra.mxu0 %v3046
          %3401 = vmatprep.subr.mxu0 %v3051
          %3402 = vmatpush1.msra.mxu0 %v3050
          %3403 = vmatprep.subr.mxu0 %v3055
          %3404 = vmatpush1.msra.mxu0 %v3054
          %3405 = vmatprep.subr.mxu0 %v3059
          %3406 = vmatpush1.msra.mxu0 %v3058
          %3407 = vmatprep.subr.mxu0 %v3063
          %3408 = vmatpush1.msra.mxu0 %v3062
          %3409 = vmatprep.subr.mxu0 %v3067
          %3410 = vmatpush1.msra.mxu0 %v3066
          %3411 = vmatprep.subr.mxu0 %v3071
          %3412 = vmatpush1.msra.mxu0 %v3070
          %3413 = vmatprep.mubr.f32.mxu0 0.0
          %3414 = vmatmul.mubr.f32.gmra.mrb[0].mxu0 0.0
          %v3415 = vpop.f32.mrb[0].mxu0
          %v3416 = vadd.f32 %v3274, %v3415
          %v3417 = vpop.f32.mrb[0].mxu0
          %v3418 = vadd.f32 %v3276, %v3417
          %3419 = vdwg.mxu0
          %v3420 = vld [vmem:[%s18] sm:$0xf]
          %v3422 = vlaneseq
          %v3423 = vshrl.u32 %v3422, 7
          %v3424 = vsub.s32 0, %v3423
          %v3425 = vrot.slane %v3420, %v3424
          %v3426 = vlaneseq
          %v3427 = vshrl.u32 %v3426, 7
          %v3428 = vsub.s32 1, %v3427
          %v3429 = vrot.slane %v3420, %v3428
          %v3430 = vlaneseq
          %v3431 = vshrl.u32 %v3430, 7
          %v3432 = vsub.s32 2, %v3431
          %v3433 = vrot.slane %v3420, %v3432
          %v3434 = vlaneseq
          %v3435 = vshrl.u32 %v3434, 7
          %v3436 = vsub.s32 3, %v3435
          %v3437 = vrot.slane %v3420, %v3436
          %v3442 = vadd.f32 %v3345, %v3425
          %v3443 = vadd.f32 %v3347, %v3429
          %v3444 = vadd.f32 %v3416, %v3433
          %v3445 = vadd.f32 %v3418, %v3437
          %v3446 = vxor.u32 %v3442, 2147483648
          %v3447 = vmul.f32 %v3446, 1.442695
          %v3448 = vpow.pop %v3447
          %v3449 = vadd.f32 %v3448, 1.0
          %v3450 = vrcp.pop %v3449
          %v3451 = vmul.f32 1.0, %v3450
          %v3452 = vxor.u32 %v3443, 2147483648
          %v3453 = vmul.f32 %v3452, 1.442695
          %v3454 = vpow.pop %v3453
          %v3455 = vadd.f32 %v3454, 1.0
          %v3456 = vrcp.pop %v3455
          %v3457 = vmul.f32 1.0, %v3456
          %v3458 = vtanh.pop %v3444
          %v3459 = vxor.u32 %v3445, 2147483648
          %v3460 = vmul.f32 %v3459, 1.442695
          %v3461 = vpow.pop %v3460
          %v3462 = vadd.f32 %v3461, 1.0
          %v3463 = vrcp.pop %v3462
          %v3464 = vmul.f32 1.0, %v3463
          %v3465 = vmul.f32 %v3457, 0.0
          %v3466 = vmul.f32 %v3451, %v3458
          %v3467 = vadd.f32 %v3465, %v3466
          %v3468 = vtanh.pop %v3467
          %v3469 = vmul.f32 %v3464, %v3468
          %v3470 = vlaneseq
          %v3471 = vshrl.u32 %v3470, 7
          %v3472 = vsub.s32 0, %v3471
          %v3473 = vrot.slane %v3469, %v3472
          %v3474 = vmul.f32 %v2936, %v3473
          %v3475 = vmul.f32 %v2937, %v3473
          %3476 = vadd.xlane.f32.xlu0 %v3474
          %v3477 = vpop.xlane.xlu0 %3476
          %3478 = vadd.xlane.f32.xlu0 %v3475
          %v3479 = vpop.xlane.xlu0 %3478
          %v3480 = vmax.f32 %v3477, %v3479
          %v3481 = vrot.slane %v3480, 4
          %v3482 = vmax.f32 %v3480, %v3481
          %v3483 = vrot.slane %v3482, 2
          %v3484 = vmax.f32 %v3482, %v3483
          %v3485 = vrot.slane %v3484, 1
          %v3486 = vmax.f32 %v3484, %v3485
          %v3487 = vsub.f32 %v3477, %v3486
          %v3488 = vsub.f32 %v3479, %v3486
          %v3489 = vmul.f32 %v3487, 1.442695
          %v3490 = vpow.pop %v3489
          %v3491 = vmul.f32 %v3488, 1.442695
          %v3492 = vpow.pop %v3491
          %3493 = vmatprep.subr.mxu0 0.0
          %3494 = vmatpush1.msra.mxu0 %v3490
          %3495 = vmatprep.subr.mxu0 0.0
          %3496 = vmatpush1.msra.mxu0 %v3492
          %3497 = vmatprep.subr.mxu0 0.0
          %3498 = vmatpush1.msra.mxu0 0.0
          %3499 = vmatprep.subr.mxu0 0.0
          %3500 = vmatpush1.msra.mxu0 0.0
          %3501 = vmatprep.subr.mxu0 0.0
          %3502 = vmatpush1.msra.mxu0 0.0
          %3503 = vmatprep.subr.mxu0 0.0
          %3504 = vmatpush1.msra.mxu0 0.0
          %3505 = vmatprep.subr.mxu0 0.0
          %3506 = vmatpush1.msra.mxu0 0.0
          %3507 = vmatprep.subr.mxu0 0.0
          %3508 = vmatpush1.msra.mxu0 0.0
          %3509 = vmatprep.subr.mxu0 0.0
          %3510 = vmatpush1.msra.mxu0 0.0
          %3511 = vmatprep.subr.mxu0 0.0
          %3512 = vmatpush1.msra.mxu0 0.0
          %3513 = vmatprep.subr.mxu0 0.0
          %3514 = vmatpush1.msra.mxu0 0.0
          %3515 = vmatprep.subr.mxu0 0.0
          %3516 = vmatpush1.msra.mxu0 0.0
          %3517 = vmatprep.subr.mxu0 0.0
          %3518 = vmatpush1.msra.mxu0 0.0
          %3519 = vmatprep.subr.mxu0 0.0
          %3520 = vmatpush1.msra.mxu0 0.0
          %3521 = vmatprep.subr.mxu0 0.0
          %3522 = vmatpush1.msra.mxu0 0.0
          %3523 = vmatprep.subr.mxu0 0.0
          %3524 = vmatpush1.msra.mxu0 0.0
          %3525 = vmatprep.subr.mxu0 0.0
          %3526 = vmatpush1.msra.mxu0 0.0
          %3527 = vmatprep.subr.mxu0 0.0
          %3528 = vmatpush1.msra.mxu0 0.0
          %3529 = vmatprep.subr.mxu0 0.0
          %3530 = vmatpush1.msra.mxu0 0.0
          %3531 = vmatprep.subr.mxu0 0.0
          %3532 = vmatpush1.msra.mxu0 0.0
          %3533 = vmatprep.subr.mxu0 0.0
          %3534 = vmatpush1.msra.mxu0 0.0
          %3535 = vmatprep.subr.mxu0 0.0
          %3536 = vmatpush1.msra.mxu0 0.0
          %3537 = vmatprep.subr.mxu0 0.0
          %3538 = vmatpush1.msra.mxu0 0.0
          %3539 = vmatprep.subr.mxu0 0.0
          %3540 = vmatpush1.msra.mxu0 0.0
          %3541 = vmatprep.subr.mxu0 0.0
          %3542 = vmatpush1.msra.mxu0 0.0
          %3543 = vmatprep.subr.mxu0 0.0
          %3544 = vmatpush1.msra.mxu0 0.0
          %3545 = vmatprep.subr.mxu0 0.0
          %3546 = vmatpush1.msra.mxu0 0.0
          %3547 = vmatprep.subr.mxu0 0.0
          %3548 = vmatpush1.msra.mxu0 0.0
          %3549 = vmatprep.subr.mxu0 0.0
          %3550 = vmatpush1.msra.mxu0 0.0
          %3551 = vmatprep.subr.mxu0 0.0
          %3552 = vmatpush1.msra.mxu0 0.0
          %3553 = vmatprep.subr.mxu0 0.0
          %3554 = vmatpush1.msra.mxu0 0.0
          %3555 = vmatprep.subr.mxu0 0.0
          %3556 = vmatpush1.msra.mxu0 0.0
          %3557 = vmatprep.mubr.f32.mxu0 0.0
          %3558 = vmatmul.mubr.f32.gmra.mrb[0].mxu0 %v2756
          %v3559 = vpop.f32.mrb[0].mxu0
          %v3560 = vadd.f32 0.0, %v3559
          %v3561 = vpop.f32.mrb[0].mxu0
          %3562 = vdwg.mxu0
          %v3563 = vlaneseq
          %v3564 = vshrl.u32 %v3563, 7
          %v3565 = vsub.s32 0, %v3564
          %v3566 = vrot.slane %v3560, %v3565
          %v3567 = vrcp.pop %v3566
          %v3568 = vmul.f32 %v3490, %v3567
          %v3569 = vmul.f32 %v3492, %v3567
          %3571 = vset.pattern.permute.xlu0 0
          %3572 = vperm.xlu0 %3571, %v3568
          %v3573 = vpop.permute.xlu0 %3572
          %3576 = vset.pattern.permute.xlu0 0
          %3577 = vperm.xlu0 %3576, %v3569
          %v3578 = vpop.permute.xlu0 %3577
          %v3580 = vmul.f32 %v3573, %v2936
          %v3581 = vmul.f32 %v3578, %v2937
          %3582 = vmatprep.subr.mxu0 0.0
          %3583 = vmatpush1.msra.mxu0 %v3580
          %3584 = vmatprep.subr.mxu0 0.0
          %3585 = vmatpush1.msra.mxu0 %v3581
          %3586 = vmatprep.subr.mxu0 0.0
          %3587 = vmatpush1.msra.mxu0 0.0
          %3588 = vmatprep.subr.mxu0 0.0
          %3589 = vmatpush1.msra.mxu0 0.0
          %3590 = vmatprep.subr.mxu0 0.0
          %3591 = vmatpush1.msra.mxu0 0.0
          %3592 = vmatprep.subr.mxu0 0.0
          %3593 = vmatpush1.msra.mxu0 0.0
          %3594 = vmatprep.subr.mxu0 0.0
          %3595 = vmatpush1.msra.mxu0 0.0
          %3596 = vmatprep.subr.mxu0 0.0
          %3597 = vmatpush1.msra.mxu0 0.0
          %3598 = vmatprep.subr.mxu0 0.0
          %3599 = vmatpush1.msra.mxu0 0.0
          %3600 = vmatprep.subr.mxu0 0.0
          %3601 = vmatpush1.msra.mxu0 0.0
          %3602 = vmatprep.subr.mxu0 0.0
          %3603 = vmatpush1.msra.mxu0 0.0
          %3604 = vmatprep.subr.mxu0 0.0
          %3605 = vmatpush1.msra.mxu0 0.0
          %3606 = vmatprep.subr.mxu0 0.0
          %3607 = vmatpush1.msra.mxu0 0.0
          %3608 = vmatprep.subr.mxu0 0.0
          %3609 = vmatpush1.msra.mxu0 0.0
          %3610 = vmatprep.subr.mxu0 0.0
          %3611 = vmatpush1.msra.mxu0 0.0
          %3612 = vmatprep.subr.mxu0 0.0
          %3613 = vmatpush1.msra.mxu0 0.0
          %3614 = vmatprep.subr.mxu0 0.0
          %3615 = vmatpush1.msra.mxu0 0.0
          %3616 = vmatprep.subr.mxu0 0.0
          %3617 = vmatpush1.msra.mxu0 0.0
          %3618 = vmatprep.subr.mxu0 0.0
          %3619 = vmatpush1.msra.mxu0 0.0
          %3620 = vmatprep.subr.mxu0 0.0
          %3621 = vmatpush1.msra.mxu0 0.0
          %3622 = vmatprep.subr.mxu0 0.0
          %3623 = vmatpush1.msra.mxu0 0.0
          %3624 = vmatprep.subr.mxu0 0.0
          %3625 = vmatpush1.msra.mxu0 0.0
          %3626 = vmatprep.subr.mxu0 0.0
          %3627 = vmatpush1.msra.mxu0 0.0
          %3628 = vmatprep.subr.mxu0 0.0
          %3629 = vmatpush1.msra.mxu0 0.0
          %3630 = vmatprep.subr.mxu0 0.0
          %3631 = vmatpush1.msra.mxu0 0.0
          %3632 = vmatprep.subr.mxu0 0.0
          %3633 = vmatpush1.msra.mxu0 0.0
          %3634 = vmatprep.subr.mxu0 0.0
          %3635 = vmatpush1.msra.mxu0 0.0
          %3636 = vmatprep.subr.mxu0 0.0
          %3637 = vmatpush1.msra.mxu0 0.0
          %3638 = vmatprep.subr.mxu0 0.0
          %3639 = vmatpush1.msra.mxu0 0.0
          %3640 = vmatprep.subr.mxu0 0.0
          %3641 = vmatpush1.msra.mxu0 0.0
          %3642 = vmatprep.subr.mxu0 0.0
          %3643 = vmatpush1.msra.mxu0 0.0
          %3644 = vmatprep.subr.mxu0 0.0
          %3645 = vmatpush1.msra.mxu0 0.0
          %3646 = vmatprep.mubr.f32.mxu0 0.0
          %3647 = vmatmul.mubr.f32.gmra.mrb[0].mxu0 %v2756
          %v3648 = vpop.f32.mrb[0].mxu0
          %v3649 = vadd.f32 0.0, %v3648
          %v3650 = vpop.f32.mrb[0].mxu0
          %3651 = vdwg.mxu0
          %3652 = vmatprep.subr.mxu0 %v3073
          %3653 = vmatpush1.msra.mxu0 %v3072
          %3654 = vmatprep.subr.mxu0 %v3077
          %3655 = vmatpush1.msra.mxu0 %v3076
          %3656 = vmatprep.subr.mxu0 %v3081
          %3657 = vmatpush1.msra.mxu0 %v3080
          %3658 = vmatprep.subr.mxu0 %v3085
          %3659 = vmatpush1.msra.mxu0 %v3084
          %3660 = vmatprep.subr.mxu0 %v3089
          %3661 = vmatpush1.msra.mxu0 %v3088
          %3662 = vmatprep.subr.mxu0 %v3093
          %3663 = vmatpush1.msra.mxu0 %v3092
          %3664 = vmatprep.subr.mxu0 %v3097
          %3665 = vmatpush1.msra.mxu0 %v3096
          %3666 = vmatprep.subr.mxu0 %v3101
          %3667 = vmatpush1.msra.mxu0 %v3100
          %3668 = vmatprep.subr.mxu0 %v3105
          %3669 = vmatpush1.msra.mxu0 %v3104
          %3670 = vmatprep.subr.mxu0 %v3109
          %3671 = vmatpush1.msra.mxu0 %v3108
          %3672 = vmatprep.subr.mxu0 %v3113
          %3673 = vmatpush1.msra.mxu0 %v3112
          %3674 = vmatprep.subr.mxu0 %v3117
          %3675 = vmatpush1.msra.mxu0 %v3116
          %3676 = vmatprep.subr.mxu0 %v3121
          %3677 = vmatpush1.msra.mxu0 %v3120
          %3678 = vmatprep.subr.mxu0 %v3125
          %3679 = vmatpush1.msra.mxu0 %v3124
          %3680 = vmatprep.subr.mxu0 %v3129
          %3681 = vmatpush1.msra.mxu0 %v3128
          %3682 = vmatprep.subr.mxu0 %v3133
          %3683 = vmatpush1.msra.mxu0 %v3132
          %3684 = vmatprep.subr.mxu0 0.0
          %3685 = vmatpush1.msra.mxu0 0.0
          %3686 = vmatprep.subr.mxu0 0.0
          %3687 = vmatpush1.msra.mxu0 0.0
          %3688 = vmatprep.subr.mxu0 0.0
          %3689 = vmatpush1.msra.mxu0 0.0
          %3690 = vmatprep.subr.mxu0 0.0
          %3691 = vmatpush1.msra.mxu0 0.0
          %3692 = vmatprep.subr.mxu0 0.0
          %3693 = vmatpush1.msra.mxu0 0.0
          %3694 = vmatprep.subr.mxu0 0.0
          %3695 = vmatpush1.msra.mxu0 0.0
          %3696 = vmatprep.subr.mxu0 0.0
          %3697 = vmatpush1.msra.mxu0 0.0
          %3698 = vmatprep.subr.mxu0 0.0
          %3699 = vmatpush1.msra.mxu0 0.0
          %3700 = vmatprep.subr.mxu0 0.0
          %3701 = vmatpush1.msra.mxu0 0.0
          %3702 = vmatprep.subr.mxu0 0.0
          %3703 = vmatpush1.msra.mxu0 0.0
          %3704 = vmatprep.subr.mxu0 0.0
          %3705 = vmatpush1.msra.mxu0 0.0
          %3706 = vmatprep.subr.mxu0 0.0
          %3707 = vmatpush1.msra.mxu0 0.0
          %3708 = vmatprep.subr.mxu0 0.0
          %3709 = vmatpush1.msra.mxu0 0.0
          %3710 = vmatprep.subr.mxu0 0.0
          %3711 = vmatpush1.msra.mxu0 0.0
          %3712 = vmatprep.subr.mxu0 0.0
          %3713 = vmatpush1.msra.mxu0 0.0
          %3714 = vmatprep.subr.mxu0 0.0
          %3715 = vmatpush1.msra.mxu0 0.0
          %3716 = vmatprep.mubr.f32.mxu0 0.0
          %3717 = vmatmul.mubr.f32.gmra.mrb[0].mxu0 %v3469
          %v3718 = vpop.f32.mrb[0].mxu0
          %v3719 = vadd.f32 0.0, %v3718
          %v3720 = vpop.f32.mrb[0].mxu0
          %v3721 = vadd.f32 0.0, %v3720
          %3722 = vdwg.mxu0
          %3723 = vmatprep.subr.mxu0 %v3075
          %3724 = vmatpush1.msra.mxu0 %v3074
          %3725 = vmatprep.subr.mxu0 %v3079
          %3726 = vmatpush1.msra.mxu0 %v3078
          %3727 = vmatprep.subr.mxu0 %v3083
          %3728 = vmatpush1.msra.mxu0 %v3082
          %3729 = vmatprep.subr.mxu0 %v3087
          %3730 = vmatpush1.msra.mxu0 %v3086
          %3731 = vmatprep.subr.mxu0 %v3091
          %3732 = vmatpush1.msra.mxu0 %v3090
          %3733 = vmatprep.subr.mxu0 %v3095
          %3734 = vmatpush1.msra.mxu0 %v3094
          %3735 = vmatprep.subr.mxu0 %v3099
          %3736 = vmatpush1.msra.mxu0 %v3098
          %3737 = vmatprep.subr.mxu0 %v3103
          %3738 = vmatpush1.msra.mxu0 %v3102
          %3739 = vmatprep.subr.mxu0 %v3107
          %3740 = vmatpush1.msra.mxu0 %v3106
          %3741 = vmatprep.subr.mxu0 %v3111
          %3742 = vmatpush1.msra.mxu0 %v3110
          %3743 = vmatprep.subr.mxu0 %v3115
          %3744 = vmatpush1.msra.mxu0 %v3114
          %3745 = vmatprep.subr.mxu0 %v3119
          %3746 = vmatpush1.msra.mxu0 %v3118
          %3747 = vmatprep.subr.mxu0 %v3123
          %3748 = vmatpush1.msra.mxu0 %v3122
          %3749 = vmatprep.subr.mxu0 %v3127
          %3750 = vmatpush1.msra.mxu0 %v3126
          %3751 = vmatprep.subr.mxu0 %v3131
          %3752 = vmatpush1.msra.mxu0 %v3130
          %3753 = vmatprep.subr.mxu0 %v3135
          %3754 = vmatpush1.msra.mxu0 %v3134
          %3755 = vmatprep.subr.mxu0 0.0
          %3756 = vmatpush1.msra.mxu0 0.0
          %3757 = vmatprep.subr.mxu0 0.0
          %3758 = vmatpush1.msra.mxu0 0.0
          %3759 = vmatprep.subr.mxu0 0.0
          %3760 = vmatpush1.msra.mxu0 0.0
          %3761 = vmatprep.subr.mxu0 0.0
          %3762 = vmatpush1.msra.mxu0 0.0
          %3763 = vmatprep.subr.mxu0 0.0
          %3764 = vmatpush1.msra.mxu0 0.0
          %3765 = vmatprep.subr.mxu0 0.0
          %3766 = vmatpush1.msra.mxu0 0.0
          %3767 = vmatprep.subr.mxu0 0.0
          %3768 = vmatpush1.msra.mxu0 0.0
          %3769 = vmatprep.subr.mxu0 0.0
          %3770 = vmatpush1.msra.mxu0 0.0
          %3771 = vmatprep.subr.mxu0 0.0
          %3772 = vmatpush1.msra.mxu0 0.0
          %3773 = vmatprep.subr.mxu0 0.0
          %3774 = vmatpush1.msra.mxu0 0.0
          %3775 = vmatprep.subr.mxu0 0.0
          %3776 = vmatpush1.msra.mxu0 0.0
          %3777 = vmatprep.subr.mxu0 0.0
          %3778 = vmatpush1.msra.mxu0 0.0
          %3779 = vmatprep.subr.mxu0 0.0
          %3780 = vmatpush1.msra.mxu0 0.0
          %3781 = vmatprep.subr.mxu0 0.0
          %3782 = vmatpush1.msra.mxu0 0.0
          %3783 = vmatprep.subr.mxu0 0.0
          %3784 = vmatpush1.msra.mxu0 0.0
          %3785 = vmatprep.subr.mxu0 0.0
          %3786 = vmatpush1.msra.mxu0 0.0
          %3787 = vmatprep.mubr.f32.mxu0 0.0
          %3788 = vmatmul.mubr.f32.gmra.mrb[0].mxu0 %v3469
          %v3789 = vpop.f32.mrb[0].mxu0
          %v3790 = vadd.f32 0.0, %v3789
          %v3791 = vpop.f32.mrb[0].mxu0
          %v3792 = vadd.f32 0.0, %v3791
          %3793 = vdwg.mxu0
          %3794 = vmatprep.subr.mxu0 %v2945
          %3795 = vmatpush1.msra.mxu0 %v2944
          %3796 = vmatprep.subr.mxu0 %v2949
          %3797 = vmatpush1.msra.mxu0 %v2948
          %3798 = vmatprep.subr.mxu0 %v2953
          %3799 = vmatpush1.msra.mxu0 %v2952
          %3800 = vmatprep.subr.mxu0 %v2957
          %3801 = vmatpush1.msra.mxu0 %v2956
          %3802 = vmatprep.subr.mxu0 %v2961
          %3803 = vmatpush1.msra.mxu0 %v2960
          %3804 = vmatprep.subr.mxu0 %v2965
          %3805 = vmatpush1.msra.mxu0 %v2964
          %3806 = vmatprep.subr.mxu0 %v2969
          %3807 = vmatpush1.msra.mxu0 %v2968
          %3808 = vmatprep.subr.mxu0 %v2973
          %3809 = vmatpush1.msra.mxu0 %v2972
          %3810 = vmatprep.subr.mxu0 %v2977
          %3811 = vmatpush1.msra.mxu0 %v2976
          %3812 = vmatprep.subr.mxu0 %v2981
          %3813 = vmatpush1.msra.mxu0 %v2980
          %3814 = vmatprep.subr.mxu0 %v2985
          %3815 = vmatpush1.msra.mxu0 %v2984
          %3816 = vmatprep.subr.mxu0 %v2989
          %3817 = vmatpush1.msra.mxu0 %v2988
          %3818 = vmatprep.subr.mxu0 %v2993
          %3819 = vmatpush1.msra.mxu0 %v2992
          %3820 = vmatprep.subr.mxu0 %v2997
          %3821 = vmatpush1.msra.mxu0 %v2996
          %3822 = vmatprep.subr.mxu0 %v3001
          %3823 = vmatpush1.msra.mxu0 %v3000
          %3824 = vmatprep.subr.mxu0 %v3005
          %3825 = vmatpush1.msra.mxu0 %v3004
          %3826 = vmatprep.subr.mxu0 %v3009
          %3827 = vmatpush1.msra.mxu0 %v3008
          %3828 = vmatprep.subr.mxu0 %v3013
          %3829 = vmatpush1.msra.mxu0 %v3012
          %3830 = vmatprep.subr.mxu0 %v3017
          %3831 = vmatpush1.msra.mxu0 %v3016
          %3832 = vmatprep.subr.mxu0 %v3021
          %3833 = vmatpush1.msra.mxu0 %v3020
          %3834 = vmatprep.subr.mxu0 %v3025
          %3835 = vmatpush1.msra.mxu0 %v3024
          %3836 = vmatprep.subr.mxu0 %v3029
          %3837 = vmatpush1.msra.mxu0 %v3028
          %3838 = vmatprep.subr.mxu0 %v3033
          %3839 = vmatpush1.msra.mxu0 %v3032
          %3840 = vmatprep.subr.mxu0 %v3037
          %3841 = vmatpush1.msra.mxu0 %v3036
          %3842 = vmatprep.subr.mxu0 %v3041
          %3843 = vmatpush1.msra.mxu0 %v3040
          %3844 = vmatprep.subr.mxu0 %v3045
          %3845 = vmatpush1.msra.mxu0 %v3044
          %3846 = vmatprep.subr.mxu0 %v3049
          %3847 = vmatpush1.msra.mxu0 %v3048
          %3848 = vmatprep.subr.mxu0 %v3053
          %3849 = vmatpush1.msra.mxu0 %v3052
          %3850 = vmatprep.subr.mxu0 %v3057
          %3851 = vmatpush1.msra.mxu0 %v3056
          %3852 = vmatprep.subr.mxu0 %v3061
          %3853 = vmatpush1.msra.mxu0 %v3060
          %3854 = vmatprep.subr.mxu0 %v3065
          %3855 = vmatpush1.msra.mxu0 %v3064
          %3856 = vmatprep.subr.mxu0 %v3069
          %3857 = vmatpush1.msra.mxu0 %v3068
          %3858 = vmatprep.mubr.f32.mxu0 %v3649
          %3859 = vmatmul.mubr.f32.gmra.mrb[0].mxu0 %v3469
          %v3860 = vpop.f32.mrb[0].mxu0
          %v3861 = vadd.f32 %v3719, %v3860
          %v3862 = vpop.f32.mrb[0].mxu0
          %v3863 = vadd.f32 %v3721, %v3862
          %3864 = vdwg.mxu0
          %3865 = vmatprep.subr.mxu0 %v2947
          %3866 = vmatpush1.msra.mxu0 %v2946
          %3867 = vmatprep.subr.mxu0 %v2951
          %3868 = vmatpush1.msra.mxu0 %v2950
          %3869 = vmatprep.subr.mxu0 %v2955
          %3870 = vmatpush1.msra.mxu0 %v2954
          %3871 = vmatprep.subr.mxu0 %v2959
          %3872 = vmatpush1.msra.mxu0 %v2958
          %3873 = vmatprep.subr.mxu0 %v2963
          %3874 = vmatpush1.msra.mxu0 %v2962
          %3875 = vmatprep.subr.mxu0 %v2967
          %3876 = vmatpush1.msra.mxu0 %v2966
          %3877 = vmatprep.subr.mxu0 %v2971
          %3878 = vmatpush1.msra.mxu0 %v2970
          %3879 = vmatprep.subr.mxu0 %v2975
          %3880 = vmatpush1.msra.mxu0 %v2974
          %3881 = vmatprep.subr.mxu0 %v2979
          %3882 = vmatpush1.msra.mxu0 %v2978
          %3883 = vmatprep.subr.mxu0 %v2983
          %3884 = vmatpush1.msra.mxu0 %v2982
          %3885 = vmatprep.subr.mxu0 %v2987
          %3886 = vmatpush1.msra.mxu0 %v2986
          %3887 = vmatprep.subr.mxu0 %v2991
          %3888 = vmatpush1.msra.mxu0 %v2990
          %3889 = vmatprep.subr.mxu0 %v2995
          %3890 = vmatpush1.msra.mxu0 %v2994
          %3891 = vmatprep.subr.mxu0 %v2999
          %3892 = vmatpush1.msra.mxu0 %v2998
          %3893 = vmatprep.subr.mxu0 %v3003
          %3894 = vmatpush1.msra.mxu0 %v3002
          %3895 = vmatprep.subr.mxu0 %v3007
          %3896 = vmatpush1.msra.mxu0 %v3006
          %3897 = vmatprep.subr.mxu0 %v3011
          %3898 = vmatpush1.msra.mxu0 %v3010
          %3899 = vmatprep.subr.mxu0 %v3015
          %3900 = vmatpush1.msra.mxu0 %v3014
          %3901 = vmatprep.subr.mxu0 %v3019
          %3902 = vmatpush1.msra.mxu0 %v3018
          %3903 = vmatprep.subr.mxu0 %v3023
          %3904 = vmatpush1.msra.mxu0 %v3022
          %3905 = vmatprep.subr.mxu0 %v3027
          %3906 = vmatpush1.msra.mxu0 %v3026
          %3907 = vmatprep.subr.mxu0 %v3031
          %3908 = vmatpush1.msra.mxu0 %v3030
          %3909 = vmatprep.subr.mxu0 %v3035
          %3910 = vmatpush1.msra.mxu0 %v3034
          %3911 = vmatprep.subr.mxu0 %v3039
          %3912 = vmatpush1.msra.mxu0 %v3038
          %3913 = vmatprep.subr.mxu0 %v3043
          %3914 = vmatpush1.msra.mxu0 %v3042
          %3915 = vmatprep.subr.mxu0 %v3047
          %3916 = vmatpush1.msra.mxu0 %v3046
          %3917 = vmatprep.subr.mxu0 %v3051
          %3918 = vmatpush1.msra.mxu0 %v3050
          %3919 = vmatprep.subr.mxu0 %v3055
          %3920 = vmatpush1.msra.mxu0 %v3054
          %3921 = vmatprep.subr.mxu0 %v3059
          %3922 = vmatpush1.msra.mxu0 %v3058
          %3923 = vmatprep.subr.mxu0 %v3063
          %3924 = vmatpush1.msra.mxu0 %v3062
          %3925 = vmatprep.subr.mxu0 %v3067
          %3926 = vmatpush1.msra.mxu0 %v3066
          %3927 = vmatprep.subr.mxu0 %v3071
          %3928 = vmatpush1.msra.mxu0 %v3070
          %3929 = vmatprep.mubr.f32.mxu0 %v3649
          %3930 = vmatmul.mubr.f32.gmra.mrb[0].mxu0 %v3469
          %v3931 = vpop.f32.mrb[0].mxu0
          %v3932 = vadd.f32 %v3790, %v3931
          %v3933 = vpop.f32.mrb[0].mxu0
          %v3934 = vadd.f32 %v3792, %v3933
          %3935 = vdwg.mxu0
          %v3936 = vadd.f32 %v3861, %v3425
          %v3937 = vadd.f32 %v3863, %v3429
          %v3938 = vadd.f32 %v3932, %v3433
          %v3939 = vadd.f32 %v3934, %v3437
          %v3940 = vxor.u32 %v3936, 2147483648
          %v3941 = vmul.f32 %v3940, 1.442695
          %v3942 = vpow.pop %v3941
          %v3943 = vadd.f32 %v3942, 1.0
          %v3944 = vrcp.pop %v3943
          %v3945 = vmul.f32 1.0, %v3944
          %v3946 = vxor.u32 %v3937, 2147483648
          %v3947 = vmul.f32 %v3946, 1.442695
          %v3948 = vpow.pop %v3947
          %v3949 = vadd.f32 %v3948, 1.0
          %v3950 = vrcp.pop %v3949
          %v3951 = vmul.f32 1.0, %v3950
          %v3952 = vtanh.pop %v3938
          %v3953 = vxor.u32 %v3939, 2147483648
          %v3954 = vmul.f32 %v3953, 1.442695
          %v3955 = vpow.pop %v3954
          %v3956 = vadd.f32 %v3955, 1.0
          %v3957 = vrcp.pop %v3956
          %v3958 = vmul.f32 1.0, %v3957
          %v3959 = vmul.f32 %v3951, %v3467
          %v3960 = vmul.f32 %v3945, %v3952
          %v3961 = vadd.f32 %v3959, %v3960
          %v3962 = vtanh.pop %v3961
          %v3963 = vmul.f32 %v3958, %v3962
          %v3964 = vlaneseq
          %v3965 = vshrl.u32 %v3964, 7
          %v3966 = vsub.s32 0, %v3965
          %v3967 = vrot.slane %v3963, %v3966
          %v3968 = vmul.f32 %v2936, %v3967
          %v3969 = vmul.f32 %v2937, %v3967
          %3970 = vadd.xlane.f32.xlu0 %v3968
          %v3971 = vpop.xlane.xlu0 %3970
          %3972 = vadd.xlane.f32.xlu0 %v3969
          %v3973 = vpop.xlane.xlu0 %3972
          %v3974 = vmax.f32 %v3971, %v3973
          %v3975 = vrot.slane %v3974, 4
          %v3976 = vmax.f32 %v3974, %v3975
          %v3977 = vrot.slane %v3976, 2
          %v3978 = vmax.f32 %v3976, %v3977
          %v3979 = vrot.slane %v3978, 1
          %v3980 = vmax.f32 %v3978, %v3979
          %v3981 = vsub.f32 %v3971, %v3980
          %v3982 = vsub.f32 %v3973, %v3980
          %v3983 = vmul.f32 %v3981, 1.442695
          %v3984 = vpow.pop %v3983
          %v3985 = vmul.f32 %v3982, 1.442695
          %v3986 = vpow.pop %v3985
          %3987 = vmatprep.subr.mxu0 0.0
          %3988 = vmatpush1.msra.mxu0 %v3984
          %3989 = vmatprep.subr.mxu0 0.0
          %3990 = vmatpush1.msra.mxu0 %v3986
          %3991 = vmatprep.subr.mxu0 0.0
          %3992 = vmatpush1.msra.mxu0 0.0
          %3993 = vmatprep.subr.mxu0 0.0
          %3994 = vmatpush1.msra.mxu0 0.0
          %3995 = vmatprep.subr.mxu0 0.0
          %3996 = vmatpush1.msra.mxu0 0.0
          %3997 = vmatprep.subr.mxu0 0.0
          %3998 = vmatpush1.msra.mxu0 0.0
          %3999 = vmatprep.subr.mxu0 0.0
          %4000 = vmatpush1.msra.mxu0 0.0
          %4001 = vmatprep.subr.mxu0 0.0
          %4002 = vmatpush1.msra.mxu0 0.0
          %4003 = vmatprep.subr.mxu0 0.0
          %4004 = vmatpush1.msra.mxu0 0.0
          %4005 = vmatprep.subr.mxu0 0.0
          %4006 = vmatpush1.msra.mxu0 0.0
          %4007 = vmatprep.subr.mxu0 0.0
          %4008 = vmatpush1.msra.mxu0 0.0
          %4009 = vmatprep.subr.mxu0 0.0
          %4010 = vmatpush1.msra.mxu0 0.0
          %4011 = vmatprep.subr.mxu0 0.0
          %4012 = vmatpush1.msra.mxu0 0.0
          %4013 = vmatprep.subr.mxu0 0.0
          %4014 = vmatpush1.msra.mxu0 0.0
          %4015 = vmatprep.subr.mxu0 0.0
          %4016 = vmatpush1.msra.mxu0 0.0
          %4017 = vmatprep.subr.mxu0 0.0
          %4018 = vmatpush1.msra.mxu0 0.0
          %4019 = vmatprep.subr.mxu0 0.0
          %4020 = vmatpush1.msra.mxu0 0.0
          %4021 = vmatprep.subr.mxu0 0.0
          %4022 = vmatpush1.msra.mxu0 0.0
          %4023 = vmatprep.subr.mxu0 0.0
          %4024 = vmatpush1.msra.mxu0 0.0
          %4025 = vmatprep.subr.mxu0 0.0
          %4026 = vmatpush1.msra.mxu0 0.0
          %4027 = vmatprep.subr.mxu0 0.0
          %4028 = vmatpush1.msra.mxu0 0.0
          %4029 = vmatprep.subr.mxu0 0.0
          %4030 = vmatpush1.msra.mxu0 0.0
          %4031 = vmatprep.subr.mxu0 0.0
          %4032 = vmatpush1.msra.mxu0 0.0
          %4033 = vmatprep.subr.mxu0 0.0
          %4034 = vmatpush1.msra.mxu0 0.0
          %4035 = vmatprep.subr.mxu0 0.0
          %4036 = vmatpush1.msra.mxu0 0.0
          %4037 = vmatprep.subr.mxu0 0.0
          %4038 = vmatpush1.msra.mxu0 0.0
          %4039 = vmatprep.subr.mxu0 0.0
          %4040 = vmatpush1.msra.mxu0 0.0
          %4041 = vmatprep.subr.mxu0 0.0
          %4042 = vmatpush1.msra.mxu0 0.0
          %4043 = vmatprep.subr.mxu0 0.0
          %4044 = vmatpush1.msra.mxu0 0.0
          %4045 = vmatprep.subr.mxu0 0.0
          %4046 = vmatpush1.msra.mxu0 0.0
          %4047 = vmatprep.subr.mxu0 0.0
          %4048 = vmatpush1.msra.mxu0 0.0
          %4049 = vmatprep.subr.mxu0 0.0
          %4050 = vmatpush1.msra.mxu0 0.0
          %4051 = vmatprep.mubr.f32.mxu0 0.0
          %4052 = vmatmul.mubr.f32.gmra.mrb[0].mxu0 %v2756
          %v4053 = vpop.f32.mrb[0].mxu0
          %v4054 = vadd.f32 0.0, %v4053
          %v4055 = vpop.f32.mrb[0].mxu0
          %4056 = vdwg.mxu0
          %v4057 = vlaneseq
          %v4058 = vshrl.u32 %v4057, 7
          %v4059 = vsub.s32 0, %v4058
          %v4060 = vrot.slane %v4054, %v4059
          %v4061 = vrcp.pop %v4060
          %v4062 = vmul.f32 %v3984, %v4061
          %v4063 = vmul.f32 %v3986, %v4061
          %4065 = vset.pattern.permute.xlu0 0
          %4066 = vperm.xlu0 %4065, %v4062
          %v4067 = vpop.permute.xlu0 %4066
          %4070 = vset.pattern.permute.xlu0 0
          %4071 = vperm.xlu0 %4070, %v4063
          %v4072 = vpop.permute.xlu0 %4071
          %v4074 = vmul.f32 %v4067, %v2936
          %v4075 = vmul.f32 %v4072, %v2937
          %4076 = vmatprep.subr.mxu0 0.0
          %4077 = vmatpush1.msra.mxu0 %v4074
          %4078 = vmatprep.subr.mxu0 0.0
          %4079 = vmatpush1.msra.mxu0 %v4075
          %4080 = vmatprep.subr.mxu0 0.0
          %4081 = vmatpush1.msra.mxu0 0.0
          %4082 = vmatprep.subr.mxu0 0.0
          %4083 = vmatpush1.msra.mxu0 0.0
          %4084 = vmatprep.subr.mxu0 0.0
          %4085 = vmatpush1.msra.mxu0 0.0
          %4086 = vmatprep.subr.mxu0 0.0
          %4087 = vmatpush1.msra.mxu0 0.0
          %4088 = vmatprep.subr.mxu0 0.0
          %4089 = vmatpush1.msra.mxu0 0.0
          %4090 = vmatprep.subr.mxu0 0.0
          %4091 = vmatpush1.msra.mxu0 0.0
          %4092 = vmatprep.subr.mxu0 0.0
          %4093 = vmatpush1.msra.mxu0 0.0
          %4094 = vmatprep.subr.mxu0 0.0
          %4095 = vmatpush1.msra.mxu0 0.0
          %4096 = vmatprep.subr.mxu0 0.0
          %4097 = vmatpush1.msra.mxu0 0.0
          %4098 = vmatprep.subr.mxu0 0.0
          %4099 = vmatpush1.msra.mxu0 0.0
          %4100 = vmatprep.subr.mxu0 0.0
          %4101 = vmatpush1.msra.mxu0 0.0
          %4102 = vmatprep.subr.mxu0 0.0
          %4103 = vmatpush1.msra.mxu0 0.0
          %4104 = vmatprep.subr.mxu0 0.0
          %4105 = vmatpush1.msra.mxu0 0.0
          %4106 = vmatprep.subr.mxu0 0.0
          %4107 = vmatpush1.msra.mxu0 0.0
          %4108 = vmatprep.subr.mxu0 0.0
          %4109 = vmatpush1.msra.mxu0 0.0
          %4110 = vmatprep.subr.mxu0 0.0
          %4111 = vmatpush1.msra.mxu0 0.0
          %4112 = vmatprep.subr.mxu0 0.0
          %4113 = vmatpush1.msra.mxu0 0.0
          %4114 = vmatprep.subr.mxu0 0.0
          %4115 = vmatpush1.msra.mxu0 0.0
          %4116 = vmatprep.subr.mxu0 0.0
          %4117 = vmatpush1.msra.mxu0 0.0
          %4118 = vmatprep.subr.mxu0 0.0
          %4119 = vmatpush1.msra.mxu0 0.0
          %4120 = vmatprep.subr.mxu0 0.0
          %4121 = vmatpush1.msra.mxu0 0.0
          %4122 = vmatprep.subr.mxu0 0.0
          %4123 = vmatpush1.msra.mxu0 0.0
          %4124 = vmatprep.subr.mxu0 0.0
          %4125 = vmatpush1.msra.mxu0 0.0
          %4126 = vmatprep.subr.mxu0 0.0
          %4127 = vmatpush1.msra.mxu0 0.0
          %4128 = vmatprep.subr.mxu0 0.0
          %4129 = vmatpush1.msra.mxu0 0.0
          %4130 = vmatprep.subr.mxu0 0.0
          %4131 = vmatpush1.msra.mxu0 0.0
          %4132 = vmatprep.subr.mxu0 0.0
          %4133 = vmatpush1.msra.mxu0 0.0
          %4134 = vmatprep.subr.mxu0 0.0
          %4135 = vmatpush1.msra.mxu0 0.0
          %4136 = vmatprep.subr.mxu0 0.0
          %4137 = vmatpush1.msra.mxu0 0.0
          %4138 = vmatprep.subr.mxu0 0.0
          %4139 = vmatpush1.msra.mxu0 0.0
          %4140 = vmatprep.mubr.f32.mxu0 0.0
          %4141 = vmatmul.mubr.f32.gmra.mrb[0].mxu0 %v2756
          %v4142 = vpop.f32.mrb[0].mxu0
          %v4143 = vadd.f32 0.0, %v4142
          %v4144 = vpop.f32.mrb[0].mxu0
          %4145 = vdwg.mxu0
          %4146 = vmatprep.subr.mxu0 %v3073
          %4147 = vmatpush1.msra.mxu0 %v3072
          %4148 = vmatprep.subr.mxu0 %v3077
          %4149 = vmatpush1.msra.mxu0 %v3076
          %4150 = vmatprep.subr.mxu0 %v3081
          %4151 = vmatpush1.msra.mxu0 %v3080
          %4152 = vmatprep.subr.mxu0 %v3085
          %4153 = vmatpush1.msra.mxu0 %v3084
          %4154 = vmatprep.subr.mxu0 %v3089
          %4155 = vmatpush1.msra.mxu0 %v3088
          %4156 = vmatprep.subr.mxu0 %v3093
          %4157 = vmatpush1.msra.mxu0 %v3092
          %4158 = vmatprep.subr.mxu0 %v3097
          %4159 = vmatpush1.msra.mxu0 %v3096
          %4160 = vmatprep.subr.mxu0 %v3101
          %4161 = vmatpush1.msra.mxu0 %v3100
          %4162 = vmatprep.subr.mxu0 %v3105
          %4163 = vmatpush1.msra.mxu0 %v3104
          %4164 = vmatprep.subr.mxu0 %v3109
          %4165 = vmatpush1.msra.mxu0 %v3108
          %4166 = vmatprep.subr.mxu0 %v3113
          %4167 = vmatpush1.msra.mxu0 %v3112
          %4168 = vmatprep.subr.mxu0 %v3117
          %4169 = vmatpush1.msra.mxu0 %v3116
          %4170 = vmatprep.subr.mxu0 %v3121
          %4171 = vmatpush1.msra.mxu0 %v3120
          %4172 = vmatprep.subr.mxu0 %v3125
          %4173 = vmatpush1.msra.mxu0 %v3124
          %4174 = vmatprep.subr.mxu0 %v3129
          %4175 = vmatpush1.msra.mxu0 %v3128
          %4176 = vmatprep.subr.mxu0 %v3133
          %4177 = vmatpush1.msra.mxu0 %v3132
          %4178 = vmatprep.subr.mxu0 0.0
          %4179 = vmatpush1.msra.mxu0 0.0
          %4180 = vmatprep.subr.mxu0 0.0
          %4181 = vmatpush1.msra.mxu0 0.0
          %4182 = vmatprep.subr.mxu0 0.0
          %4183 = vmatpush1.msra.mxu0 0.0
          %4184 = vmatprep.subr.mxu0 0.0
          %4185 = vmatpush1.msra.mxu0 0.0
          %4186 = vmatprep.subr.mxu0 0.0
          %4187 = vmatpush1.msra.mxu0 0.0
          %4188 = vmatprep.subr.mxu0 0.0
          %4189 = vmatpush1.msra.mxu0 0.0
          %4190 = vmatprep.subr.mxu0 0.0
          %4191 = vmatpush1.msra.mxu0 0.0
          %4192 = vmatprep.subr.mxu0 0.0
          %4193 = vmatpush1.msra.mxu0 0.0
          %4194 = vmatprep.subr.mxu0 0.0
          %4195 = vmatpush1.msra.mxu0 0.0
          %4196 = vmatprep.subr.mxu0 0.0
          %4197 = vmatpush1.msra.mxu0 0.0
          %4198 = vmatprep.subr.mxu0 0.0
          %4199 = vmatpush1.msra.mxu0 0.0
          %4200 = vmatprep.subr.mxu0 0.0
          %4201 = vmatpush1.msra.mxu0 0.0
          %4202 = vmatprep.subr.mxu0 0.0
          %4203 = vmatpush1.msra.mxu0 0.0
          %4204 = vmatprep.subr.mxu0 0.0
          %4205 = vmatpush1.msra.mxu0 0.0
          %4206 = vmatprep.subr.mxu0 0.0
          %4207 = vmatpush1.msra.mxu0 0.0
          %4208 = vmatprep.subr.mxu0 0.0
          %4209 = vmatpush1.msra.mxu0 0.0
          %4210 = vmatprep.mubr.f32.mxu0 0.0
          %4211 = vmatmul.mubr.f32.gmra.mrb[0].mxu0 %v3963
          %v4212 = vpop.f32.mrb[0].mxu0
          %v4213 = vadd.f32 0.0, %v4212
          %v4214 = vpop.f32.mrb[0].mxu0
          %v4215 = vadd.f32 0.0, %v4214
          %4216 = vdwg.mxu0
          %4217 = vmatprep.subr.mxu0 %v3075
          %4218 = vmatpush1.msra.mxu0 %v3074
          %4219 = vmatprep.subr.mxu0 %v3079
          %4220 = vmatpush1.msra.mxu0 %v3078
          %4221 = vmatprep.subr.mxu0 %v3083
          %4222 = vmatpush1.msra.mxu0 %v3082
          %4223 = vmatprep.subr.mxu0 %v3087
          %4224 = vmatpush1.msra.mxu0 %v3086
          %4225 = vmatprep.subr.mxu0 %v3091
          %4226 = vmatpush1.msra.mxu0 %v3090
          %4227 = vmatprep.subr.mxu0 %v3095
          %4228 = vmatpush1.msra.mxu0 %v3094
          %4229 = vmatprep.subr.mxu0 %v3099
          %4230 = vmatpush1.msra.mxu0 %v3098
          %4231 = vmatprep.subr.mxu0 %v3103
          %4232 = vmatpush1.msra.mxu0 %v3102
          %4233 = vmatprep.subr.mxu0 %v3107
          %4234 = vmatpush1.msra.mxu0 %v3106
          %4235 = vmatprep.subr.mxu0 %v3111
          %4236 = vmatpush1.msra.mxu0 %v3110
          %4237 = vmatprep.subr.mxu0 %v3115
          %4238 = vmatpush1.msra.mxu0 %v3114
          %4239 = vmatprep.subr.mxu0 %v3119
          %4240 = vmatpush1.msra.mxu0 %v3118
          %4241 = vmatprep.subr.mxu0 %v3123
          %4242 = vmatpush1.msra.mxu0 %v3122
          %4243 = vmatprep.subr.mxu0 %v3127
          %4244 = vmatpush1.msra.mxu0 %v3126
          %4245 = vmatprep.subr.mxu0 %v3131
          %4246 = vmatpush1.msra.mxu0 %v3130
          %4247 = vmatprep.subr.mxu0 %v3135
          %4248 = vmatpush1.msra.mxu0 %v3134
          %4249 = vmatprep.subr.mxu0 0.0
          %4250 = vmatpush1.msra.mxu0 0.0
          %4251 = vmatprep.subr.mxu0 0.0
          %4252 = vmatpush1.msra.mxu0 0.0
          %4253 = vmatprep.subr.mxu0 0.0
          %4254 = vmatpush1.msra.mxu0 0.0
          %4255 = vmatprep.subr.mxu0 0.0
          %4256 = vmatpush1.msra.mxu0 0.0
          %4257 = vmatprep.subr.mxu0 0.0
          %4258 = vmatpush1.msra.mxu0 0.0
          %4259 = vmatprep.subr.mxu0 0.0
          %4260 = vmatpush1.msra.mxu0 0.0
          %4261 = vmatprep.subr.mxu0 0.0
          %4262 = vmatpush1.msra.mxu0 0.0
          %4263 = vmatprep.subr.mxu0 0.0
          %4264 = vmatpush1.msra.mxu0 0.0
          %4265 = vmatprep.subr.mxu0 0.0
          %4266 = vmatpush1.msra.mxu0 0.0
          %4267 = vmatprep.subr.mxu0 0.0
          %4268 = vmatpush1.msra.mxu0 0.0
          %4269 = vmatprep.subr.mxu0 0.0
          %4270 = vmatpush1.msra.mxu0 0.0
          %4271 = vmatprep.subr.mxu0 0.0
          %4272 = vmatpush1.msra.mxu0 0.0
          %4273 = vmatprep.subr.mxu0 0.0
          %4274 = vmatpush1.msra.mxu0 0.0
          %4275 = vmatprep.subr.mxu0 0.0
          %4276 = vmatpush1.msra.mxu0 0.0
          %4277 = vmatprep.subr.mxu0 0.0
          %4278 = vmatpush1.msra.mxu0 0.0
          %4279 = vmatprep.subr.mxu0 0.0
          %4280 = vmatpush1.msra.mxu0 0.0
          %4281 = vmatprep.mubr.f32.mxu0 0.0
          %4282 = vmatmul.mubr.f32.gmra.mrb[0].mxu0 %v3963
          %v4283 = vpop.f32.mrb[0].mxu0
          %v4284 = vadd.f32 0.0, %v4283
          %v4285 = vpop.f32.mrb[0].mxu0
          %v4286 = vadd.f32 0.0, %v4285
          %4287 = vdwg.mxu0
          %4288 = vmatprep.subr.mxu0 %v2945
          %4289 = vmatpush1.msra.mxu0 %v2944
          %4290 = vmatprep.subr.mxu0 %v2949
          %4291 = vmatpush1.msra.mxu0 %v2948
          %4292 = vmatprep.subr.mxu0 %v2953
          %4293 = vmatpush1.msra.mxu0 %v2952
          %4294 = vmatprep.subr.mxu0 %v2957
          %4295 = vmatpush1.msra.mxu0 %v2956
          %4296 = vmatprep.subr.mxu0 %v2961
          %4297 = vmatpush1.msra.mxu0 %v2960
          %4298 = vmatprep.subr.mxu0 %v2965
          %4299 = vmatpush1.msra.mxu0 %v2964
          %4300 = vmatprep.subr.mxu0 %v2969
          %4301 = vmatpush1.msra.mxu0 %v2968
          %4302 = vmatprep.subr.mxu0 %v2973
          %4303 = vmatpush1.msra.mxu0 %v2972
          %4304 = vmatprep.subr.mxu0 %v2977
          %4305 = vmatpush1.msra.mxu0 %v2976
          %4306 = vmatprep.subr.mxu0 %v2981
          %4307 = vmatpush1.msra.mxu0 %v2980
          %4308 = vmatprep.subr.mxu0 %v2985
          %4309 = vmatpush1.msra.mxu0 %v2984
          %4310 = vmatprep.subr.mxu0 %v2989
          %4311 = vmatpush1.msra.mxu0 %v2988
          %4312 = vmatprep.subr.mxu0 %v2993
          %4313 = vmatpush1.msra.mxu0 %v2992
          %4314 = vmatprep.subr.mxu0 %v2997
          %4315 = vmatpush1.msra.mxu0 %v2996
          %4316 = vmatprep.subr.mxu0 %v3001
          %4317 = vmatpush1.msra.mxu0 %v3000
          %4318 = vmatprep.subr.mxu0 %v3005
          %4319 = vmatpush1.msra.mxu0 %v3004
          %4320 = vmatprep.subr.mxu0 %v3009
          %4321 = vmatpush1.msra.mxu0 %v3008
          %4322 = vmatprep.subr.mxu0 %v3013
          %4323 = vmatpush1.msra.mxu0 %v3012
          %4324 = vmatprep.subr.mxu0 %v3017
          %4325 = vmatpush1.msra.mxu0 %v3016
          %4326 = vmatprep.subr.mxu0 %v3021
          %4327 = vmatpush1.msra.mxu0 %v3020
          %4328 = vmatprep.subr.mxu0 %v3025
          %4329 = vmatpush1.msra.mxu0 %v3024
          %4330 = vmatprep.subr.mxu0 %v3029
          %4331 = vmatpush1.msra.mxu0 %v3028
          %4332 = vmatprep.subr.mxu0 %v3033
          %4333 = vmatpush1.msra.mxu0 %v3032
          %4334 = vmatprep.subr.mxu0 %v3037
          %4335 = vmatpush1.msra.mxu0 %v3036
          %4336 = vmatprep.subr.mxu0 %v3041
          %4337 = vmatpush1.msra.mxu0 %v3040
          %4338 = vmatprep.subr.mxu0 %v3045
          %4339 = vmatpush1.msra.mxu0 %v3044
          %4340 = vmatprep.subr.mxu0 %v3049
          %4341 = vmatpush1.msra.mxu0 %v3048
          %4342 = vmatprep.subr.mxu0 %v3053
          %4343 = vmatpush1.msra.mxu0 %v3052
          %4344 = vmatprep.subr.mxu0 %v3057
          %4345 = vmatpush1.msra.mxu0 %v3056
          %4346 = vmatprep.subr.mxu0 %v3061
          %4347 = vmatpush1.msra.mxu0 %v3060
          %4348 = vmatprep.subr.mxu0 %v3065
          %4349 = vmatpush1.msra.mxu0 %v3064
          %4350 = vmatprep.subr.mxu0 %v3069
          %4351 = vmatpush1.msra.mxu0 %v3068
          %4352 = vmatprep.mubr.f32.mxu0 %v4143
          %4353 = vmatmul.mubr.f32.gmra.mrb[0].mxu0 %v3963
          %v4354 = vpop.f32.mrb[0].mxu0
          %v4355 = vadd.f32 %v4213, %v4354
          %v4356 = vpop.f32.mrb[0].mxu0
          %v4357 = vadd.f32 %v4215, %v4356
          %4358 = vdwg.mxu0
          %4359 = vmatprep.subr.mxu0 %v2947
          %4360 = vmatpush1.msra.mxu0 %v2946
          %4361 = vmatprep.subr.mxu0 %v2951
          %4362 = vmatpush1.msra.mxu0 %v2950
          %4363 = vmatprep.subr.mxu0 %v2955
          %4364 = vmatpush1.msra.mxu0 %v2954
          %4365 = vmatprep.subr.mxu0 %v2959
          %4366 = vmatpush1.msra.mxu0 %v2958
          %4367 = vmatprep.subr.mxu0 %v2963
          %4368 = vmatpush1.msra.mxu0 %v2962
          %4369 = vmatprep.subr.mxu0 %v2967
          %4370 = vmatpush1.msra.mxu0 %v2966
          %4371 = vmatprep.subr.mxu0 %v2971
          %4372 = vmatpush1.msra.mxu0 %v2970
          %4373 = vmatprep.subr.mxu0 %v2975
          %4374 = vmatpush1.msra.mxu0 %v2974
          %4375 = vmatprep.subr.mxu0 %v2979
          %4376 = vmatpush1.msra.mxu0 %v2978
          %4377 = vmatprep.subr.mxu0 %v2983
          %4378 = vmatpush1.msra.mxu0 %v2982
          %4379 = vmatprep.subr.mxu0 %v2987
          %4380 = vmatpush1.msra.mxu0 %v2986
          %4381 = vmatprep.subr.mxu0 %v2991
          %4382 = vmatpush1.msra.mxu0 %v2990
          %4383 = vmatprep.subr.mxu0 %v2995
          %4384 = vmatpush1.msra.mxu0 %v2994
          %4385 = vmatprep.subr.mxu0 %v2999
          %4386 = vmatpush1.msra.mxu0 %v2998
          %4387 = vmatprep.subr.mxu0 %v3003
          %4388 = vmatpush1.msra.mxu0 %v3002
          %4389 = vmatprep.subr.mxu0 %v3007
          %4390 = vmatpush1.msra.mxu0 %v3006
          %4391 = vmatprep.subr.mxu0 %v3011
          %4392 = vmatpush1.msra.mxu0 %v3010
          %4393 = vmatprep.subr.mxu0 %v3015
          %4394 = vmatpush1.msra.mxu0 %v3014
          %4395 = vmatprep.subr.mxu0 %v3019
          %4396 = vmatpush1.msra.mxu0 %v3018
          %4397 = vmatprep.subr.mxu0 %v3023
          %4398 = vmatpush1.msra.mxu0 %v3022
          %4399 = vmatprep.subr.mxu0 %v3027
          %4400 = vmatpush1.msra.mxu0 %v3026
          %4401 = vmatprep.subr.mxu0 %v3031
          %4402 = vmatpush1.msra.mxu0 %v3030
          %4403 = vmatprep.subr.mxu0 %v3035
          %4404 = vmatpush1.msra.mxu0 %v3034
          %4405 = vmatprep.subr.mxu0 %v3039
          %4406 = vmatpush1.msra.mxu0 %v3038
          %4407 = vmatprep.subr.mxu0 %v3043
          %4408 = vmatpush1.msra.mxu0 %v3042
          %4409 = vmatprep.subr.mxu0 %v3047
          %4410 = vmatpush1.msra.mxu0 %v3046
          %4411 = vmatprep.subr.mxu0 %v3051
          %4412 = vmatpush1.msra.mxu0 %v3050
          %4413 = vmatprep.subr.mxu0 %v3055
          %4414 = vmatpush1.msra.mxu0 %v3054
          %4415 = vmatprep.subr.mxu0 %v3059
          %4416 = vmatpush1.msra.mxu0 %v3058
          %4417 = vmatprep.subr.mxu0 %v3063
          %4418 = vmatpush1.msra.mxu0 %v3062
          %4419 = vmatprep.subr.mxu0 %v3067
          %4420 = vmatpush1.msra.mxu0 %v3066
          %4421 = vmatprep.subr.mxu0 %v3071
          %4422 = vmatpush1.msra.mxu0 %v3070
          %4423 = vmatprep.mubr.f32.mxu0 %v4143
          %4424 = vmatmul.mubr.f32.gmra.mrb[0].mxu0 %v3963
          %v4425 = vpop.f32.mrb[0].mxu0
          %v4426 = vadd.f32 %v4284, %v4425
          %v4427 = vpop.f32.mrb[0].mxu0
          %v4428 = vadd.f32 %v4286, %v4427
          %4429 = vdwg.mxu0
          %v4430 = vadd.f32 %v4355, %v3425
          %v4431 = vadd.f32 %v4357, %v3429
          %v4432 = vadd.f32 %v4426, %v3433
          %v4433 = vadd.f32 %v4428, %v3437
          %v4434 = vxor.u32 %v4430, 2147483648
          %v4435 = vmul.f32 %v4434, 1.442695
          %v4436 = vpow.pop %v4435
          %v4437 = vadd.f32 %v4436, 1.0
          %v4438 = vrcp.pop %v4437
          %v4439 = vmul.f32 1.0, %v4438
          %v4440 = vxor.u32 %v4431, 2147483648
          %v4441 = vmul.f32 %v4440, 1.442695
          %v4442 = vpow.pop %v4441
          %v4443 = vadd.f32 %v4442, 1.0
          %v4444 = vrcp.pop %v4443
          %v4445 = vmul.f32 1.0, %v4444
          %v4446 = vtanh.pop %v4432
          %v4447 = vxor.u32 %v4433, 2147483648
          %v4448 = vmul.f32 %v4447, 1.442695
          %v4449 = vpow.pop %v4448
          %v4450 = vadd.f32 %v4449, 1.0
          %v4451 = vrcp.pop %v4450
          %v4452 = vmul.f32 1.0, %v4451
          %v4453 = vmul.f32 %v4445, %v3961
          %v4454 = vmul.f32 %v4439, %v4446
          %v4455 = vadd.f32 %v4453, %v4454
          %v4456 = vtanh.pop %v4455
          %v4457 = vmul.f32 %v4452, %v4456
          %v4458 = vlaneseq
          %v4459 = vshrl.u32 %v4458, 7
          %v4460 = vsub.s32 0, %v4459
          %v4461 = vrot.slane %v4457, %v4460
          %v4462 = vmul.f32 %v2936, %v4461
          %v4463 = vmul.f32 %v2937, %v4461
          %4464 = vadd.xlane.f32.xlu0 %v4462
          %v4465 = vpop.xlane.xlu0 %4464
          %4466 = vadd.xlane.f32.xlu0 %v4463
          %v4467 = vpop.xlane.xlu0 %4466
          %v4468 = vmax.f32 %v4465, %v4467
          %v4469 = vrot.slane %v4468, 4
          %v4470 = vmax.f32 %v4468, %v4469
          %v4471 = vrot.slane %v4470, 2
          %v4472 = vmax.f32 %v4470, %v4471
          %v4473 = vrot.slane %v4472, 1
          %v4474 = vmax.f32 %v4472, %v4473
          %v4475 = vsub.f32 %v4465, %v4474
          %v4476 = vsub.f32 %v4467, %v4474
          %v4477 = vmul.f32 %v4475, 1.442695
          %v4478 = vpow.pop %v4477
          %v4479 = vmul.f32 %v4476, 1.442695
          %v4480 = vpow.pop %v4479
          %4481 = vmatprep.subr.mxu0 0.0
          %4482 = vmatpush1.msra.mxu0 %v4478
          %4483 = vmatprep.subr.mxu0 0.0
          %4484 = vmatpush1.msra.mxu0 %v4480
          %4485 = vmatprep.subr.mxu0 0.0
          %4486 = vmatpush1.msra.mxu0 0.0
          %4487 = vmatprep.subr.mxu0 0.0
          %4488 = vmatpush1.msra.mxu0 0.0
          %4489 = vmatprep.subr.mxu0 0.0
          %4490 = vmatpush1.msra.mxu0 0.0
          %4491 = vmatprep.subr.mxu0 0.0
          %4492 = vmatpush1.msra.mxu0 0.0
          %4493 = vmatprep.subr.mxu0 0.0
          %4494 = vmatpush1.msra.mxu0 0.0
          %4495 = vmatprep.subr.mxu0 0.0
          %4496 = vmatpush1.msra.mxu0 0.0
          %4497 = vmatprep.subr.mxu0 0.0
          %4498 = vmatpush1.msra.mxu0 0.0
          %4499 = vmatprep.subr.mxu0 0.0
          %4500 = vmatpush1.msra.mxu0 0.0
          %4501 = vmatprep.subr.mxu0 0.0
          %4502 = vmatpush1.msra.mxu0 0.0
          %4503 = vmatprep.subr.mxu0 0.0
          %4504 = vmatpush1.msra.mxu0 0.0
          %4505 = vmatprep.subr.mxu0 0.0
          %4506 = vmatpush1.msra.mxu0 0.0
          %4507 = vmatprep.subr.mxu0 0.0
          %4508 = vmatpush1.msra.mxu0 0.0
          %4509 = vmatprep.subr.mxu0 0.0
          %4510 = vmatpush1.msra.mxu0 0.0
          %4511 = vmatprep.subr.mxu0 0.0
          %4512 = vmatpush1.msra.mxu0 0.0
          %4513 = vmatprep.subr.mxu0 0.0
          %4514 = vmatpush1.msra.mxu0 0.0
          %4515 = vmatprep.subr.mxu0 0.0
          %4516 = vmatpush1.msra.mxu0 0.0
          %4517 = vmatprep.subr.mxu0 0.0
          %4518 = vmatpush1.msra.mxu0 0.0
          %4519 = vmatprep.subr.mxu0 0.0
          %4520 = vmatpush1.msra.mxu0 0.0
          %4521 = vmatprep.subr.mxu0 0.0
          %4522 = vmatpush1.msra.mxu0 0.0
          %4523 = vmatprep.subr.mxu0 0.0
          %4524 = vmatpush1.msra.mxu0 0.0
          %4525 = vmatprep.subr.mxu0 0.0
          %4526 = vmatpush1.msra.mxu0 0.0
          %4527 = vmatprep.subr.mxu0 0.0
          %4528 = vmatpush1.msra.mxu0 0.0
          %4529 = vmatprep.subr.mxu0 0.0
          %4530 = vmatpush1.msra.mxu0 0.0
          %4531 = vmatprep.subr.mxu0 0.0
          %4532 = vmatpush1.msra.mxu0 0.0
          %4533 = vmatprep.subr.mxu0 0.0
          %4534 = vmatpush1.msra.mxu0 0.0
          %4535 = vmatprep.subr.mxu0 0.0
          %4536 = vmatpush1.msra.mxu0 0.0
          %4537 = vmatprep.subr.mxu0 0.0
          %4538 = vmatpush1.msra.mxu0 0.0
          %4539 = vmatprep.subr.mxu0 0.0
          %4540 = vmatpush1.msra.mxu0 0.0
          %4541 = vmatprep.subr.mxu0 0.0
          %4542 = vmatpush1.msra.mxu0 0.0
          %4543 = vmatprep.subr.mxu0 0.0
          %4544 = vmatpush1.msra.mxu0 0.0
          %4545 = vmatprep.mubr.f32.mxu0 0.0
          %4546 = vmatmul.mubr.f32.gmra.mrb[0].mxu0 %v2756
          %v4547 = vpop.f32.mrb[0].mxu0
          %v4548 = vadd.f32 0.0, %v4547
          %v4549 = vpop.f32.mrb[0].mxu0
          %4550 = vdwg.mxu0
          %v4551 = vlaneseq
          %v4552 = vshrl.u32 %v4551, 7
          %v4553 = vsub.s32 0, %v4552
          %v4554 = vrot.slane %v4548, %v4553
          %v4555 = vrcp.pop %v4554
          %v4556 = vmul.f32 %v4478, %v4555
          %v4557 = vmul.f32 %v4480, %v4555
          %4559 = vset.pattern.permute.xlu0 0
          %4560 = vperm.xlu0 %4559, %v4556
          %v4561 = vpop.permute.xlu0 %4560
          %4564 = vset.pattern.permute.xlu0 0
          %4565 = vperm.xlu0 %4564, %v4557
          %v4566 = vpop.permute.xlu0 %4565
          %v4568 = vmul.f32 %v4561, %v2936
          %v4569 = vmul.f32 %v4566, %v2937
          %4570 = vmatprep.subr.mxu0 0.0
          %4571 = vmatpush1.msra.mxu0 %v4568
          %4572 = vmatprep.subr.mxu0 0.0
          %4573 = vmatpush1.msra.mxu0 %v4569
          %4574 = vmatprep.subr.mxu0 0.0
          %4575 = vmatpush1.msra.mxu0 0.0
          %4576 = vmatprep.subr.mxu0 0.0
          %4577 = vmatpush1.msra.mxu0 0.0
          %4578 = vmatprep.subr.mxu0 0.0
          %4579 = vmatpush1.msra.mxu0 0.0
          %4580 = vmatprep.subr.mxu0 0.0
          %4581 = vmatpush1.msra.mxu0 0.0
          %4582 = vmatprep.subr.mxu0 0.0
          %4583 = vmatpush1.msra.mxu0 0.0
          %4584 = vmatprep.subr.mxu0 0.0
          %4585 = vmatpush1.msra.mxu0 0.0
          %4586 = vmatprep.subr.mxu0 0.0
          %4587 = vmatpush1.msra.mxu0 0.0
          %4588 = vmatprep.subr.mxu0 0.0
          %4589 = vmatpush1.msra.mxu0 0.0
          %4590 = vmatprep.subr.mxu0 0.0
          %4591 = vmatpush1.msra.mxu0 0.0
          %4592 = vmatprep.subr.mxu0 0.0
          %4593 = vmatpush1.msra.mxu0 0.0
          %4594 = vmatprep.subr.mxu0 0.0
          %4595 = vmatpush1.msra.mxu0 0.0
          %4596 = vmatprep.subr.mxu0 0.0
          %4597 = vmatpush1.msra.mxu0 0.0
          %4598 = vmatprep.subr.mxu0 0.0
          %4599 = vmatpush1.msra.mxu0 0.0
          %4600 = vmatprep.subr.mxu0 0.0
          %4601 = vmatpush1.msra.mxu0 0.0
          %4602 = vmatprep.subr.mxu0 0.0
          %4603 = vmatpush1.msra.mxu0 0.0
          %4604 = vmatprep.subr.mxu0 0.0
          %4605 = vmatpush1.msra.mxu0 0.0
          %4606 = vmatprep.subr.mxu0 0.0
          %4607 = vmatpush1.msra.mxu0 0.0
          %4608 = vmatprep.subr.mxu0 0.0
          %4609 = vmatpush1.msra.mxu0 0.0
          %4610 = vmatprep.subr.mxu0 0.0
          %4611 = vmatpush1.msra.mxu0 0.0
          %4612 = vmatprep.subr.mxu0 0.0
          %4613 = vmatpush1.msra.mxu0 0.0
          %4614 = vmatprep.subr.mxu0 0.0
          %4615 = vmatpush1.msra.mxu0 0.0
          %4616 = vmatprep.subr.mxu0 0.0
          %4617 = vmatpush1.msra.mxu0 0.0
          %4618 = vmatprep.subr.mxu0 0.0
          %4619 = vmatpush1.msra.mxu0 0.0
          %4620 = vmatprep.subr.mxu0 0.0
          %4621 = vmatpush1.msra.mxu0 0.0
          %4622 = vmatprep.subr.mxu0 0.0
          %4623 = vmatpush1.msra.mxu0 0.0
          %4624 = vmatprep.subr.mxu0 0.0
          %4625 = vmatpush1.msra.mxu0 0.0
          %4626 = vmatprep.subr.mxu0 0.0
          %4627 = vmatpush1.msra.mxu0 0.0
          %4628 = vmatprep.subr.mxu0 0.0
          %4629 = vmatpush1.msra.mxu0 0.0
          %4630 = vmatprep.subr.mxu0 0.0
          %4631 = vmatpush1.msra.mxu0 0.0
          %4632 = vmatprep.subr.mxu0 0.0
          %4633 = vmatpush1.msra.mxu0 0.0
          %4634 = vmatprep.mubr.f32.mxu0 0.0
          %4635 = vmatmul.mubr.f32.gmra.mrb[0].mxu0 %v2756
          %v4636 = vpop.f32.mrb[0].mxu0
          %v4637 = vadd.f32 0.0, %v4636
          %v4638 = vpop.f32.mrb[0].mxu0
          %4639 = vdwg.mxu0
          %v4640 = vld [vmem:[%s19] sm:$0xff]
          %v4641 = vld [vmem:[%s19 + $0x8] sm:$0xff]
          %v4642 = vld [vmem:[%s19 + $0x10] sm:$0xff]
          %v4643 = vld [vmem:[%s19 + $0x18] sm:$0xff]
          %v4644 = vld [vmem:[%s19 + $0x20] sm:$0xff]
          %v4645 = vld [vmem:[%s19 + $0x28] sm:$0xff]
          %v4646 = vld [vmem:[%s19 + $0x30] sm:$0xff]
          %v4647 = vld [vmem:[%s19 + $0x38] sm:$0xff]
          %v4648 = vld [vmem:[%s19 + $0x40] sm:$0xff]
          %v4649 = vld [vmem:[%s19 + $0x48] sm:$0xff]
          %v4650 = vld [vmem:[%s19 + $0x50] sm:$0xff]
          %v4651 = vld [vmem:[%s19 + $0x58] sm:$0xff]
          %v4652 = vld [vmem:[%s19 + $0x60] sm:$0xff]
          %v4653 = vld [vmem:[%s19 + $0x68] sm:$0xff]
          %v4654 = vld [vmem:[%s19 + $0x70] sm:$0xff]
          %v4655 = vld [vmem:[%s19 + $0x78] sm:$0xff]
          %v4656 = vld [vmem:[%s19 + $0x80] sm:$0xff]
          %v4657 = vld [vmem:[%s19 + $0x88] sm:$0xff]
          %v4658 = vld [vmem:[%s19 + $0x90] sm:$0xff]
          %v4659 = vld [vmem:[%s19 + $0x98] sm:$0xff]
          %v4660 = vld [vmem:[%s19 + $0xa0] sm:$0xff]
          %v4661 = vld [vmem:[%s19 + $0xa8] sm:$0xff]
          %v4662 = vld [vmem:[%s19 + $0xb0] sm:$0xff]
          %v4663 = vld [vmem:[%s19 + $0xb8] sm:$0xff]
          %v4664 = vld [vmem:[%s19 + $0xc0] sm:$0xff]
          %v4665 = vld [vmem:[%s19 + $0xc8] sm:$0xff]
          %v4666 = vld [vmem:[%s19 + $0xd0] sm:$0xff]
          %v4667 = vld [vmem:[%s19 + $0xd8] sm:$0xff]
          %v4668 = vld [vmem:[%s19 + $0xe0] sm:$0xff]
          %v4669 = vld [vmem:[%s19 + $0xe8] sm:$0xff]
          %v4670 = vld [vmem:[%s19 + $0xf0] sm:$0xff]
          %v4671 = vld [vmem:[%s19 + $0xf8] sm:$0xff]
          %v4672 = vld [vmem:[%s20] sm:$0x1]
          %4673 = vmatprep.subr.mxu0 0.0
          %4674 = vmatpush1.msra.mxu0 %v4640
          %4675 = vmatprep.subr.mxu0 0.0
          %4676 = vmatpush1.msra.mxu0 %v4641
          %4677 = vmatprep.subr.mxu0 0.0
          %4678 = vmatpush1.msra.mxu0 %v4642
          %4679 = vmatprep.subr.mxu0 0.0
          %4680 = vmatpush1.msra.mxu0 %v4643
          %4681 = vmatprep.subr.mxu0 0.0
          %4682 = vmatpush1.msra.mxu0 %v4644
          %4683 = vmatprep.subr.mxu0 0.0
          %4684 = vmatpush1.msra.mxu0 %v4645
          %4685 = vmatprep.subr.mxu0 0.0
          %4686 = vmatpush1.msra.mxu0 %v4646
          %4687 = vmatprep.subr.mxu0 0.0
          %4688 = vmatpush1.msra.mxu0 %v4647
          %4689 = vmatprep.subr.mxu0 0.0
          %4690 = vmatpush1.msra.mxu0 %v4648
          %4691 = vmatprep.subr.mxu0 0.0
          %4692 = vmatpush1.msra.mxu0 %v4649
          %4693 = vmatprep.subr.mxu0 0.0
          %4694 = vmatpush1.msra.mxu0 %v4650
          %4695 = vmatprep.subr.mxu0 0.0
          %4696 = vmatpush1.msra.mxu0 %v4651
          %4697 = vmatprep.subr.mxu0 0.0
          %4698 = vmatpush1.msra.mxu0 %v4652
          %4699 = vmatprep.subr.mxu0 0.0
          %4700 = vmatpush1.msra.mxu0 %v4653
          %4701 = vmatprep.subr.mxu0 0.0
          %4702 = vmatpush1.msra.mxu0 %v4654
          %4703 = vmatprep.subr.mxu0 0.0
          %4704 = vmatpush1.msra.mxu0 %v4655
          %4705 = vmatprep.subr.mxu0 0.0
          %4706 = vmatpush1.msra.mxu0 %v4656
          %4707 = vmatprep.subr.mxu0 0.0
          %4708 = vmatpush1.msra.mxu0 %v4657
          %4709 = vmatprep.subr.mxu0 0.0
          %4710 = vmatpush1.msra.mxu0 %v4658
          %4711 = vmatprep.subr.mxu0 0.0
          %4712 = vmatpush1.msra.mxu0 %v4659
          %4713 = vmatprep.subr.mxu0 0.0
          %4714 = vmatpush1.msra.mxu0 %v4660
          %4715 = vmatprep.subr.mxu0 0.0
          %4716 = vmatpush1.msra.mxu0 %v4661
          %4717 = vmatprep.subr.mxu0 0.0
          %4718 = vmatpush1.msra.mxu0 %v4662
          %4719 = vmatprep.subr.mxu0 0.0
          %4720 = vmatpush1.msra.mxu0 %v4663
          %4721 = vmatprep.subr.mxu0 0.0
          %4722 = vmatpush1.msra.mxu0 %v4664
          %4723 = vmatprep.subr.mxu0 0.0
          %4724 = vmatpush1.msra.mxu0 %v4665
          %4725 = vmatprep.subr.mxu0 0.0
          %4726 = vmatpush1.msra.mxu0 %v4666
          %4727 = vmatprep.subr.mxu0 0.0
          %4728 = vmatpush1.msra.mxu0 %v4667
          %4729 = vmatprep.subr.mxu0 0.0
          %4730 = vmatpush1.msra.mxu0 %v4668
          %4731 = vmatprep.subr.mxu0 0.0
          %4732 = vmatpush1.msra.mxu0 %v4669
          %4733 = vmatprep.subr.mxu0 0.0
          %4734 = vmatpush1.msra.mxu0 %v4670
          %4735 = vmatprep.subr.mxu0 0.0
          %4736 = vmatpush1.msra.mxu0 %v4671
          %4737 = vmatprep.mubr.f32.mxu0 %v4637
          %4738 = vmatmul.mubr.f32.gmra.mrb[0].mxu0 %v4457
          %v4739 = vpop.f32.mrb[0].mxu0
          %v4740 = vadd.f32 %v4672, %v4739
          %v4741 = vpop.f32.mrb[0].mxu0
          %4742 = vdwg.mxu0
          %v4743 = vmax.f32 %v4740, 0.0
          %v4744 = vld [vmem:[%s21] sm:$0xff]
          %v4745 = vld [vmem:[%s21 + $0x8] sm:$0xff]
          %v4746 = vld [vmem:[%s21 + $0x10] sm:$0xff]
          %v4747 = vld [vmem:[%s21 + $0x18] sm:$0xff]
          %v4748 = vld [vmem:[%s21 + $0x20] sm:$0xff]
          %v4749 = vld [vmem:[%s21 + $0x28] sm:$0xff]
          %v4750 = vld [vmem:[%s21 + $0x30] sm:$0xff]
          %v4751 = vld [vmem:[%s21 + $0x38] sm:$0xff]
          %v4752 = vld [vmem:[%s21 + $0x40] sm:$0xff]
          %v4753 = vld [vmem:[%s21 + $0x48] sm:$0xff]
          %v4754 = vld [vmem:[%s21 + $0x50] sm:$0xff]
          %v4755 = vld [vmem:[%s21 + $0x58] sm:$0xff]
          %v4756 = vld [vmem:[%s21 + $0x60] sm:$0xff]
          %v4757 = vld [vmem:[%s21 + $0x68] sm:$0xff]
          %v4758 = vld [vmem:[%s21 + $0x70] sm:$0xff]
          %v4759 = vld [vmem:[%s21 + $0x78] sm:$0xff]
          %v4760 = vld [vmem:[%s21 + $0x80] sm:$0xff]
          %v4761 = vld [vmem:[%s21 + $0x88] sm:$0xff]
          %v4762 = vld [vmem:[%s21 + $0x90] sm:$0xff]
          %v4763 = vld [vmem:[%s21 + $0x98] sm:$0xff]
          %v4764 = vld [vmem:[%s21 + $0xa0] sm:$0xff]
          %v4765 = vld [vmem:[%s21 + $0xa8] sm:$0xff]
          %v4766 = vld [vmem:[%s21 + $0xb0] sm:$0xff]
          %v4767 = vld [vmem:[%s21 + $0xb8] sm:$0xff]
          %v4768 = vld [vmem:[%s21 + $0xc0] sm:$0xff]
          %v4769 = vld [vmem:[%s21 + $0xc8] sm:$0xff]
          %v4770 = vld [vmem:[%s21 + $0xd0] sm:$0xff]
          %v4771 = vld [vmem:[%s21 + $0xd8] sm:$0xff]
          %v4772 = vld [vmem:[%s21 + $0xe0] sm:$0xff]
          %v4773 = vld [vmem:[%s21 + $0xe8] sm:$0xff]
          %v4774 = vld [vmem:[%s21 + $0xf0] sm:$0xff]
          %v4775 = vld [vmem:[%s21 + $0xf8] sm:$0xff]
          %v4776 = vld [vmem:[%s22] sm:$0x3]
          %v4778 = vlaneseq
          %v4779 = vshrl.u32 %v4778, 7
          %v4780 = vsub.s32 0, %v4779
          %v4781 = vrot.slane %v4776, %v4780
          %v4782 = vlaneseq
          %v4783 = vshrl.u32 %v4782, 7
          %v4784 = vsub.s32 1, %v4783
          %v4785 = vrot.slane %v4776, %v4784
          %4788 = vmatprep.subr.mxu0 %v4745
          %4789 = vmatpush1.msra.mxu0 %v4744
          %4790 = vmatprep.subr.mxu0 %v4747
          %4791 = vmatpush1.msra.mxu0 %v4746
          %4792 = vmatprep.subr.mxu0 %v4749
          %4793 = vmatpush1.msra.mxu0 %v4748
          %4794 = vmatprep.subr.mxu0 %v4751
          %4795 = vmatpush1.msra.mxu0 %v4750
          %4796 = vmatprep.subr.mxu0 %v4753
          %4797 = vmatpush1.msra.mxu0 %v4752
          %4798 = vmatprep.subr.mxu0 %v4755
          %4799 = vmatpush1.msra.mxu0 %v4754
          %4800 = vmatprep.subr.mxu0 %v4757
          %4801 = vmatpush1.msra.mxu0 %v4756
          %4802 = vmatprep.subr.mxu0 %v4759
          %4803 = vmatpush1.msra.mxu0 %v4758
          %4804 = vmatprep.subr.mxu0 %v4761
          %4805 = vmatpush1.msra.mxu0 %v4760
          %4806 = vmatprep.subr.mxu0 %v4763
          %4807 = vmatpush1.msra.mxu0 %v4762
          %4808 = vmatprep.subr.mxu0 %v4765
          %4809 = vmatpush1.msra.mxu0 %v4764
          %4810 = vmatprep.subr.mxu0 %v4767
          %4811 = vmatpush1.msra.mxu0 %v4766
          %4812 = vmatprep.subr.mxu0 %v4769
          %4813 = vmatpush1.msra.mxu0 %v4768
          %4814 = vmatprep.subr.mxu0 %v4771
          %4815 = vmatpush1.msra.mxu0 %v4770
          %4816 = vmatprep.subr.mxu0 %v4773
          %4817 = vmatpush1.msra.mxu0 %v4772
          %4818 = vmatprep.subr.mxu0 %v4775
          %4819 = vmatpush1.msra.mxu0 %v4774
          %4820 = vmatprep.subr.mxu0 0.0
          %4821 = vmatpush1.msra.mxu0 0.0
          %4822 = vmatprep.subr.mxu0 0.0
          %4823 = vmatpush1.msra.mxu0 0.0
          %4824 = vmatprep.subr.mxu0 0.0
          %4825 = vmatpush1.msra.mxu0 0.0
          %4826 = vmatprep.subr.mxu0 0.0
          %4827 = vmatpush1.msra.mxu0 0.0
          %4828 = vmatprep.subr.mxu0 0.0
          %4829 = vmatpush1.msra.mxu0 0.0
          %4830 = vmatprep.subr.mxu0 0.0
          %4831 = vmatpush1.msra.mxu0 0.0
          %4832 = vmatprep.subr.mxu0 0.0
          %4833 = vmatpush1.msra.mxu0 0.0
          %4834 = vmatprep.subr.mxu0 0.0
          %4835 = vmatpush1.msra.mxu0 0.0
          %4836 = vmatprep.subr.mxu0 0.0
          %4837 = vmatpush1.msra.mxu0 0.0
          %4838 = vmatprep.subr.mxu0 0.0
          %4839 = vmatpush1.msra.mxu0 0.0
          %4840 = vmatprep.subr.mxu0 0.0
          %4841 = vmatpush1.msra.mxu0 0.0
          %4842 = vmatprep.subr.mxu0 0.0
          %4843 = vmatpush1.msra.mxu0 0.0
          %4844 = vmatprep.subr.mxu0 0.0
          %4845 = vmatpush1.msra.mxu0 0.0
          %4846 = vmatprep.subr.mxu0 0.0
          %4847 = vmatpush1.msra.mxu0 0.0
          %4848 = vmatprep.subr.mxu0 0.0
          %4849 = vmatpush1.msra.mxu0 0.0
          %4850 = vmatprep.subr.mxu0 0.0
          %4851 = vmatpush1.msra.mxu0 0.0
          %4852 = vmatprep.mubr.f32.mxu0 0.0
          %4853 = vmatmul.mubr.f32.gmra.mrb[0].mxu0 %v4743
          %v4854 = vpop.f32.mrb[0].mxu0
          %v4855 = vadd.f32 %v4781, %v4854
          %v4856 = vpop.f32.mrb[0].mxu0
          %v4857 = vadd.f32 %v4785, %v4856
          %4858 = vdwg.mxu0
          %v4859 = vmax.f32 %v4855, 0.0
          %v4860 = vmax.f32 %v4857, 0.0
          %v4861 = vmul.f32 %v4859, %v4859
          %v4862 = vmul.f32 %v4860, %v4860
          %vm4863 = vcmask 1040384
          %v4864 = vsel %vm4863, %v4861, 0.0
          %v4865 = vsel %vm4863, %v4862, 0.0
          %v4866 = vadd.f32 %v4864, %v4865
          %4867 = vadd.xlane.f32.xlu0 %v4866
          %v4868 = vpop.xlane.xlu0 %4867
          %v4869 = vmax.f32 %v4868, 1e-24
          %v4870 = vrsqrt.pop %v4869
          %v4871 = vmul.f32 %v4859, %v4870
          %v4872 = vmul.f32 %v4860, %v4870
          %v4875 = vcombine.low %v4871, %v4872
          %v4877 = vunpack.c.l.s4 1966171168
          %v4878 = vunpack.c.0.s8 %v4877
          %v4879 = vlaneseq
          %v4880 = vshrl.u32 %v4879, 7
          %v4881 = vsub.s32 %v4878, %v4880
          %v4882 = vrot.slane %v4875, %v4881
          %v4884 = vunpack.c.l.s4 1966171168
          %v4885 = vunpack.c.0.s8 %v4884
          %v4886 = vlaneseq
          %v4887 = vshrl.u32 %v4886, 7
          %v4888 = vsub.s32 %v4885, %v4887
          %v4889 = vrot.slane %v4882, %v4888
          %v4891 = vlaneseq
          %vm4892 = vcmp.ge.s32.totalorder %v4891, 0
          %vm4893 = vcmp.lt.s32.totalorder %v4891, 256
          %vm4894 = vmand %vm4892, %vm4893
          %4895 = vst.msk [vmem:[#allocation8] sm:$0x3] %vm4894, %v4889
        $region120: #{gnn_encoder_forward.1} parent=111 // pred_fallthru
          _
        // Predicated region
        $region121: #{gnn_encoder_forward.1} parent=111 // pred_check
          %p4896 = pneg %p566
        $region122: #{gnn_encoder_forward.1} parent=111 // pred_check_branch
          %4898 = sbr.rel (%p4896) target = $region124
        $region123: #{gnn_encoder_forward.1} parent=111 // pred_region
          %s4900 = ssub.s32 32, 32
          %4901 = vsyncadd [#allocation9], %s4900
          %s4903 = sshll.u32 [#allocation8], 4
          %s4904 = int_to_ptr.vmem [resolvable:$true] %s4903
          %4906 = dma.vmem_to_hbm [thread:$0]  %s4904, 32, %s23, [#allocation9]
        $region124: #{gnn_encoder_forward.1} parent=111 // pred_fallthru
          _
        // Predicated region
        $region125: #{gnn_encoder_forward.1} parent=111 // pred_check
          %p4907 = pneg %p566
        $region126: #{gnn_encoder_forward.1} parent=111 // pred_check_branch
          %4909 = sbr.rel (%p4907) target = $region128
        $region127: #{gnn_encoder_forward.1} parent=111 // pred_region
          %4910 = dma.done [#allocation9], 32
        $region128: #{gnn_encoder_forward.1} parent=111 // pred_fallthru
          _
      $region112: #{gnn_encoder_forward.1} parent=5 // pred_fallthru
        _
      %p4911 = scmp.le.s32.totalorder 2, %s30
      // Predicated region
      $region129: #{gnn_encoder_forward.1} parent=5 // pred_check
        %p4912 = pneg %p4911
      $region130: #{gnn_encoder_forward.1} parent=5 // pred_check_branch
        %4914 = sbr.rel (%p4912) target = $region132
      $region131: #{gnn_encoder_forward.1} parent=5 // pred_region
        %s4915 = ssub.s32 %s30, 2
      $region132: #{gnn_encoder_forward.1} parent=5 // pred_fallthru
        _
    $region6: #{gnn_encoder_forward.1} parent=1 // loop_footer
      %s34 = sadd.s32 1, %s30
    $region7: #{gnn_encoder_forward.1} parent=1 // loop_footer_branch
      %29 = sbr.rel target = $region3
    $region8: #{gnn_encoder_forward.1} parent=1 // loop_exit
      _
    %4916 = vsyncpa [#allocation9], 1
    %s4917 = scalar_lea.sflag [#allocation9], 1
    %4918 = vsyncpa %s4917, 1

</llo_original>
